<compile_context>
chip_gen: v7x
topology: tpu7x:2x2x1
jax: 0.10.0
libtpu: 0.0.40
codegen_flags: <defaults>
</compile_context>

<pallas_src>
import jax
import jax.numpy as jnp
import numpy as np
from jax.experimental import pallas as pl
from jax.experimental.pallas import tpu as pltpu


# ----------------------------------------------------------------------------
# Fused Pallas kernel: DoubleConv (3x3 conv + bias + ReLU6, twice) with the
# channel concat folded into conv1 and conv padding done in VMEM scratch.
# ----------------------------------------------------------------------------
def _up_doubleconv_kernel(x2_ref, x1_ref, w1_ref, b1_ref, w2t_ref, b2t_ref,
                          o_ref, x2p_ref, x1p_ref, midp_ref):
    # x2_ref : (1, H, W, C2)  skip connection (f32)
    # x1_ref : (1, H, W, C1)  upsampled feature map (f32)
    # w1_ref : (9*(C2+C1), Cm) bf16   rows ordered [x2 taps | x1 taps]
    # b1_ref : (1, Cm) f32
    # w2t_ref: (Cout, 9*Cm) bf16      conv2 weight, output-transposed
    # b2t_ref: (Cout, 1) f32
    # o_ref  : (1, Cout, H*W) f32     NCHW-flat output (lane-dense store)
    # x2p/x1p/midp: VMEM scratch (H+2, W+2, C) f32, zero-padded conv inputs
    H, W = x2_ref.shape[1], x2_ref.shape[2]
    C2, C1 = x2_ref.shape[3], x1_ref.shape[3]
    Cm = b1_ref.shape[1]
    Cout = b2t_ref.shape[0]
    HW = H * W

    # Zero-pad conv inputs into VMEM scratch (padding=1 handled in-kernel).
    x2p_ref[...] = jnp.zeros_like(x2p_ref)
    x1p_ref[...] = jnp.zeros_like(x1p_ref)
    midp_ref[...] = jnp.zeros_like(midp_ref)
    x2p_ref[1:H + 1, 1:W + 1, :] = x2_ref[0]
    x1p_ref[1:H + 1, 1:W + 1, :] = x1_ref[0]

    def tap_cols(xp_ref, c):
        # 9 shifted views of the padded plane, flattened to (H*W, c) each.
        return [xp_ref[kh:kh + H, kw:kw + W, :].reshape(HW, c)
                for kh in range(3) for kw in range(3)]

    # ---- conv1: single im2col dot, K = 9*(C2+C1); concat folded in ----------
    patches1 = jnp.concatenate(
        tap_cols(x2p_ref, C2) + tap_cols(x1p_ref, C1), axis=-1)   # (HW, 9*(C2+C1))
    acc1 = jnp.broadcast_to(b1_ref[...], (HW, Cm))                # bias-init acc
    acc1 = acc1 + jnp.dot(patches1.astype(jnp.bfloat16), w1_ref[...],
                          preferred_element_type=jnp.float32)
    mid = jnp.clip(acc1, 0.0, 6.0)                                # ReLU6
    # Intermediate activation stays in VMEM, padded for conv2 (never in HBM).
    midp_ref[1:H + 1, 1:W + 1, :] = mid.reshape(H, W, Cm).astype(midp_ref.dtype)

    # ---- conv2: single im2col dot, computed output-transposed ---------------
    patches2 = jnp.concatenate(tap_cols(midp_ref, Cm), axis=-1)   # (HW, 9*Cm)
    acc2 = jnp.broadcast_to(b2t_ref[...], (Cout, HW))             # bias-init acc
    acc2 = acc2 + jax.lax.dot_general(                            # (Cout, HW):
        w2t_ref[...], patches2.astype(jnp.bfloat16),              # H*W on lanes
        dimension_numbers=(((1,), (1,)), ((), ())),
        preferred_element_type=jnp.float32)
    out = jnp.clip(acc2, 0.0, 6.0)                                # ReLU6
    o_ref[...] = out.reshape(1, Cout, HW).astype(o_ref.dtype)     # dense store


def double_conv_relu6_fused(x2, x1, w1, b1, w2, b2):
    """Fused DoubleConv over the (folded) concat of [x2, x1].

    x2: (N, H, W, C2) NHWC skip connection.
    x1: (N, H, W, C1) NHWC upsampled/aligned feature map.
    w1: (3, 3, C2+C1, Cm), b1: (Cm,)   -- conv over concat([x2, x1]) channels
    w2: (3, 3, Cm, Cout),  b2: (Cout,)
    Returns NCHW (N, Cout, H, W) directly (no exit transpose needed).
    """
    N, H, W, C2 = x2.shape
    C1 = x1.shape[-1]
    Cm = w1.shape[-1]
    Cout = w2.shape[-1]
    HW = H * W

    # Fold the channel concat into conv1: reorder weight rows to
    # [all 9 taps of the x2 channels | all 9 taps of the x1 channels].
    w1a = w1[:, :, :C2, :].reshape(9 * C2, Cm)
    w1b = w1[:, :, C2:, :].reshape(9 * C1, Cm)
    w1f = jnp.concatenate([w1a, w1b], axis=0).astype(jnp.bfloat16)
    # conv2 computed output-transposed: pass W2 as (Cout, 9*Cm).
    w2t = w2.reshape(9 * Cm, Cout).T.astype(jnp.bfloat16)
    b1r = b1.reshape(1, Cm).astype(jnp.float32)
    b2t = b2.reshape(Cout, 1).astype(jnp.float32)

    out_flat = pl.pallas_call(
        _up_doubleconv_kernel,
        out_shape=jax.ShapeDtypeStruct((N, Cout, HW), jnp.float32),
        grid=(N,),
        in_specs=[
            pl.BlockSpec((1, H, W, C2), lambda n: (n, 0, 0, 0)),
            pl.BlockSpec((1, H, W, C1), lambda n: (n, 0, 0, 0)),
            pl.BlockSpec((9 * (C2 + C1), Cm), lambda n: (0, 0)),
            pl.BlockSpec((1, Cm), lambda n: (0, 0)),
            pl.BlockSpec((Cout, 9 * Cm), lambda n: (0, 0)),
            pl.BlockSpec((Cout, 1), lambda n: (0, 0)),
        ],
        out_specs=pl.BlockSpec((1, Cout, HW), lambda n: (n, 0, 0)),
        scratch_shapes=[
            pltpu.VMEM((H + 2, W + 2, C2), jnp.float32),
            pltpu.VMEM((H + 2, W + 2, C1), jnp.float32),
            pltpu.VMEM((H + 2, W + 2, Cm), jnp.float32),
        ],
        compiler_params=pltpu.CompilerParams(
            dimension_semantics=("parallel",),
            vmem_limit_bytes=32 * 1024 * 1024),
    )(x2, x1, w1f, b1r, w2t, b2t)

    return out_flat.reshape(N, Cout, H, W)   # NCHW, free reshape


# ----------------------------------------------------------------------------
# Glue (plain JAX): bilinear x2 upsample (align_corners=True) + boundary pad.
# ----------------------------------------------------------------------------
def _align_corners_coords(in_size, out_size):
    if in_size == 1:
        return jnp.zeros((out_size,), jnp.int32), jnp.zeros((out_size,), jnp.float32)
    scale = (in_size - 1) / (out_size - 1)
    src = jnp.arange(out_size, dtype=jnp.float32) * scale
    i0 = jnp.clip(jnp.floor(src).astype(jnp.int32), 0, in_size - 2)
    return i0, src - i0.astype(jnp.float32)


def upsample_bilinear_x2_align_corners(x):
    """x: (N, H, W, C) NHWC -> (N, 2H, 2W, C)."""
    N, H, W, C = x.shape
    y0, fy = _align_corners_coords(H, 2 * H)
    x0, fx = _align_corners_coords(W, 2 * W)
    top = x[:, y0, :, :]
    bot = x[:, jnp.clip(y0 + 1, 0, H - 1), :, :]
    rows = top * (1.0 - fy)[None, :, None, None] + bot * fy[None, :, None, None]
    left = rows[:, :, x0, :]
    right = rows[:, :, jnp.clip(x0 + 1, 0, W - 1), :]
    return left * (1.0 - fx)[None, None, :, None] + right * fx[None, None, :, None]


# ----------------------------------------------------------------------------
# Up module forward (bilinear=True).  Public interface is PyTorch-style NCHW.
# ----------------------------------------------------------------------------
def init_up_params(key, in_channels, out_channels, dtype=jnp.float32):
    """DoubleConv params: conv1 (in->out), conv2 (out->out), both 3x3 + bias."""
    k1, k2, k3, k4 = jax.random.split(key, 4)
    s1 = 1.0 / jnp.sqrt(in_channels * 9.0)
    s2 = 1.0 / jnp.sqrt(out_channels * 9.0)
    return {
        "w1": jax.random.normal(k1, (3, 3, in_channels, out_channels), dtype) * s1,
        "b1": jax.random.normal(k2, (out_channels,), dtype) * s1,
        "w2": jax.random.normal(k3, (3, 3, out_channels, out_channels), dtype) * s2,
        "b2": jax.random.normal(k4, (out_channels,), dtype) * s2,
    }


@jax.jit
def up_forward(params, x1_nchw, x2_nchw):
    """Matches Up.forward(x1, x2) with bilinear=True.  Inputs/outputs NCHW."""
    x1 = jnp.transpose(x1_nchw, (0, 2, 3, 1))   # -> NHWC
    x2 = jnp.transpose(x2_nchw, (0, 2, 3, 1))

    x1 = upsample_bilinear_x2_align_corners(x1)          # self.up
    diffY = x2.shape[1] - x1.shape[1]                     # F.pad to match x2
    diffX = x2.shape[2] - x1.shape[2]                     # (assumes diff >= 0)
    x1 = jnp.pad(x1, ((0, 0), (diffY // 2, diffY - diffY // 2),
                      (diffX // 2, diffX - diffX // 2), (0, 0)))

    # concat + DoubleConv fused inside the Pallas kernel; output already NCHW.
    return double_conv_relu6_fused(x2, x1, params["w1"], params["b1"],
                                   params["w2"], params["b2"])


# ----------------------------------------------------------------------------
# Pure-JAX (XLA, f32) reference for correctness checking.
# ----------------------------------------------------------------------------
def _reference_up(params, x1_nchw, x2_nchw):
    x1 = jnp.transpose(x1_nchw, (0, 2, 3, 1))
    x2 = jnp.transpose(x2_nchw, (0, 2, 3, 1))
    x1 = upsample_bilinear_x2_align_corners(x1)
    diffY = x2.shape[1] - x1.shape[1]
    diffX = x2.shape[2] - x1.shape[2]
    x1 = jnp.pad(x1, ((0, 0), (diffY // 2, diffY - diffY // 2),
                      (diffX // 2, diffX - diffX // 2), (0, 0)))
    x = jnp.concatenate([x2, x1], axis=-1)

    def conv(y, w, b):
        y = jax.lax.conv_general_dilated(
            y, w, window_strides=(1, 1), padding="SAME",
            dimension_numbers=("NHWC", "HWIO", "NHWC"))
        return jnp.clip(y + b[None, None, None, :], 0.0, 6.0)

    y = conv(x, params["w1"], params["b1"])
    y = conv(y, params["w2"], params["b2"])
    return jnp.transpose(y, (0, 3, 1, 2))


if __name__ == "__main__":
    key = jax.random.PRNGKey(0)
    k_p, k_x1, k_x2 = jax.random.split(key, 3)

    in_channels = 8      # channels after concat (x2 has 4, x1 has 4)
    out_channels = 4
    N, H2, W2 = 2, 16, 16

    params = init_up_params(k_p, in_channels, out_channels)

    # x1: feature map to upsample (half spatial, half channels); x2: skip.
    x1 = jax.random.normal(k_x1, (N, in_channels // 2, H2 // 2, W2 // 2),
                           jnp.float32)
    x2 = jax.random.normal(k_x2, (N, in_channels // 2, H2, W2), jnp.float32)

    out = up_forward(params, x1, x2)
    jax.block_until_ready(out)
    assert out.shape == (N, out_channels, H2, W2), out.shape

    ref = _reference_up(params, x1, x2)
    np.testing.assert_allclose(np.asarray(out), np.asarray(ref),
                               atol=5e-2, rtol=5e-2)   # bf16-MXU tolerance
    print("KERNEL_OK")
</pallas_src>

<mosaic_0001>
module attributes {stable_mosaic.version = 11 : i64} {
  func.func @_up_doubleconv_kernel(%arg0: i32, %arg1: memref<1x16x16x4xf32, #tpu.memory_space<vmem>>, %arg2: memref<1x16x16x4xf32, #tpu.memory_space<vmem>>, %arg3: memref<72x4xbf16, #tpu.memory_space<vmem>>, %arg4: memref<1x4xf32, #tpu.memory_space<vmem>>, %arg5: memref<4x36xbf16, #tpu.memory_space<vmem>>, %arg6: memref<4x1xf32, #tpu.memory_space<vmem>>, %arg7: memref<1x4x256xf32, #tpu.memory_space<vmem>>, %arg8: memref<18x18x4xf32, #tpu.memory_space<vmem>>, %arg9: memref<18x18x4xf32, #tpu.memory_space<vmem>>, %arg10: memref<18x18x4xf32, #tpu.memory_space<vmem>>) attributes {dimension_semantics = [#tpu.dimension_semantics<parallel>], iteration_bounds = array<i64: 2>, scalar_prefetch = 0 : i64, scratch_operands = 3 : i64, tpu.core_type = #tpu.core_type<tc>, window_params = [{transform_indices = @transform_0, window_bounds = array<i64: 1, 16, 16, 4>}, {transform_indices = @transform_1, window_bounds = array<i64: 1, 16, 16, 4>}, {pipeline_mode = #tpu.pipeline_mode<synchronous>, transform_indices = @transform_2, window_bounds = array<i64: 72, 4>}, {pipeline_mode = #tpu.pipeline_mode<synchronous>, transform_indices = @transform_3, window_bounds = array<i64: 1, 4>}, {pipeline_mode = #tpu.pipeline_mode<synchronous>, transform_indices = @transform_4, window_bounds = array<i64: 4, 36>}, {pipeline_mode = #tpu.pipeline_mode<synchronous>, transform_indices = @transform_5, window_bounds = array<i64: 4, 1>}, {transform_indices = @transform_6, window_bounds = array<i64: 1, 4, 256>}]} {
    %cst = arith.constant 0.000000e+00 : f32
    %0 = vector.broadcast %cst : f32 to vector<18x18x4xf32>
    %c0 = arith.constant 0 : index
    %c0_0 = arith.constant 0 : index
    %c0_1 = arith.constant 0 : index
    %1 = vector.load %arg8[%c0, %c0_0, %c0_1] : memref<18x18x4xf32, #tpu.memory_space<vmem>>, vector<18x18x4xf32>
    tpu.vector_store %arg8[%c0, %c0_0, %c0_1], %0 {strides = array<i32>} : memref<18x18x4xf32, #tpu.memory_space<vmem>>, vector<18x18x4xf32>,
    %cst_2 = arith.constant 0.000000e+00 : f32
    %2 = vector.broadcast %cst_2 : f32 to vector<18x18x4xf32>
    %c0_3 = arith.constant 0 : index
    %c0_4 = arith.constant 0 : index
    %c0_5 = arith.constant 0 : index
    %3 = vector.load %arg9[%c0_3, %c0_4, %c0_5] : memref<18x18x4xf32, #tpu.memory_space<vmem>>, vector<18x18x4xf32>
    tpu.vector_store %arg9[%c0_3, %c0_4, %c0_5], %2 {strides = array<i32>} : memref<18x18x4xf32, #tpu.memory_space<vmem>>, vector<18x18x4xf32>,
    %cst_6 = arith.constant 0.000000e+00 : f32
    %4 = vector.broadcast %cst_6 : f32 to vector<18x18x4xf32>
    %c0_7 = arith.constant 0 : index
    %c0_8 = arith.constant 0 : index
    %c0_9 = arith.constant 0 : index
    %5 = vector.load %arg10[%c0_7, %c0_8, %c0_9] : memref<18x18x4xf32, #tpu.memory_space<vmem>>, vector<18x18x4xf32>
    tpu.vector_store %arg10[%c0_7, %c0_8, %c0_9], %4 {strides = array<i32>} : memref<18x18x4xf32, #tpu.memory_space<vmem>>, vector<18x18x4xf32>,
    %c0_10 = arith.constant 0 : index
    %c0_11 = arith.constant 0 : index
    %c0_12 = arith.constant 0 : index
    %c0_13 = arith.constant 0 : index
    %6 = vector.load %arg1[%c0_10, %c0_11, %c0_12, %c0_13] : memref<1x16x16x4xf32, #tpu.memory_space<vmem>>, vector<1x16x16x4xf32>
    %7 = vector.shape_cast %6 : vector<1x16x16x4xf32> to vector<16x16x4xf32>
    %c1 = arith.constant 1 : index
    %c1_14 = arith.constant 1 : index
    %c0_15 = arith.constant 0 : index
    %8 = vector.load %arg8[%c1, %c1_14, %c0_15] : memref<18x18x4xf32, #tpu.memory_space<vmem>>, vector<16x16x4xf32>
    tpu.vector_store %arg8[%c1, %c1_14, %c0_15], %7 {strides = array<i32>} : memref<18x18x4xf32, #tpu.memory_space<vmem>>, vector<16x16x4xf32>,
    %c0_16 = arith.constant 0 : index
    %c0_17 = arith.constant 0 : index
    %c0_18 = arith.constant 0 : index
    %c0_19 = arith.constant 0 : index
    %9 = vector.load %arg2[%c0_16, %c0_17, %c0_18, %c0_19] : memref<1x16x16x4xf32, #tpu.memory_space<vmem>>, vector<1x16x16x4xf32>
    %10 = vector.shape_cast %9 : vector<1x16x16x4xf32> to vector<16x16x4xf32>
    %c1_20 = arith.constant 1 : index
    %c1_21 = arith.constant 1 : index
    %c0_22 = arith.constant 0 : index
    %11 = vector.load %arg9[%c1_20, %c1_21, %c0_22] : memref<18x18x4xf32, #tpu.memory_space<vmem>>, vector<16x16x4xf32>
    tpu.vector_store %arg9[%c1_20, %c1_21, %c0_22], %10 {strides = array<i32>} : memref<18x18x4xf32, #tpu.memory_space<vmem>>, vector<16x16x4xf32>,
    %c0_23 = arith.constant 0 : index
    %c0_24 = arith.constant 0 : index
    %c0_25 = arith.constant 0 : index
    %12 = vector.load %arg8[%c0_23, %c0_24, %c0_25] : memref<18x18x4xf32, #tpu.memory_space<vmem>>, vector<16x16x4xf32>
    %13 = vector.shape_cast %12 : vector<16x16x4xf32> to vector<256x4xf32>
    %c0_26 = arith.constant 0 : index
    %c1_27 = arith.constant 1 : index
    %c0_28 = arith.constant 0 : index
    %14 = vector.load %arg8[%c0_26, %c1_27, %c0_28] : memref<18x18x4xf32, #tpu.memory_space<vmem>>, vector<16x16x4xf32>
    %15 = vector.shape_cast %14 : vector<16x16x4xf32> to vector<256x4xf32>
    %c0_29 = arith.constant 0 : index
    %c2 = arith.constant 2 : index
    %c0_30 = arith.constant 0 : index
    %16 = vector.load %arg8[%c0_29, %c2, %c0_30] : memref<18x18x4xf32, #tpu.memory_space<vmem>>, vector<16x16x4xf32>
    %17 = vector.shape_cast %16 : vector<16x16x4xf32> to vector<256x4xf32>
    %c1_31 = arith.constant 1 : index
    %c0_32 = arith.constant 0 : index
    %c0_33 = arith.constant 0 : index
    %18 = vector.load %arg8[%c1_31, %c0_32, %c0_33] : memref<18x18x4xf32, #tpu.memory_space<vmem>>, vector<16x16x4xf32>
    %19 = vector.shape_cast %18 : vector<16x16x4xf32> to vector<256x4xf32>
    %c1_34 = arith.constant 1 : index
    %c1_35 = arith.constant 1 : index
    %c0_36 = arith.constant 0 : index
    %20 = vector.load %arg8[%c1_34, %c1_35, %c0_36] : memref<18x18x4xf32, #tpu.memory_space<vmem>>, vector<16x16x4xf32>
    %21 = vector.shape_cast %20 : vector<16x16x4xf32> to vector<256x4xf32>
    %c1_37 = arith.constant 1 : index
    %c2_38 = arith.constant 2 : index
    %c0_39 = arith.constant 0 : index
    %22 = vector.load %arg8[%c1_37, %c2_38, %c0_39] : memref<18x18x4xf32, #tpu.memory_space<vmem>>, vector<16x16x4xf32>
    %23 = vector.shape_cast %22 : vector<16x16x4xf32> to vector<256x4xf32>
    %c2_40 = arith.constant 2 : index
    %c0_41 = arith.constant 0 : index
    %c0_42 = arith.constant 0 : index
    %24 = vector.load %arg8[%c2_40, %c0_41, %c0_42] : memref<18x18x4xf32, #tpu.memory_space<vmem>>, vector<16x16x4xf32>
    %25 = vector.shape_cast %24 : vector<16x16x4xf32> to vector<256x4xf32>
    %c2_43 = arith.constant 2 : index
    %c1_44 = arith.constant 1 : index
    %c0_45 = arith.constant 0 : index
    %26 = vector.load %arg8[%c2_43, %c1_44, %c0_45] : memref<18x18x4xf32, #tpu.memory_space<vmem>>, vector<16x16x4xf32>
    %27 = vector.shape_cast %26 : vector<16x16x4xf32> to vector<256x4xf32>
    %c2_46 = arith.constant 2 : index
    %c2_47 = arith.constant 2 : index
    %c0_48 = arith.constant 0 : index
    %28 = vector.load %arg8[%c2_46, %c2_47, %c0_48] : memref<18x18x4xf32, #tpu.memory_space<vmem>>, vector<16x16x4xf32>
    %29 = vector.shape_cast %28 : vector<16x16x4xf32> to vector<256x4xf32>
    %c0_49 = arith.constant 0 : index
    %c0_50 = arith.constant 0 : index
    %c0_51 = arith.constant 0 : index
    %30 = vector.load %arg9[%c0_49, %c0_50, %c0_51] : memref<18x18x4xf32, #tpu.memory_space<vmem>>, vector<16x16x4xf32>
    %31 = vector.shape_cast %30 : vector<16x16x4xf32> to vector<256x4xf32>
    %c0_52 = arith.constant 0 : index
    %c1_53 = arith.constant 1 : index
    %c0_54 = arith.constant 0 : index
    %32 = vector.load %arg9[%c0_52, %c1_53, %c0_54] : memref<18x18x4xf32, #tpu.memory_space<vmem>>, vector<16x16x4xf32>
    %33 = vector.shape_cast %32 : vector<16x16x4xf32> to vector<256x4xf32>
    %c0_55 = arith.constant 0 : index
    %c2_56 = arith.constant 2 : index
    %c0_57 = arith.constant 0 : index
    %34 = vector.load %arg9[%c0_55, %c2_56, %c0_57] : memref<18x18x4xf32, #tpu.memory_space<vmem>>, vector<16x16x4xf32>
    %35 = vector.shape_cast %34 : vector<16x16x4xf32> to vector<256x4xf32>
    %c1_58 = arith.constant 1 : index
    %c0_59 = arith.constant 0 : index
    %c0_60 = arith.constant 0 : index
    %36 = vector.load %arg9[%c1_58, %c0_59, %c0_60] : memref<18x18x4xf32, #tpu.memory_space<vmem>>, vector<16x16x4xf32>
    %37 = vector.shape_cast %36 : vector<16x16x4xf32> to vector<256x4xf32>
    %c1_61 = arith.constant 1 : index
    %c1_62 = arith.constant 1 : index
    %c0_63 = arith.constant 0 : index
    %38 = vector.load %arg9[%c1_61, %c1_62, %c0_63] : memref<18x18x4xf32, #tpu.memory_space<vmem>>, vector<16x16x4xf32>
    %39 = vector.shape_cast %38 : vector<16x16x4xf32> to vector<256x4xf32>
    %c1_64 = arith.constant 1 : index
    %c2_65 = arith.constant 2 : index
    %c0_66 = arith.constant 0 : index
    %40 = vector.load %arg9[%c1_64, %c2_65, %c0_66] : memref<18x18x4xf32, #tpu.memory_space<vmem>>, vector<16x16x4xf32>
    %41 = vector.shape_cast %40 : vector<16x16x4xf32> to vector<256x4xf32>
    %c2_67 = arith.constant 2 : index
    %c0_68 = arith.constant 0 : index
    %c0_69 = arith.constant 0 : index
    %42 = vector.load %arg9[%c2_67, %c0_68, %c0_69] : memref<18x18x4xf32, #tpu.memory_space<vmem>>, vector<16x16x4xf32>
    %43 = vector.shape_cast %42 : vector<16x16x4xf32> to vector<256x4xf32>
    %c2_70 = arith.constant 2 : index
    %c1_71 = arith.constant 1 : index
    %c0_72 = arith.constant 0 : index
    %44 = vector.load %arg9[%c2_70, %c1_71, %c0_72] : memref<18x18x4xf32, #tpu.memory_space<vmem>>, vector<16x16x4xf32>
    %45 = vector.shape_cast %44 : vector<16x16x4xf32> to vector<256x4xf32>
    %c2_73 = arith.constant 2 : index
    %c2_74 = arith.constant 2 : index
    %c0_75 = arith.constant 0 : index
    %46 = vector.load %arg9[%c2_73, %c2_74, %c0_75] : memref<18x18x4xf32, #tpu.memory_space<vmem>>, vector<16x16x4xf32>
    %47 = vector.shape_cast %46 : vector<16x16x4xf32> to vector<256x4xf32>
    %48 = tpu.concatenate %13, %15, %17, %19, %21, %23, %25, %27, %29, %31, %33, %35, %37, %39, %41, %43 in 1 : vector<256x4xf32>, vector<256x4xf32>, vector<256x4xf32>, vector<256x4xf32>, vector<256x4xf32>, vector<256x4xf32>, vector<256x4xf32>, vector<256x4xf32>, vector<256x4xf32>, vector<256x4xf32>, vector<256x4xf32>, vector<256x4xf32>, vector<256x4xf32>, vector<256x4xf32>, vector<256x4xf32>, vector<256x4xf32> -> vector<256x64xf32>
    %49 = tpu.concatenate %45, %47 in 1 : vector<256x4xf32>, vector<256x4xf32> -> vector<256x8xf32>
    %50 = tpu.concatenate %48, %49 in 1 : vector<256x64xf32>, vector<256x8xf32> -> vector<256x72xf32>
    %c0_76 = arith.constant 0 : index
    %c0_77 = arith.constant 0 : index
    %51 = vector.load %arg4[%c0_76, %c0_77] : memref<1x4xf32, #tpu.memory_space<vmem>>, vector<1x4xf32>
    %52 = vector.shape_cast %51 : vector<1x4xf32> to vector<1x4xf32>
    %53 = vector.broadcast %52 : vector<1x4xf32> to vector<256x4xf32>
    %54 = arith.truncf %50 : vector<256x72xf32> to vector<256x72xbf16>
    %c0_78 = arith.constant 0 : index
    %c0_79 = arith.constant 0 : index
    %55 = vector.load %arg3[%c0_78, %c0_79] : memref<72x4xbf16, #tpu.memory_space<vmem>>, vector<72x4xbf16>
    %cst_80 = arith.constant dense<0.000000e+00> : vector<256x4xf32>
    %56 = tpu.matmul %54, %55, %cst_80 {dimension_numbers = #tpu.dot_dimension_numbers<[1], [0], [0], [1], [0, 0, 1, 1], [], []>} : vector<256x72xbf16>, vector<72x4xbf16>, vector<256x4xf32> -> vector<256x4xf32>
    %57 = arith.addf %53, %56 : vector<256x4xf32>
    %cst_81 = arith.constant 0.000000e+00 : f32
    %cst_82 = arith.constant 6.000000e+00 : f32
    %58 = vector.broadcast %cst_81 : f32 to vector<256x4xf32>
    %59 = arith.maximumf %58, %57 : vector<256x4xf32>
    %60 = vector.broadcast %cst_82 : f32 to vector<256x4xf32>
    %61 = arith.minimumf %60, %59 : vector<256x4xf32>
    %62 = vector.shape_cast %61 : vector<256x4xf32> to vector<16x16x4xf32>
    %c1_83 = arith.constant 1 : index
    %c1_84 = arith.constant 1 : index
    %c0_85 = arith.constant 0 : index
    %63 = vector.load %arg10[%c1_83, %c1_84, %c0_85] : memref<18x18x4xf32, #tpu.memory_space<vmem>>, vector<16x16x4xf32>
    tpu.vector_store %arg10[%c1_83, %c1_84, %c0_85], %62 {strides = array<i32>} : memref<18x18x4xf32, #tpu.memory_space<vmem>>, vector<16x16x4xf32>,
    %c0_86 = arith.constant 0 : index
    %c0_87 = arith.constant 0 : index
    %c0_88 = arith.constant 0 : index
    %64 = vector.load %arg10[%c0_86, %c0_87, %c0_88] : memref<18x18x4xf32, #tpu.memory_space<vmem>>, vector<16x16x4xf32>
    %65 = vector.shape_cast %64 : vector<16x16x4xf32> to vector<256x4xf32>
    %c0_89 = arith.constant 0 : index
    %c1_90 = arith.constant 1 : index
    %c0_91 = arith.constant 0 : index
    %66 = vector.load %arg10[%c0_89, %c1_90, %c0_91] : memref<18x18x4xf32, #tpu.memory_space<vmem>>, vector<16x16x4xf32>
    %67 = vector.shape_cast %66 : vector<16x16x4xf32> to vector<256x4xf32>
    %c0_92 = arith.constant 0 : index
    %c2_93 = arith.constant 2 : index
    %c0_94 = arith.constant 0 : index
    %68 = vector.load %arg10[%c0_92, %c2_93, %c0_94] : memref<18x18x4xf32, #tpu.memory_space<vmem>>, vector<16x16x4xf32>
    %69 = vector.shape_cast %68 : vector<16x16x4xf32> to vector<256x4xf32>
    %c1_95 = arith.constant 1 : index
    %c0_96 = arith.constant 0 : index
    %c0_97 = arith.constant 0 : index
    %70 = vector.load %arg10[%c1_95, %c0_96, %c0_97] : memref<18x18x4xf32, #tpu.memory_space<vmem>>, vector<16x16x4xf32>
    %71 = vector.shape_cast %70 : vector<16x16x4xf32> to vector<256x4xf32>
    %c1_98 = arith.constant 1 : index
    %c1_99 = arith.constant 1 : index
    %c0_100 = arith.constant 0 : index
    %72 = vector.load %arg10[%c1_98, %c1_99, %c0_100] : memref<18x18x4xf32, #tpu.memory_space<vmem>>, vector<16x16x4xf32>
    %73 = vector.shape_cast %72 : vector<16x16x4xf32> to vector<256x4xf32>
    %c1_101 = arith.constant 1 : index
    %c2_102 = arith.constant 2 : index
    %c0_103 = arith.constant 0 : index
    %74 = vector.load %arg10[%c1_101, %c2_102, %c0_103] : memref<18x18x4xf32, #tpu.memory_space<vmem>>, vector<16x16x4xf32>
    %75 = vector.shape_cast %74 : vector<16x16x4xf32> to vector<256x4xf32>
    %c2_104 = arith.constant 2 : index
    %c0_105 = arith.constant 0 : index
    %c0_106 = arith.constant 0 : index
    %76 = vector.load %arg10[%c2_104, %c0_105, %c0_106] : memref<18x18x4xf32, #tpu.memory_space<vmem>>, vector<16x16x4xf32>
    %77 = vector.shape_cast %76 : vector<16x16x4xf32> to vector<256x4xf32>
    %c2_107 = arith.constant 2 : index
    %c1_108 = arith.constant 1 : index
    %c0_109 = arith.constant 0 : index
    %78 = vector.load %arg10[%c2_107, %c1_108, %c0_109] : memref<18x18x4xf32, #tpu.memory_space<vmem>>, vector<16x16x4xf32>
    %79 = vector.shape_cast %78 : vector<16x16x4xf32> to vector<256x4xf32>
    %c2_110 = arith.constant 2 : index
    %c2_111 = arith.constant 2 : index
    %c0_112 = arith.constant 0 : index
    %80 = vector.load %arg10[%c2_110, %c2_111, %c0_112] : memref<18x18x4xf32, #tpu.memory_space<vmem>>, vector<16x16x4xf32>
    %81 = vector.shape_cast %80 : vector<16x16x4xf32> to vector<256x4xf32>
    %82 = tpu.concatenate %65, %67, %69, %71, %73, %75, %77, %79, %81 in 1 : vector<256x4xf32>, vector<256x4xf32>, vector<256x4xf32>, vector<256x4xf32>, vector<256x4xf32>, vector<256x4xf32>, vector<256x4xf32>, vector<256x4xf32>, vector<256x4xf32> -> vector<256x36xf32>
    %c0_113 = arith.constant 0 : index
    %c0_114 = arith.constant 0 : index
    %83 = vector.load %arg6[%c0_113, %c0_114] : memref<4x1xf32, #tpu.memory_space<vmem>>, vector<4x1xf32>
    %84 = vector.shape_cast %83 : vector<4x1xf32> to vector<4x1xf32>
    %85 = vector.broadcast %84 : vector<4x1xf32> to vector<4x256xf32>
    %c0_115 = arith.constant 0 : index
    %c0_116 = arith.constant 0 : index
    %86 = vector.load %arg5[%c0_115, %c0_116] : memref<4x36xbf16, #tpu.memory_space<vmem>>, vector<4x36xbf16>
    %87 = arith.truncf %82 : vector<256x36xf32> to vector<256x36xbf16>
    %cst_117 = arith.constant dense<0.000000e+00> : vector<4x256xf32>
    %88 = tpu.matmul %86, %87, %cst_117 {dimension_numbers = #tpu.dot_dimension_numbers<[1], [1], [0], [0], [0, 0, 1, 0], [], []>} : vector<4x36xbf16>, vector<256x36xbf16>, vector<4x256xf32> -> vector<4x256xf32>
    %89 = arith.addf %85, %88 : vector<4x256xf32>
    %cst_118 = arith.constant 0.000000e+00 : f32
    %cst_119 = arith.constant 6.000000e+00 : f32
    %90 = vector.broadcast %cst_118 : f32 to vector<4x256xf32>
    %91 = arith.maximumf %90, %89 : vector<4x256xf32>
    %92 = vector.broadcast %cst_119 : f32 to vector<4x256xf32>
    %93 = arith.minimumf %92, %91 : vector<4x256xf32>
    %94 = vector.shape_cast %93 : vector<4x256xf32> to vector<1x4x256xf32>
    %c0_120 = arith.constant 0 : index
    %c0_121 = arith.constant 0 : index
    %c0_122 = arith.constant 0 : index
    %95 = vector.load %arg7[%c0_120, %c0_121, %c0_122] : memref<1x4x256xf32, #tpu.memory_space<vmem>>, vector<1x4x256xf32>
    tpu.vector_store %arg7[%c0_120, %c0_121, %c0_122], %94 {strides = array<i32>} : memref<1x4x256xf32, #tpu.memory_space<vmem>>, vector<1x4x256xf32>,
    return
  }
  func.func @transform_0(%arg0: i32) -> (i32, i32, i32, i32) {
    %c0_i32 = arith.constant 0 : i32
    %c0_i32_0 = arith.constant 0 : i32
    %c0_i32_1 = arith.constant 0 : i32
    %c0_i32_2 = arith.constant 0 : i32
    return %arg0, %c0_i32, %c0_i32_0, %c0_i32_1 : i32, i32, i32, i32
  }
  func.func @transform_1(%arg0: i32) -> (i32, i32, i32, i32) {
    %c0_i32 = arith.constant 0 : i32
    %c0_i32_0 = arith.constant 0 : i32
    %c0_i32_1 = arith.constant 0 : i32
    %c0_i32_2 = arith.constant 0 : i32
    return %arg0, %c0_i32, %c0_i32_0, %c0_i32_1 : i32, i32, i32, i32
  }
  func.func @transform_2(%arg0: i32) -> (i32, i32) {
    %c0_i32 = arith.constant 0 : i32
    %c0_i32_0 = arith.constant 0 : i32
    %c0_i32_1 = arith.constant 0 : i32
    return %c0_i32, %c0_i32_0 : i32, i32
  }
  func.func @transform_3(%arg0: i32) -> (i32, i32) {
    %c0_i32 = arith.constant 0 : i32
    %c0_i32_0 = arith.constant 0 : i32
    %c0_i32_1 = arith.constant 0 : i32
    return %c0_i32, %c0_i32_0 : i32, i32
  }
  func.func @transform_4(%arg0: i32) -> (i32, i32) {
    %c0_i32 = arith.constant 0 : i32
    %c0_i32_0 = arith.constant 0 : i32
    %c0_i32_1 = arith.constant 0 : i32
    return %c0_i32, %c0_i32_0 : i32, i32
  }
  func.func @transform_5(%arg0: i32) -> (i32, i32) {
    %c0_i32 = arith.constant 0 : i32
    %c0_i32_0 = arith.constant 0 : i32
    %c0_i32_1 = arith.constant 0 : i32
    return %c0_i32, %c0_i32_0 : i32, i32
  }
  func.func @transform_6(%arg0: i32) -> (i32, i32, i32) {
    %c0_i32 = arith.constant 0 : i32
    %c0_i32_0 = arith.constant 0 : i32
    %c0_i32_1 = arith.constant 0 : i32
    return %arg0, %c0_i32, %c0_i32_0 : i32, i32, i32
  }
}

</mosaic_0001>

<llo_original>
// kernel: up_forward.1
$region0: #{up_forward.1}
  #allocation0 [shape = 'u32[]', space=smem, size = 0x4, offset = 0x4, fixed_abs, tag = 'smem constant byte address 0x4 - core index']
  #allocation1 [shape = 'u32[144,128]{1,0:T(1,128)}', space=vmem, size = 0x12000, scoped, tag = 'internal scratch']
  #allocation2 [shape = 'f32[18,18,4]{2,1,0:T(8,128)}', space=vmem, size = 0x36000, scoped, tag = 'scratch operand']
  #allocation3 [shape = 'f32[18,18,4]{2,1,0:T(8,128)}', space=vmem, size = 0x36000, scoped, tag = 'scratch operand']
  #allocation4 [shape = 'f32[18,18,4]{2,1,0:T(8,128)}', space=vmem, size = 0x36000, scoped, tag = 'scratch operand']
  %s0 = inlined_call_operand.vmem [shape: f32[2,16,16,4], index: 0, kind: input, shape index: {}]
  %s1 = inlined_call_operand.vmem [shape: f32[2,16,16,4], index: 1, kind: input, shape index: {}]
  %s2 = inlined_call_operand.vmem [shape: bf16[72,4], index: 2, kind: input, shape index: {}]
  %s3 = inlined_call_operand.vmem [shape: f32[1,4], index: 3, kind: input, shape index: {}]
  %s4 = inlined_call_operand.vmem [shape: bf16[4,36], index: 4, kind: input, shape index: {}]
  %s5 = inlined_call_operand.vmem [shape: f32[4,1], index: 5, kind: input, shape index: {}]
  %s6 = inlined_call_operand.vmem [shape: f32[2,4,256], index: 6, kind: output, shape index: {}]
  %s7 = sld [smem:[#allocation0]]
  $region57: #{up_forward.1} parent=0
    _
  %s9 = ssub.s32 1, %s7
  %s10 = scalar_select 0, %s9, %s7
  loop: start=0, step=1, limit=4
  $region2: #{up_forward.1} parent=0 // loop_pre_header
    _
  $region3: #{up_forward.1} parent=0 // loop_header
    %s12 = sphi 0, %s16
    %p13 = scmp.ge.s32.totalorder %s12, 4
    %s22 = sphi 0, %s24
    %s25 = sphi 0, %s22
    %s26 = sphi 0, %s25
    %s42 = sphi 0, %s26
    %s48 = sphi 0, %s50
    %s51 = sphi 0, %s48
    %s52 = sphi 0, %s51
    %s68 = sphi 0, %s52
    %s72 = sphi 0, %s72
    %s74 = sphi 0, %s72
    %s75 = sphi 0, %s74
    %s89 = sphi 0, %s75
    %s93 = sphi 0, %s93
    %s95 = sphi 0, %s93
    %s96 = sphi 0, %s95
    %s110 = sphi 0, %s96
    %s114 = sphi 0, %s114
    %s116 = sphi 0, %s114
    %s117 = sphi 0, %s116
    %s131 = sphi 0, %s117
    %s135 = sphi 0, %s135
    %s137 = sphi 0, %s135
    %s138 = sphi 0, %s137
    %s152 = sphi 0, %s138
    %s158 = sphi 0, %s160
    %s161 = sphi 0, %s158
    %s162 = sphi 0, %s161
    %s178 = sphi 0, %s162
  $region4: #{up_forward.1} parent=0 // loop_header_branch
    %15 = sbr.rel (%p13) target = $region8
  $region5: #{up_forward.1} parent=0 // loop_body
    %s17 = ssub.s32 %s12, 1
    %s18 = ssub.s32 %s12, 2
    %s19 = sadd.s32 %s12, 1
    %s20 = ssub.s32 %s12, %s19
    %p21 = scmp.eq.s32.totalorder %s20, 0
    %s23 = sadd.s32 %s22, 1
    %s24 = scalar_select %p21, %s22, %s23
    %p27 = pneg %p21
    %p28 = scmp.eq.s32.totalorder %s12, 1
    %p29 = por %p27, %p28
    %p30 = scmp.ne.s32.totalorder %s22, %s25
    %p31 = scmp.eq.s32.totalorder %s12, 0
    %p32 = por %p30, %p31
    %p33 = scmp.ne.s32.totalorder %s22, %s25
    %p34 = scmp.eq.s32.totalorder %s17, 1
    %p35 = por %p33, %p34
    %p36 = scmp.ne.s32.totalorder %s25, %s26
    %p37 = scmp.eq.s32.totalorder %s17, 0
    %p38 = por %p36, %p37
    %p39 = scmp.ne.s32.totalorder %s25, %s26
    %p40 = scmp.eq.s32.totalorder %s18, 1
    %p41 = por %p39, %p40
    %p43 = scmp.ne.s32.totalorder %s26, %s42
    %p44 = scmp.eq.s32.totalorder %s18, 0
    %p45 = por %p43, %p44
    %s46 = ssub.s32 %s12, %s19
    %p47 = scmp.eq.s32.totalorder %s46, 0
    %s49 = sadd.s32 %s48, 1
    %s50 = scalar_select %p47, %s48, %s49
    %p53 = pneg %p47
    %p54 = scmp.eq.s32.totalorder %s12, 1
    %p55 = por %p53, %p54
    %p56 = scmp.ne.s32.totalorder %s48, %s51
    %p57 = scmp.eq.s32.totalorder %s12, 0
    %p58 = por %p56, %p57
    %p59 = scmp.ne.s32.totalorder %s48, %s51
    %p60 = scmp.eq.s32.totalorder %s17, 1
    %p61 = por %p59, %p60
    %p62 = scmp.ne.s32.totalorder %s51, %s52
    %p63 = scmp.eq.s32.totalorder %s17, 0
    %p64 = por %p62, %p63
    %p65 = scmp.ne.s32.totalorder %s51, %s52
    %p66 = scmp.eq.s32.totalorder %s18, 1
    %p67 = por %p65, %p66
    %p69 = scmp.ne.s32.totalorder %s52, %s68
    %p70 = scmp.eq.s32.totalorder %s18, 0
    %p71 = por %p69, %p70
    %s73 = sadd.s32 %s72, 1
    %p76 = scmp.eq.s32.totalorder %s12, 1
    %p77 = scmp.ne.s32.totalorder %s72, %s74
    %p78 = scmp.eq.s32.totalorder %s12, 0
    %p79 = por %p77, %p78
    %p80 = scmp.ne.s32.totalorder %s72, %s74
    %p81 = scmp.eq.s32.totalorder %s17, 1
    %p82 = por %p80, %p81
    %p83 = scmp.ne.s32.totalorder %s74, %s75
    %p84 = scmp.eq.s32.totalorder %s17, 0
    %p85 = por %p83, %p84
    %p86 = scmp.ne.s32.totalorder %s74, %s75
    %p87 = scmp.eq.s32.totalorder %s18, 1
    %p88 = por %p86, %p87
    %p90 = scmp.ne.s32.totalorder %s75, %s89
    %p91 = scmp.eq.s32.totalorder %s18, 0
    %p92 = por %p90, %p91
    %s94 = sadd.s32 %s93, 1
    %p97 = scmp.eq.s32.totalorder %s12, 1
    %p98 = scmp.ne.s32.totalorder %s93, %s95
    %p99 = scmp.eq.s32.totalorder %s12, 0
    %p100 = por %p98, %p99
    %p101 = scmp.ne.s32.totalorder %s93, %s95
    %p102 = scmp.eq.s32.totalorder %s17, 1
    %p103 = por %p101, %p102
    %p104 = scmp.ne.s32.totalorder %s95, %s96
    %p105 = scmp.eq.s32.totalorder %s17, 0
    %p106 = por %p104, %p105
    %p107 = scmp.ne.s32.totalorder %s95, %s96
    %p108 = scmp.eq.s32.totalorder %s18, 1
    %p109 = por %p107, %p108
    %p111 = scmp.ne.s32.totalorder %s96, %s110
    %p112 = scmp.eq.s32.totalorder %s18, 0
    %p113 = por %p111, %p112
    %s115 = sadd.s32 %s114, 1
    %p118 = scmp.eq.s32.totalorder %s12, 1
    %p119 = scmp.ne.s32.totalorder %s114, %s116
    %p120 = scmp.eq.s32.totalorder %s12, 0
    %p121 = por %p119, %p120
    %p122 = scmp.ne.s32.totalorder %s114, %s116
    %p123 = scmp.eq.s32.totalorder %s17, 1
    %p124 = por %p122, %p123
    %p125 = scmp.ne.s32.totalorder %s116, %s117
    %p126 = scmp.eq.s32.totalorder %s17, 0
    %p127 = por %p125, %p126
    %p128 = scmp.ne.s32.totalorder %s116, %s117
    %p129 = scmp.eq.s32.totalorder %s18, 1
    %p130 = por %p128, %p129
    %p132 = scmp.ne.s32.totalorder %s117, %s131
    %p133 = scmp.eq.s32.totalorder %s18, 0
    %p134 = por %p132, %p133
    %s136 = sadd.s32 %s135, 1
    %p139 = scmp.eq.s32.totalorder %s12, 1
    %p140 = scmp.ne.s32.totalorder %s135, %s137
    %p141 = scmp.eq.s32.totalorder %s12, 0
    %p142 = por %p140, %p141
    %p143 = scmp.ne.s32.totalorder %s135, %s137
    %p144 = scmp.eq.s32.totalorder %s17, 1
    %p145 = por %p143, %p144
    %p146 = scmp.ne.s32.totalorder %s137, %s138
    %p147 = scmp.eq.s32.totalorder %s17, 0
    %p148 = por %p146, %p147
    %p149 = scmp.ne.s32.totalorder %s137, %s138
    %p150 = scmp.eq.s32.totalorder %s18, 1
    %p151 = por %p149, %p150
    %p153 = scmp.ne.s32.totalorder %s138, %s152
    %p154 = scmp.eq.s32.totalorder %s18, 0
    %p155 = por %p153, %p154
    %s156 = ssub.s32 %s12, %s19
    %p157 = scmp.eq.s32.totalorder %s156, 0
    %s159 = sadd.s32 %s158, 1
    %s160 = scalar_select %p157, %s158, %s159
    %p163 = pneg %p157
    %p164 = scmp.eq.s32.totalorder %s12, 1
    %p165 = por %p163, %p164
    %p166 = scmp.ne.s32.totalorder %s158, %s161
    %p167 = scmp.eq.s32.totalorder %s12, 0
    %p168 = por %p166, %p167
    %p169 = scmp.ne.s32.totalorder %s158, %s161
    %p170 = scmp.eq.s32.totalorder %s17, 1
    %p171 = por %p169, %p170
    %p172 = scmp.ne.s32.totalorder %s161, %s162
    %p173 = scmp.eq.s32.totalorder %s17, 0
    %p174 = por %p172, %p173
    %p175 = scmp.ne.s32.totalorder %s161, %s162
    %p176 = scmp.eq.s32.totalorder %s18, 1
    %p177 = por %p175, %p176
    %p179 = scmp.ne.s32.totalorder %s162, %s178
    %p180 = scmp.eq.s32.totalorder %s18, 0
    %p181 = por %p179, %p180
    %p182 = scmp.le.s32.totalorder 1, %s12
    %p183 = scmp.lt.s32.totalorder %s12, 3
    %p184 = pnand %p182, %p183
    %p185 = pneg %p184
    // Predicated region
    $region9: #{up_forward.1} parent=5 // pred_check
      _
    $region10: #{up_forward.1} parent=5 // pred_check_branch
      %187 = sbr.rel (%p184) target = $region12
    $region11: #{up_forward.1} parent=5 // pred_region
      %s188 = ssub.s32 %s12, 1
      // Predicated region
      $region13: #{up_forward.1} parent=11 // pred_check
        %p189 = pneg %p85
      $region14: #{up_forward.1} parent=11 // pred_check_branch
        %191 = sbr.rel (%p189) target = $region16
      $region15: #{up_forward.1} parent=11 // pred_region
        _
      $region16: #{up_forward.1} parent=11 // pred_fallthru
        _
      // Predicated region
      $region17: #{up_forward.1} parent=11 // pred_check
        %p192 = pneg %p106
      $region18: #{up_forward.1} parent=11 // pred_check_branch
        %194 = sbr.rel (%p192) target = $region20
      $region19: #{up_forward.1} parent=11 // pred_region
        _
      $region20: #{up_forward.1} parent=11 // pred_fallthru
        _
      // Predicated region
      $region21: #{up_forward.1} parent=11 // pred_check
        %p195 = pneg %p127
      $region22: #{up_forward.1} parent=11 // pred_check_branch
        %197 = sbr.rel (%p195) target = $region24
      $region23: #{up_forward.1} parent=11 // pred_region
        _
      $region24: #{up_forward.1} parent=11 // pred_fallthru
        _
      // Predicated region
      $region25: #{up_forward.1} parent=11 // pred_check
        %p198 = pneg %p148
      $region26: #{up_forward.1} parent=11 // pred_check_branch
        %200 = sbr.rel (%p198) target = $region28
      $region27: #{up_forward.1} parent=11 // pred_region
        _
      $region28: #{up_forward.1} parent=11 // pred_fallthru
        _
    $region12: #{up_forward.1} parent=5 // pred_fallthru
      _
    %p201 = scmp.lt.s32.totalorder %s12, 2
    // Predicated region
    $region29: #{up_forward.1} parent=5 // pred_check
      %p202 = pneg %p201
    $region30: #{up_forward.1} parent=5 // pred_check_branch
      %204 = sbr.rel (%p202) target = $region32
    $region31: #{up_forward.1} parent=5 // pred_region
      // Predicated region
      $region33: #{up_forward.1} parent=31 // pred_check
        %p205 = pneg %p32
      $region34: #{up_forward.1} parent=31 // pred_check_branch
        %207 = sbr.rel (%p205) target = $region36
      $region35: #{up_forward.1} parent=31 // pred_region
        %p208 = scmp.lt.s32.totalorder %s12, 1
        %s209 = scalar_select %p208, %s12, 1
        %s210 = smul.addr %s209, 32
        %s211 = smul.addr %s210, 8
        %s212 = scalar_lea.vmem %s0, %s211
      $region36: #{up_forward.1} parent=31 // pred_fallthru
        _
      // Predicated region
      $region37: #{up_forward.1} parent=31 // pred_check
        %p213 = pneg %p58
      $region38: #{up_forward.1} parent=31 // pred_check_branch
        %215 = sbr.rel (%p213) target = $region40
      $region39: #{up_forward.1} parent=31 // pred_region
        %p216 = scmp.lt.s32.totalorder %s12, 1
        %s217 = scalar_select %p216, %s12, 1
        %s218 = smul.addr %s217, 32
        %s219 = smul.addr %s218, 8
        %s220 = scalar_lea.vmem %s1, %s219
      $region40: #{up_forward.1} parent=31 // pred_fallthru
        _
    $region32: #{up_forward.1} parent=5 // pred_fallthru
      _
    %p221 = scmp.le.s32.totalorder 1, %s12
    %p222 = scmp.lt.s32.totalorder %s12, 3
    %p223 = pnand %p221, %p222
    %p224 = pneg %p223
    // Predicated region
    $region41: #{up_forward.1} parent=5 // pred_check
      _
    $region42: #{up_forward.1} parent=5 // pred_check_branch
      %226 = sbr.rel (%p223) target = $region44
    $region43: #{up_forward.1} parent=5 // pred_region
      %s227 = ssub.s32 %s12, 1
      %p228 = scmp.lt.s32.totalorder %s17, 1
      %s229 = scalar_select %p228, %s17, 1
      %s230 = smul.addr %s229, 32
      %s231 = smul.addr %s230, 8
      %s232 = scalar_lea.vmem %s0, %s231
      %p233 = pneg %p38
      %p234 = pneg %p35
      %p235 = scmp.lt.s32.totalorder %s17, 1
      %s236 = scalar_select %p235, %s17, 1
      %s237 = smul.addr %s236, 32
      %s238 = smul.addr %s237, 8
      %s239 = scalar_lea.vmem %s1, %s238
      %p240 = pneg %p64
      %p241 = pneg %p61
      %p242 = pneg %p85
      %p243 = pneg %p82
      %p244 = pneg %p106
      %p245 = pneg %p103
      %p246 = pneg %p127
      %p247 = pneg %p124
      %p248 = pneg %p148
      %p249 = pneg %p145
      %p250 = pneg %p174
      %p251 = pneg %p171
      %p252 = scmp.lt.s32.totalorder %s17, 1
      %s253 = scalar_select %p252, %s17, 1
      %s254 = smul.addr %s253, 2
      %s255 = smul.addr %s254, 4
      %s256 = scalar_lea.vmem %s6, %s255
      %p257 = scmp.lt.s32.totalorder %s17, 1
      %s258 = scalar_select %p257, %s17, 1
      %s259 = smul.addr %s258, 32
      %s260 = smul.addr %s259, 8
      %s261 = scalar_lea.vmem %s0, %s260
      %p262 = scmp.lt.s32.totalorder %s17, 1
      %s263 = scalar_select %p262, %s17, 1
      %s264 = smul.addr %s263, 32
      %s265 = smul.addr %s264, 8
      %s266 = scalar_lea.vmem %s1, %s265
      %p267 = scmp.lt.s32.totalorder %s17, 1
      %s268 = scalar_select %p267, %s17, 1
      %s269 = smul.addr %s268, 2
      %s270 = smul.addr %s269, 4
      %s271 = scalar_lea.vmem %s6, %s270
      %vm273 = vcmask 31744
      %274 = vst.msk [vmem:[#allocation2] sm:$0xff] %vm273, 0.0
      %275 = vst.msk [vmem:[#allocation2 + $0x8] sm:$0xff] %vm273, 0.0
      %vm276 = vcmask 25600
      %277 = vst.msk [vmem:[#allocation2 + $0x10] sm:$0x3] %vm276, 0.0
      %278 = vst.msk [vmem:[#allocation2 + $0x18] sm:$0xff] %vm273, 0.0
      %279 = vst.msk [vmem:[#allocation2 + $0x20] sm:$0xff] %vm273, 0.0
      %280 = vst.msk [vmem:[#allocation2 + $0x28] sm:$0x3] %vm276, 0.0
      %281 = vst.msk [vmem:[#allocation2 + $0x30] sm:$0xff] %vm273, 0.0
      %282 = vst.msk [vmem:[#allocation2 + $0x38] sm:$0xff] %vm273, 0.0
      %283 = vst.msk [vmem:[#allocation2 + $0x40] sm:$0x3] %vm276, 0.0
      %284 = vst.msk [vmem:[#allocation2 + $0x48] sm:$0xff] %vm273, 0.0
      %285 = vst.msk [vmem:[#allocation2 + $0x50] sm:$0xff] %vm273, 0.0
      %286 = vst.msk [vmem:[#allocation2 + $0x58] sm:$0x3] %vm276, 0.0
      %287 = vst.msk [vmem:[#allocation2 + $0x60] sm:$0xff] %vm273, 0.0
      %288 = vst.msk [vmem:[#allocation2 + $0x68] sm:$0xff] %vm273, 0.0
      %289 = vst.msk [vmem:[#allocation2 + $0x70] sm:$0x3] %vm276, 0.0
      %290 = vst.msk [vmem:[#allocation2 + $0x78] sm:$0xff] %vm273, 0.0
      %291 = vst.msk [vmem:[#allocation2 + $0x80] sm:$0xff] %vm273, 0.0
      %292 = vst.msk [vmem:[#allocation2 + $0x88] sm:$0x3] %vm276, 0.0
      %293 = vst.msk [vmem:[#allocation2 + $0x90] sm:$0xff] %vm273, 0.0
      %294 = vst.msk [vmem:[#allocation2 + $0x98] sm:$0xff] %vm273, 0.0
      %295 = vst.msk [vmem:[#allocation2 + $0xa0] sm:$0x3] %vm276, 0.0
      %296 = vst.msk [vmem:[#allocation2 + $0xa8] sm:$0xff] %vm273, 0.0
      %297 = vst.msk [vmem:[#allocation2 + $0xb0] sm:$0xff] %vm273, 0.0
      %298 = vst.msk [vmem:[#allocation2 + $0xb8] sm:$0x3] %vm276, 0.0
      %299 = vst.msk [vmem:[#allocation2 + $0xc0] sm:$0xff] %vm273, 0.0
      %300 = vst.msk [vmem:[#allocation2 + $0xc8] sm:$0xff] %vm273, 0.0
      %301 = vst.msk [vmem:[#allocation2 + $0xd0] sm:$0x3] %vm276, 0.0
      %302 = vst.msk [vmem:[#allocation2 + $0xd8] sm:$0xff] %vm273, 0.0
      %303 = vst.msk [vmem:[#allocation2 + $0xe0] sm:$0xff] %vm273, 0.0
      %304 = vst.msk [vmem:[#allocation2 + $0xe8] sm:$0x3] %vm276, 0.0
      %305 = vst.msk [vmem:[#allocation2 + $0xf0] sm:$0xff] %vm273, 0.0
      %306 = vst.msk [vmem:[#allocation2 + $0xf8] sm:$0xff] %vm273, 0.0
      %307 = vst.msk [vmem:[#allocation2 + $0x100] sm:$0x3] %vm276, 0.0
      %308 = vst.msk [vmem:[#allocation2 + $0x108] sm:$0xff] %vm273, 0.0
      %309 = vst.msk [vmem:[#allocation2 + $0x110] sm:$0xff] %vm273, 0.0
      %310 = vst.msk [vmem:[#allocation2 + $0x118] sm:$0x3] %vm276, 0.0
      %311 = vst.msk [vmem:[#allocation2 + $0x120] sm:$0xff] %vm273, 0.0
      %312 = vst.msk [vmem:[#allocation2 + $0x128] sm:$0xff] %vm273, 0.0
      %313 = vst.msk [vmem:[#allocation2 + $0x130] sm:$0x3] %vm276, 0.0
      %314 = vst.msk [vmem:[#allocation2 + $0x138] sm:$0xff] %vm273, 0.0
      %315 = vst.msk [vmem:[#allocation2 + $0x140] sm:$0xff] %vm273, 0.0
      %316 = vst.msk [vmem:[#allocation2 + $0x148] sm:$0x3] %vm276, 0.0
      %317 = vst.msk [vmem:[#allocation2 + $0x150] sm:$0xff] %vm273, 0.0
      %318 = vst.msk [vmem:[#allocation2 + $0x158] sm:$0xff] %vm273, 0.0
      %319 = vst.msk [vmem:[#allocation2 + $0x160] sm:$0x3] %vm276, 0.0
      %320 = vst.msk [vmem:[#allocation2 + $0x168] sm:$0xff] %vm273, 0.0
      %321 = vst.msk [vmem:[#allocation2 + $0x170] sm:$0xff] %vm273, 0.0
      %322 = vst.msk [vmem:[#allocation2 + $0x178] sm:$0x3] %vm276, 0.0
      %323 = vst.msk [vmem:[#allocation2 + $0x180] sm:$0xff] %vm273, 0.0
      %324 = vst.msk [vmem:[#allocation2 + $0x188] sm:$0xff] %vm273, 0.0
      %325 = vst.msk [vmem:[#allocation2 + $0x190] sm:$0x3] %vm276, 0.0
      %326 = vst.msk [vmem:[#allocation2 + $0x198] sm:$0xff] %vm273, 0.0
      %327 = vst.msk [vmem:[#allocation2 + $0x1a0] sm:$0xff] %vm273, 0.0
      %328 = vst.msk [vmem:[#allocation2 + $0x1a8] sm:$0x3] %vm276, 0.0
      %329 = vst.msk [vmem:[#allocation3] sm:$0xff] %vm273, 0.0
      %330 = vst.msk [vmem:[#allocation3 + $0x8] sm:$0xff] %vm273, 0.0
      %331 = vst.msk [vmem:[#allocation3 + $0x10] sm:$0x3] %vm276, 0.0
      %332 = vst.msk [vmem:[#allocation3 + $0x18] sm:$0xff] %vm273, 0.0
      %333 = vst.msk [vmem:[#allocation3 + $0x20] sm:$0xff] %vm273, 0.0
      %334 = vst.msk [vmem:[#allocation3 + $0x28] sm:$0x3] %vm276, 0.0
      %335 = vst.msk [vmem:[#allocation3 + $0x30] sm:$0xff] %vm273, 0.0
      %336 = vst.msk [vmem:[#allocation3 + $0x38] sm:$0xff] %vm273, 0.0
      %337 = vst.msk [vmem:[#allocation3 + $0x40] sm:$0x3] %vm276, 0.0
      %338 = vst.msk [vmem:[#allocation3 + $0x48] sm:$0xff] %vm273, 0.0
      %339 = vst.msk [vmem:[#allocation3 + $0x50] sm:$0xff] %vm273, 0.0
      %340 = vst.msk [vmem:[#allocation3 + $0x58] sm:$0x3] %vm276, 0.0
      %341 = vst.msk [vmem:[#allocation3 + $0x60] sm:$0xff] %vm273, 0.0
      %342 = vst.msk [vmem:[#allocation3 + $0x68] sm:$0xff] %vm273, 0.0
      %343 = vst.msk [vmem:[#allocation3 + $0x70] sm:$0x3] %vm276, 0.0
      %344 = vst.msk [vmem:[#allocation3 + $0x78] sm:$0xff] %vm273, 0.0
      %345 = vst.msk [vmem:[#allocation3 + $0x80] sm:$0xff] %vm273, 0.0
      %346 = vst.msk [vmem:[#allocation3 + $0x88] sm:$0x3] %vm276, 0.0
      %347 = vst.msk [vmem:[#allocation3 + $0x90] sm:$0xff] %vm273, 0.0
      %348 = vst.msk [vmem:[#allocation3 + $0x98] sm:$0xff] %vm273, 0.0
      %349 = vst.msk [vmem:[#allocation3 + $0xa0] sm:$0x3] %vm276, 0.0
      %350 = vst.msk [vmem:[#allocation3 + $0xa8] sm:$0xff] %vm273, 0.0
      %351 = vst.msk [vmem:[#allocation3 + $0xb0] sm:$0xff] %vm273, 0.0
      %352 = vst.msk [vmem:[#allocation3 + $0xb8] sm:$0x3] %vm276, 0.0
      %353 = vst.msk [vmem:[#allocation3 + $0xc0] sm:$0xff] %vm273, 0.0
      %354 = vst.msk [vmem:[#allocation3 + $0xc8] sm:$0xff] %vm273, 0.0
      %355 = vst.msk [vmem:[#allocation3 + $0xd0] sm:$0x3] %vm276, 0.0
      %356 = vst.msk [vmem:[#allocation3 + $0xd8] sm:$0xff] %vm273, 0.0
      %357 = vst.msk [vmem:[#allocation3 + $0xe0] sm:$0xff] %vm273, 0.0
      %358 = vst.msk [vmem:[#allocation3 + $0xe8] sm:$0x3] %vm276, 0.0
      %359 = vst.msk [vmem:[#allocation3 + $0xf0] sm:$0xff] %vm273, 0.0
      %360 = vst.msk [vmem:[#allocation3 + $0xf8] sm:$0xff] %vm273, 0.0
      %361 = vst.msk [vmem:[#allocation3 + $0x100] sm:$0x3] %vm276, 0.0
      %362 = vst.msk [vmem:[#allocation3 + $0x108] sm:$0xff] %vm273, 0.0
      %363 = vst.msk [vmem:[#allocation3 + $0x110] sm:$0xff] %vm273, 0.0
      %364 = vst.msk [vmem:[#allocation3 + $0x118] sm:$0x3] %vm276, 0.0
      %365 = vst.msk [vmem:[#allocation3 + $0x120] sm:$0xff] %vm273, 0.0
      %366 = vst.msk [vmem:[#allocation3 + $0x128] sm:$0xff] %vm273, 0.0
      %367 = vst.msk [vmem:[#allocation3 + $0x130] sm:$0x3] %vm276, 0.0
      %368 = vst.msk [vmem:[#allocation3 + $0x138] sm:$0xff] %vm273, 0.0
      %369 = vst.msk [vmem:[#allocation3 + $0x140] sm:$0xff] %vm273, 0.0
      %370 = vst.msk [vmem:[#allocation3 + $0x148] sm:$0x3] %vm276, 0.0
      %371 = vst.msk [vmem:[#allocation3 + $0x150] sm:$0xff] %vm273, 0.0
      %372 = vst.msk [vmem:[#allocation3 + $0x158] sm:$0xff] %vm273, 0.0
      %373 = vst.msk [vmem:[#allocation3 + $0x160] sm:$0x3] %vm276, 0.0
      %374 = vst.msk [vmem:[#allocation3 + $0x168] sm:$0xff] %vm273, 0.0
      %375 = vst.msk [vmem:[#allocation3 + $0x170] sm:$0xff] %vm273, 0.0
      %376 = vst.msk [vmem:[#allocation3 + $0x178] sm:$0x3] %vm276, 0.0
      %377 = vst.msk [vmem:[#allocation3 + $0x180] sm:$0xff] %vm273, 0.0
      %378 = vst.msk [vmem:[#allocation3 + $0x188] sm:$0xff] %vm273, 0.0
      %379 = vst.msk [vmem:[#allocation3 + $0x190] sm:$0x3] %vm276, 0.0
      %380 = vst.msk [vmem:[#allocation3 + $0x198] sm:$0xff] %vm273, 0.0
      %381 = vst.msk [vmem:[#allocation3 + $0x1a0] sm:$0xff] %vm273, 0.0
      %382 = vst.msk [vmem:[#allocation3 + $0x1a8] sm:$0x3] %vm276, 0.0
      %383 = vst.msk [vmem:[#allocation4] sm:$0xff] %vm273, 0.0
      %384 = vst.msk [vmem:[#allocation4 + $0x8] sm:$0xff] %vm273, 0.0
      %385 = vst.msk [vmem:[#allocation4 + $0x10] sm:$0x3] %vm276, 0.0
      %386 = vst.msk [vmem:[#allocation4 + $0x18] sm:$0xff] %vm273, 0.0
      %387 = vst.msk [vmem:[#allocation4 + $0x20] sm:$0xff] %vm273, 0.0
      %388 = vst.msk [vmem:[#allocation4 + $0x28] sm:$0x3] %vm276, 0.0
      %389 = vst.msk [vmem:[#allocation4 + $0x30] sm:$0xff] %vm273, 0.0
      %390 = vst.msk [vmem:[#allocation4 + $0x38] sm:$0xff] %vm273, 0.0
      %391 = vst.msk [vmem:[#allocation4 + $0x40] sm:$0x3] %vm276, 0.0
      %392 = vst.msk [vmem:[#allocation4 + $0x48] sm:$0xff] %vm273, 0.0
      %393 = vst.msk [vmem:[#allocation4 + $0x50] sm:$0xff] %vm273, 0.0
      %394 = vst.msk [vmem:[#allocation4 + $0x58] sm:$0x3] %vm276, 0.0
      %395 = vst.msk [vmem:[#allocation4 + $0x60] sm:$0xff] %vm273, 0.0
      %396 = vst.msk [vmem:[#allocation4 + $0x68] sm:$0xff] %vm273, 0.0
      %397 = vst.msk [vmem:[#allocation4 + $0x70] sm:$0x3] %vm276, 0.0
      %398 = vst.msk [vmem:[#allocation4 + $0x78] sm:$0xff] %vm273, 0.0
      %399 = vst.msk [vmem:[#allocation4 + $0x80] sm:$0xff] %vm273, 0.0
      %400 = vst.msk [vmem:[#allocation4 + $0x88] sm:$0x3] %vm276, 0.0
      %401 = vst.msk [vmem:[#allocation4 + $0x90] sm:$0xff] %vm273, 0.0
      %402 = vst.msk [vmem:[#allocation4 + $0x98] sm:$0xff] %vm273, 0.0
      %403 = vst.msk [vmem:[#allocation4 + $0xa0] sm:$0x3] %vm276, 0.0
      %404 = vst.msk [vmem:[#allocation4 + $0xa8] sm:$0xff] %vm273, 0.0
      %405 = vst.msk [vmem:[#allocation4 + $0xb0] sm:$0xff] %vm273, 0.0
      %406 = vst.msk [vmem:[#allocation4 + $0xb8] sm:$0x3] %vm276, 0.0
      %407 = vst.msk [vmem:[#allocation4 + $0xc0] sm:$0xff] %vm273, 0.0
      %408 = vst.msk [vmem:[#allocation4 + $0xc8] sm:$0xff] %vm273, 0.0
      %409 = vst.msk [vmem:[#allocation4 + $0xd0] sm:$0x3] %vm276, 0.0
      %410 = vst.msk [vmem:[#allocation4 + $0xd8] sm:$0xff] %vm273, 0.0
      %411 = vst.msk [vmem:[#allocation4 + $0xe0] sm:$0xff] %vm273, 0.0
      %412 = vst.msk [vmem:[#allocation4 + $0xe8] sm:$0x3] %vm276, 0.0
      %413 = vst.msk [vmem:[#allocation4 + $0xf0] sm:$0xff] %vm273, 0.0
      %414 = vst.msk [vmem:[#allocation4 + $0xf8] sm:$0xff] %vm273, 0.0
      %415 = vst.msk [vmem:[#allocation4 + $0x100] sm:$0x3] %vm276, 0.0
      %416 = vst.msk [vmem:[#allocation4 + $0x108] sm:$0xff] %vm273, 0.0
      %417 = vst.msk [vmem:[#allocation4 + $0x110] sm:$0xff] %vm273, 0.0
      %418 = vst.msk [vmem:[#allocation4 + $0x118] sm:$0x3] %vm276, 0.0
      %419 = vst.msk [vmem:[#allocation4 + $0x120] sm:$0xff] %vm273, 0.0
      %420 = vst.msk [vmem:[#allocation4 + $0x128] sm:$0xff] %vm273, 0.0
      %421 = vst.msk [vmem:[#allocation4 + $0x130] sm:$0x3] %vm276, 0.0
      %422 = vst.msk [vmem:[#allocation4 + $0x138] sm:$0xff] %vm273, 0.0
      %423 = vst.msk [vmem:[#allocation4 + $0x140] sm:$0xff] %vm273, 0.0
      %424 = vst.msk [vmem:[#allocation4 + $0x148] sm:$0x3] %vm276, 0.0
      %425 = vst.msk [vmem:[#allocation4 + $0x150] sm:$0xff] %vm273, 0.0
      %426 = vst.msk [vmem:[#allocation4 + $0x158] sm:$0xff] %vm273, 0.0
      %427 = vst.msk [vmem:[#allocation4 + $0x160] sm:$0x3] %vm276, 0.0
      %428 = vst.msk [vmem:[#allocation4 + $0x168] sm:$0xff] %vm273, 0.0
      %429 = vst.msk [vmem:[#allocation4 + $0x170] sm:$0xff] %vm273, 0.0
      %430 = vst.msk [vmem:[#allocation4 + $0x178] sm:$0x3] %vm276, 0.0
      %431 = vst.msk [vmem:[#allocation4 + $0x180] sm:$0xff] %vm273, 0.0
      %432 = vst.msk [vmem:[#allocation4 + $0x188] sm:$0xff] %vm273, 0.0
      %433 = vst.msk [vmem:[#allocation4 + $0x190] sm:$0x3] %vm276, 0.0
      %434 = vst.msk [vmem:[#allocation4 + $0x198] sm:$0xff] %vm273, 0.0
      %435 = vst.msk [vmem:[#allocation4 + $0x1a0] sm:$0xff] %vm273, 0.0
      %436 = vst.msk [vmem:[#allocation4 + $0x1a8] sm:$0x3] %vm276, 0.0
      %v437 = vld [vmem:[%s261] sm:$0xff]
      %v438 = vld [vmem:[%s261 + $0x8] sm:$0xff]
      %v439 = vld [vmem:[%s261 + $0x10] sm:$0xff]
      %v440 = vld [vmem:[%s261 + $0x18] sm:$0xff]
      %v441 = vld [vmem:[%s261 + $0x20] sm:$0xff]
      %v442 = vld [vmem:[%s261 + $0x28] sm:$0xff]
      %v443 = vld [vmem:[%s261 + $0x30] sm:$0xff]
      %v444 = vld [vmem:[%s261 + $0x38] sm:$0xff]
      %v445 = vld [vmem:[%s261 + $0x40] sm:$0xff]
      %v446 = vld [vmem:[%s261 + $0x48] sm:$0xff]
      %v447 = vld [vmem:[%s261 + $0x50] sm:$0xff]
      %v448 = vld [vmem:[%s261 + $0x58] sm:$0xff]
      %v449 = vld [vmem:[%s261 + $0x60] sm:$0xff]
      %v450 = vld [vmem:[%s261 + $0x68] sm:$0xff]
      %v451 = vld [vmem:[%s261 + $0x70] sm:$0xff]
      %v452 = vld [vmem:[%s261 + $0x78] sm:$0xff]
      %v453 = vld [vmem:[%s261 + $0x80] sm:$0xff]
      %v454 = vld [vmem:[%s261 + $0x88] sm:$0xff]
      %v455 = vld [vmem:[%s261 + $0x90] sm:$0xff]
      %v456 = vld [vmem:[%s261 + $0x98] sm:$0xff]
      %v457 = vld [vmem:[%s261 + $0xa0] sm:$0xff]
      %v458 = vld [vmem:[%s261 + $0xa8] sm:$0xff]
      %v459 = vld [vmem:[%s261 + $0xb0] sm:$0xff]
      %v460 = vld [vmem:[%s261 + $0xb8] sm:$0xff]
      %v461 = vld [vmem:[%s261 + $0xc0] sm:$0xff]
      %v462 = vld [vmem:[%s261 + $0xc8] sm:$0xff]
      %v463 = vld [vmem:[%s261 + $0xd0] sm:$0xff]
      %v464 = vld [vmem:[%s261 + $0xd8] sm:$0xff]
      %v465 = vld [vmem:[%s261 + $0xe0] sm:$0xff]
      %v466 = vld [vmem:[%s261 + $0xe8] sm:$0xff]
      %v467 = vld [vmem:[%s261 + $0xf0] sm:$0xff]
      %v468 = vld [vmem:[%s261 + $0xf8] sm:$0xff]
      %s469 = scalar_lea.vmem [#allocation2], 24
      %470 = vst.msk [vmem:[%s469 + $0x1] sm:$0xff] %vm273, %v437
      %471 = vst.msk [vmem:[%s469 + $0x9] sm:$0xff] %vm273, %v438
      %472 = vst.msk [vmem:[%s469 + $0x19] sm:$0xff] %vm273, %v439
      %473 = vst.msk [vmem:[%s469 + $0x21] sm:$0xff] %vm273, %v440
      %474 = vst.msk [vmem:[%s469 + $0x31] sm:$0xff] %vm273, %v441
      %475 = vst.msk [vmem:[%s469 + $0x39] sm:$0xff] %vm273, %v442
      %476 = vst.msk [vmem:[%s469 + $0x49] sm:$0xff] %vm273, %v443
      %477 = vst.msk [vmem:[%s469 + $0x51] sm:$0xff] %vm273, %v444
      %478 = vst.msk [vmem:[%s469 + $0x61] sm:$0xff] %vm273, %v445
      %479 = vst.msk [vmem:[%s469 + $0x69] sm:$0xff] %vm273, %v446
      %480 = vst.msk [vmem:[%s469 + $0x79] sm:$0xff] %vm273, %v447
      %481 = vst.msk [vmem:[%s469 + $0x81] sm:$0xff] %vm273, %v448
      %482 = vst.msk [vmem:[%s469 + $0x91] sm:$0xff] %vm273, %v449
      %483 = vst.msk [vmem:[%s469 + $0x99] sm:$0xff] %vm273, %v450
      %484 = vst.msk [vmem:[%s469 + $0xa9] sm:$0xff] %vm273, %v451
      %485 = vst.msk [vmem:[%s469 + $0xb1] sm:$0xff] %vm273, %v452
      %486 = vst.msk [vmem:[%s469 + $0xc1] sm:$0xff] %vm273, %v453
      %487 = vst.msk [vmem:[%s469 + $0xc9] sm:$0xff] %vm273, %v454
      %488 = vst.msk [vmem:[%s469 + $0xd9] sm:$0xff] %vm273, %v455
      %489 = vst.msk [vmem:[%s469 + $0xe1] sm:$0xff] %vm273, %v456
      %490 = vst.msk [vmem:[%s469 + $0xf1] sm:$0xff] %vm273, %v457
      %491 = vst.msk [vmem:[%s469 + $0xf9] sm:$0xff] %vm273, %v458
      %492 = vst.msk [vmem:[%s469 + $0x109] sm:$0xff] %vm273, %v459
      %493 = vst.msk [vmem:[%s469 + $0x111] sm:$0xff] %vm273, %v460
      %494 = vst.msk [vmem:[%s469 + $0x121] sm:$0xff] %vm273, %v461
      %495 = vst.msk [vmem:[%s469 + $0x129] sm:$0xff] %vm273, %v462
      %496 = vst.msk [vmem:[%s469 + $0x139] sm:$0xff] %vm273, %v463
      %497 = vst.msk [vmem:[%s469 + $0x141] sm:$0xff] %vm273, %v464
      %498 = vst.msk [vmem:[%s469 + $0x151] sm:$0xff] %vm273, %v465
      %499 = vst.msk [vmem:[%s469 + $0x159] sm:$0xff] %vm273, %v466
      %500 = vst.msk [vmem:[%s469 + $0x169] sm:$0xff] %vm273, %v467
      %501 = vst.msk [vmem:[%s469 + $0x171] sm:$0xff] %vm273, %v468
      %v502 = vld [vmem:[%s266] sm:$0xff]
      %v503 = vld [vmem:[%s266 + $0x8] sm:$0xff]
      %v504 = vld [vmem:[%s266 + $0x10] sm:$0xff]
      %v505 = vld [vmem:[%s266 + $0x18] sm:$0xff]
      %v506 = vld [vmem:[%s266 + $0x20] sm:$0xff]
      %v507 = vld [vmem:[%s266 + $0x28] sm:$0xff]
      %v508 = vld [vmem:[%s266 + $0x30] sm:$0xff]
      %v509 = vld [vmem:[%s266 + $0x38] sm:$0xff]
      %v510 = vld [vmem:[%s266 + $0x40] sm:$0xff]
      %v511 = vld [vmem:[%s266 + $0x48] sm:$0xff]
      %v512 = vld [vmem:[%s266 + $0x50] sm:$0xff]
      %v513 = vld [vmem:[%s266 + $0x58] sm:$0xff]
      %v514 = vld [vmem:[%s266 + $0x60] sm:$0xff]
      %v515 = vld [vmem:[%s266 + $0x68] sm:$0xff]
      %v516 = vld [vmem:[%s266 + $0x70] sm:$0xff]
      %v517 = vld [vmem:[%s266 + $0x78] sm:$0xff]
      %v518 = vld [vmem:[%s266 + $0x80] sm:$0xff]
      %v519 = vld [vmem:[%s266 + $0x88] sm:$0xff]
      %v520 = vld [vmem:[%s266 + $0x90] sm:$0xff]
      %v521 = vld [vmem:[%s266 + $0x98] sm:$0xff]
      %v522 = vld [vmem:[%s266 + $0xa0] sm:$0xff]
      %v523 = vld [vmem:[%s266 + $0xa8] sm:$0xff]
      %v524 = vld [vmem:[%s266 + $0xb0] sm:$0xff]
      %v525 = vld [vmem:[%s266 + $0xb8] sm:$0xff]
      %v526 = vld [vmem:[%s266 + $0xc0] sm:$0xff]
      %v527 = vld [vmem:[%s266 + $0xc8] sm:$0xff]
      %v528 = vld [vmem:[%s266 + $0xd0] sm:$0xff]
      %v529 = vld [vmem:[%s266 + $0xd8] sm:$0xff]
      %v530 = vld [vmem:[%s266 + $0xe0] sm:$0xff]
      %v531 = vld [vmem:[%s266 + $0xe8] sm:$0xff]
      %v532 = vld [vmem:[%s266 + $0xf0] sm:$0xff]
      %v533 = vld [vmem:[%s266 + $0xf8] sm:$0xff]
      %s534 = scalar_lea.vmem [#allocation3], 24
      %535 = vst.msk [vmem:[%s534 + $0x1] sm:$0xff] %vm273, %v502
      %536 = vst.msk [vmem:[%s534 + $0x9] sm:$0xff] %vm273, %v503
      %537 = vst.msk [vmem:[%s534 + $0x19] sm:$0xff] %vm273, %v504
      %538 = vst.msk [vmem:[%s534 + $0x21] sm:$0xff] %vm273, %v505
      %539 = vst.msk [vmem:[%s534 + $0x31] sm:$0xff] %vm273, %v506
      %540 = vst.msk [vmem:[%s534 + $0x39] sm:$0xff] %vm273, %v507
      %541 = vst.msk [vmem:[%s534 + $0x49] sm:$0xff] %vm273, %v508
      %542 = vst.msk [vmem:[%s534 + $0x51] sm:$0xff] %vm273, %v509
      %543 = vst.msk [vmem:[%s534 + $0x61] sm:$0xff] %vm273, %v510
      %544 = vst.msk [vmem:[%s534 + $0x69] sm:$0xff] %vm273, %v511
      %545 = vst.msk [vmem:[%s534 + $0x79] sm:$0xff] %vm273, %v512
      %546 = vst.msk [vmem:[%s534 + $0x81] sm:$0xff] %vm273, %v513
      %547 = vst.msk [vmem:[%s534 + $0x91] sm:$0xff] %vm273, %v514
      %548 = vst.msk [vmem:[%s534 + $0x99] sm:$0xff] %vm273, %v515
      %549 = vst.msk [vmem:[%s534 + $0xa9] sm:$0xff] %vm273, %v516
      %550 = vst.msk [vmem:[%s534 + $0xb1] sm:$0xff] %vm273, %v517
      %551 = vst.msk [vmem:[%s534 + $0xc1] sm:$0xff] %vm273, %v518
      %552 = vst.msk [vmem:[%s534 + $0xc9] sm:$0xff] %vm273, %v519
      %553 = vst.msk [vmem:[%s534 + $0xd9] sm:$0xff] %vm273, %v520
      %554 = vst.msk [vmem:[%s534 + $0xe1] sm:$0xff] %vm273, %v521
      %555 = vst.msk [vmem:[%s534 + $0xf1] sm:$0xff] %vm273, %v522
      %556 = vst.msk [vmem:[%s534 + $0xf9] sm:$0xff] %vm273, %v523
      %557 = vst.msk [vmem:[%s534 + $0x109] sm:$0xff] %vm273, %v524
      %558 = vst.msk [vmem:[%s534 + $0x111] sm:$0xff] %vm273, %v525
      %559 = vst.msk [vmem:[%s534 + $0x121] sm:$0xff] %vm273, %v526
      %560 = vst.msk [vmem:[%s534 + $0x129] sm:$0xff] %vm273, %v527
      %561 = vst.msk [vmem:[%s534 + $0x139] sm:$0xff] %vm273, %v528
      %562 = vst.msk [vmem:[%s534 + $0x141] sm:$0xff] %vm273, %v529
      %563 = vst.msk [vmem:[%s534 + $0x151] sm:$0xff] %vm273, %v530
      %564 = vst.msk [vmem:[%s534 + $0x159] sm:$0xff] %vm273, %v531
      %565 = vst.msk [vmem:[%s534 + $0x169] sm:$0xff] %vm273, %v532
      %566 = vst.msk [vmem:[%s534 + $0x171] sm:$0xff] %vm273, %v533
      %v567 = vld [vmem:[#allocation2] sm:$0xff]
      %v568 = vld [vmem:[#allocation2 + $0x8] sm:$0xff]
      %v569 = vld [vmem:[#allocation2 + $0x18] sm:$0xff]
      %v570 = vld [vmem:[#allocation2 + $0x20] sm:$0xff]
      %v571 = vld [vmem:[#allocation2 + $0x30] sm:$0xff]
      %v572 = vld [vmem:[#allocation2 + $0x38] sm:$0xff]
      %v573 = vld [vmem:[#allocation2 + $0x48] sm:$0xff]
      %v574 = vld [vmem:[#allocation2 + $0x50] sm:$0xff]
      %v575 = vld [vmem:[#allocation2 + $0x60] sm:$0xff]
      %v576 = vld [vmem:[#allocation2 + $0x68] sm:$0xff]
      %v577 = vld [vmem:[#allocation2 + $0x78] sm:$0xff]
      %v578 = vld [vmem:[#allocation2 + $0x80] sm:$0xff]
      %v579 = vld [vmem:[#allocation2 + $0x90] sm:$0xff]
      %v580 = vld [vmem:[#allocation2 + $0x98] sm:$0xff]
      %v581 = vld [vmem:[#allocation2 + $0xa8] sm:$0xff]
      %v582 = vld [vmem:[#allocation2 + $0xb0] sm:$0xff]
      %v583 = vld [vmem:[#allocation2 + $0xc0] sm:$0xff]
      %v584 = vld [vmem:[#allocation2 + $0xc8] sm:$0xff]
      %v585 = vld [vmem:[#allocation2 + $0xd8] sm:$0xff]
      %v586 = vld [vmem:[#allocation2 + $0xe0] sm:$0xff]
      %v587 = vld [vmem:[#allocation2 + $0xf0] sm:$0xff]
      %v588 = vld [vmem:[#allocation2 + $0xf8] sm:$0xff]
      %v589 = vld [vmem:[#allocation2 + $0x108] sm:$0xff]
      %v590 = vld [vmem:[#allocation2 + $0x110] sm:$0xff]
      %v591 = vld [vmem:[#allocation2 + $0x120] sm:$0xff]
      %v592 = vld [vmem:[#allocation2 + $0x128] sm:$0xff]
      %v593 = vld [vmem:[#allocation2 + $0x138] sm:$0xff]
      %v594 = vld [vmem:[#allocation2 + $0x140] sm:$0xff]
      %v595 = vld [vmem:[#allocation2 + $0x150] sm:$0xff]
      %v596 = vld [vmem:[#allocation2 + $0x158] sm:$0xff]
      %v597 = vld [vmem:[#allocation2 + $0x168] sm:$0xff]
      %v598 = vld [vmem:[#allocation2 + $0x170] sm:$0xff]
      %v599 = vld [vmem:[#allocation2 + $0x1] sm:$0xff]
      %v600 = vld [vmem:[#allocation2 + $0x9] sm:$0xff]
      %v601 = vld [vmem:[#allocation2 + $0x19] sm:$0xff]
      %v602 = vld [vmem:[#allocation2 + $0x21] sm:$0xff]
      %v603 = vld [vmem:[#allocation2 + $0x31] sm:$0xff]
      %v604 = vld [vmem:[#allocation2 + $0x39] sm:$0xff]
      %v605 = vld [vmem:[#allocation2 + $0x49] sm:$0xff]
      %v606 = vld [vmem:[#allocation2 + $0x51] sm:$0xff]
      %v607 = vld [vmem:[#allocation2 + $0x61] sm:$0xff]
      %v608 = vld [vmem:[#allocation2 + $0x69] sm:$0xff]
      %v609 = vld [vmem:[#allocation2 + $0x79] sm:$0xff]
      %v610 = vld [vmem:[#allocation2 + $0x81] sm:$0xff]
      %v611 = vld [vmem:[#allocation2 + $0x91] sm:$0xff]
      %v612 = vld [vmem:[#allocation2 + $0x99] sm:$0xff]
      %v613 = vld [vmem:[#allocation2 + $0xa9] sm:$0xff]
      %v614 = vld [vmem:[#allocation2 + $0xb1] sm:$0xff]
      %v615 = vld [vmem:[#allocation2 + $0xc1] sm:$0xff]
      %v616 = vld [vmem:[#allocation2 + $0xc9] sm:$0xff]
      %v617 = vld [vmem:[#allocation2 + $0xd9] sm:$0xff]
      %v618 = vld [vmem:[#allocation2 + $0xe1] sm:$0xff]
      %v619 = vld [vmem:[#allocation2 + $0xf1] sm:$0xff]
      %v620 = vld [vmem:[#allocation2 + $0xf9] sm:$0xff]
      %v621 = vld [vmem:[#allocation2 + $0x109] sm:$0xff]
      %v622 = vld [vmem:[#allocation2 + $0x111] sm:$0xff]
      %v623 = vld [vmem:[#allocation2 + $0x121] sm:$0xff]
      %v624 = vld [vmem:[#allocation2 + $0x129] sm:$0xff]
      %v625 = vld [vmem:[#allocation2 + $0x139] sm:$0xff]
      %v626 = vld [vmem:[#allocation2 + $0x141] sm:$0xff]
      %v627 = vld [vmem:[#allocation2 + $0x151] sm:$0xff]
      %v628 = vld [vmem:[#allocation2 + $0x159] sm:$0xff]
      %v629 = vld [vmem:[#allocation2 + $0x169] sm:$0xff]
      %v630 = vld [vmem:[#allocation2 + $0x171] sm:$0xff]
      %v631 = vld [vmem:[#allocation2 + $0x2] sm:$0xff]
      %v632 = vld [vmem:[#allocation2 + $0xa] sm:$0xff]
      %v633 = vld [vmem:[#allocation2 + $0x1a] sm:$0xff]
      %v634 = vld [vmem:[#allocation2 + $0x22] sm:$0xff]
      %v635 = vld [vmem:[#allocation2 + $0x32] sm:$0xff]
      %v636 = vld [vmem:[#allocation2 + $0x3a] sm:$0xff]
      %v637 = vld [vmem:[#allocation2 + $0x4a] sm:$0xff]
      %v638 = vld [vmem:[#allocation2 + $0x52] sm:$0xff]
      %v639 = vld [vmem:[#allocation2 + $0x62] sm:$0xff]
      %v640 = vld [vmem:[#allocation2 + $0x6a] sm:$0xff]
      %v641 = vld [vmem:[#allocation2 + $0x7a] sm:$0xff]
      %v642 = vld [vmem:[#allocation2 + $0x82] sm:$0xff]
      %v643 = vld [vmem:[#allocation2 + $0x92] sm:$0xff]
      %v644 = vld [vmem:[#allocation2 + $0x9a] sm:$0xff]
      %v645 = vld [vmem:[#allocation2 + $0xaa] sm:$0xff]
      %v646 = vld [vmem:[#allocation2 + $0xb2] sm:$0xff]
      %v647 = vld [vmem:[#allocation2 + $0xc2] sm:$0xff]
      %v648 = vld [vmem:[#allocation2 + $0xca] sm:$0xff]
      %v649 = vld [vmem:[#allocation2 + $0xda] sm:$0xff]
      %v650 = vld [vmem:[#allocation2 + $0xe2] sm:$0xff]
      %v651 = vld [vmem:[#allocation2 + $0xf2] sm:$0xff]
      %v652 = vld [vmem:[#allocation2 + $0xfa] sm:$0xff]
      %v653 = vld [vmem:[#allocation2 + $0x10a] sm:$0xff]
      %v654 = vld [vmem:[#allocation2 + $0x112] sm:$0xff]
      %v655 = vld [vmem:[#allocation2 + $0x122] sm:$0xff]
      %v656 = vld [vmem:[#allocation2 + $0x12a] sm:$0xff]
      %v657 = vld [vmem:[#allocation2 + $0x13a] sm:$0xff]
      %v658 = vld [vmem:[#allocation2 + $0x142] sm:$0xff]
      %v659 = vld [vmem:[#allocation2 + $0x152] sm:$0xff]
      %v660 = vld [vmem:[#allocation2 + $0x15a] sm:$0xff]
      %v661 = vld [vmem:[#allocation2 + $0x16a] sm:$0xff]
      %v662 = vld [vmem:[#allocation2 + $0x172] sm:$0xff]
      %v663 = vld [vmem:[%s469] sm:$0xff]
      %v664 = vld [vmem:[%s469 + $0x8] sm:$0xff]
      %v665 = vld [vmem:[%s469 + $0x18] sm:$0xff]
      %v666 = vld [vmem:[%s469 + $0x20] sm:$0xff]
      %v667 = vld [vmem:[%s469 + $0x30] sm:$0xff]
      %v668 = vld [vmem:[%s469 + $0x38] sm:$0xff]
      %v669 = vld [vmem:[%s469 + $0x48] sm:$0xff]
      %v670 = vld [vmem:[%s469 + $0x50] sm:$0xff]
      %v671 = vld [vmem:[%s469 + $0x60] sm:$0xff]
      %v672 = vld [vmem:[%s469 + $0x68] sm:$0xff]
      %v673 = vld [vmem:[%s469 + $0x78] sm:$0xff]
      %v674 = vld [vmem:[%s469 + $0x80] sm:$0xff]
      %v675 = vld [vmem:[%s469 + $0x90] sm:$0xff]
      %v676 = vld [vmem:[%s469 + $0x98] sm:$0xff]
      %v677 = vld [vmem:[%s469 + $0xa8] sm:$0xff]
      %v678 = vld [vmem:[%s469 + $0xb0] sm:$0xff]
      %v679 = vld [vmem:[%s469 + $0xc0] sm:$0xff]
      %v680 = vld [vmem:[%s469 + $0xc8] sm:$0xff]
      %v681 = vld [vmem:[%s469 + $0xd8] sm:$0xff]
      %v682 = vld [vmem:[%s469 + $0xe0] sm:$0xff]
      %v683 = vld [vmem:[%s469 + $0xf0] sm:$0xff]
      %v684 = vld [vmem:[%s469 + $0xf8] sm:$0xff]
      %v685 = vld [vmem:[%s469 + $0x108] sm:$0xff]
      %v686 = vld [vmem:[%s469 + $0x110] sm:$0xff]
      %v687 = vld [vmem:[%s469 + $0x120] sm:$0xff]
      %v688 = vld [vmem:[%s469 + $0x128] sm:$0xff]
      %v689 = vld [vmem:[%s469 + $0x138] sm:$0xff]
      %v690 = vld [vmem:[%s469 + $0x140] sm:$0xff]
      %v691 = vld [vmem:[%s469 + $0x150] sm:$0xff]
      %v692 = vld [vmem:[%s469 + $0x158] sm:$0xff]
      %v693 = vld [vmem:[%s469 + $0x168] sm:$0xff]
      %v694 = vld [vmem:[%s469 + $0x170] sm:$0xff]
      %v695 = vld [vmem:[%s469 + $0x1] sm:$0xff]
      %v696 = vld [vmem:[%s469 + $0x9] sm:$0xff]
      %v697 = vld [vmem:[%s469 + $0x19] sm:$0xff]
      %v698 = vld [vmem:[%s469 + $0x21] sm:$0xff]
      %v699 = vld [vmem:[%s469 + $0x31] sm:$0xff]
      %v700 = vld [vmem:[%s469 + $0x39] sm:$0xff]
      %v701 = vld [vmem:[%s469 + $0x49] sm:$0xff]
      %v702 = vld [vmem:[%s469 + $0x51] sm:$0xff]
      %v703 = vld [vmem:[%s469 + $0x61] sm:$0xff]
      %v704 = vld [vmem:[%s469 + $0x69] sm:$0xff]
      %v705 = vld [vmem:[%s469 + $0x79] sm:$0xff]
      %v706 = vld [vmem:[%s469 + $0x81] sm:$0xff]
      %v707 = vld [vmem:[%s469 + $0x91] sm:$0xff]
      %v708 = vld [vmem:[%s469 + $0x99] sm:$0xff]
      %v709 = vld [vmem:[%s469 + $0xa9] sm:$0xff]
      %v710 = vld [vmem:[%s469 + $0xb1] sm:$0xff]
      %v711 = vld [vmem:[%s469 + $0xc1] sm:$0xff]
      %v712 = vld [vmem:[%s469 + $0xc9] sm:$0xff]
      %v713 = vld [vmem:[%s469 + $0xd9] sm:$0xff]
      %v714 = vld [vmem:[%s469 + $0xe1] sm:$0xff]
      %v715 = vld [vmem:[%s469 + $0xf1] sm:$0xff]
      %v716 = vld [vmem:[%s469 + $0xf9] sm:$0xff]
      %v717 = vld [vmem:[%s469 + $0x109] sm:$0xff]
      %v718 = vld [vmem:[%s469 + $0x111] sm:$0xff]
      %v719 = vld [vmem:[%s469 + $0x121] sm:$0xff]
      %v720 = vld [vmem:[%s469 + $0x129] sm:$0xff]
      %v721 = vld [vmem:[%s469 + $0x139] sm:$0xff]
      %v722 = vld [vmem:[%s469 + $0x141] sm:$0xff]
      %v723 = vld [vmem:[%s469 + $0x151] sm:$0xff]
      %v724 = vld [vmem:[%s469 + $0x159] sm:$0xff]
      %v725 = vld [vmem:[%s469 + $0x169] sm:$0xff]
      %v726 = vld [vmem:[%s469 + $0x171] sm:$0xff]
      %v727 = vld [vmem:[%s469 + $0x2] sm:$0xff]
      %v728 = vld [vmem:[%s469 + $0xa] sm:$0xff]
      %v729 = vld [vmem:[%s469 + $0x1a] sm:$0xff]
      %v730 = vld [vmem:[%s469 + $0x22] sm:$0xff]
      %v731 = vld [vmem:[%s469 + $0x32] sm:$0xff]
      %v732 = vld [vmem:[%s469 + $0x3a] sm:$0xff]
      %v733 = vld [vmem:[%s469 + $0x4a] sm:$0xff]
      %v734 = vld [vmem:[%s469 + $0x52] sm:$0xff]
      %v735 = vld [vmem:[%s469 + $0x62] sm:$0xff]
      %v736 = vld [vmem:[%s469 + $0x6a] sm:$0xff]
      %v737 = vld [vmem:[%s469 + $0x7a] sm:$0xff]
      %v738 = vld [vmem:[%s469 + $0x82] sm:$0xff]
      %v739 = vld [vmem:[%s469 + $0x92] sm:$0xff]
      %v740 = vld [vmem:[%s469 + $0x9a] sm:$0xff]
      %v741 = vld [vmem:[%s469 + $0xaa] sm:$0xff]
      %v742 = vld [vmem:[%s469 + $0xb2] sm:$0xff]
      %v743 = vld [vmem:[%s469 + $0xc2] sm:$0xff]
      %v744 = vld [vmem:[%s469 + $0xca] sm:$0xff]
      %v745 = vld [vmem:[%s469 + $0xda] sm:$0xff]
      %v746 = vld [vmem:[%s469 + $0xe2] sm:$0xff]
      %v747 = vld [vmem:[%s469 + $0xf2] sm:$0xff]
      %v748 = vld [vmem:[%s469 + $0xfa] sm:$0xff]
      %v749 = vld [vmem:[%s469 + $0x10a] sm:$0xff]
      %v750 = vld [vmem:[%s469 + $0x112] sm:$0xff]
      %v751 = vld [vmem:[%s469 + $0x122] sm:$0xff]
      %v752 = vld [vmem:[%s469 + $0x12a] sm:$0xff]
      %v753 = vld [vmem:[%s469 + $0x13a] sm:$0xff]
      %v754 = vld [vmem:[%s469 + $0x142] sm:$0xff]
      %v755 = vld [vmem:[%s469 + $0x152] sm:$0xff]
      %v756 = vld [vmem:[%s469 + $0x15a] sm:$0xff]
      %v757 = vld [vmem:[%s469 + $0x16a] sm:$0xff]
      %v758 = vld [vmem:[%s469 + $0x172] sm:$0xff]
      %s759 = scalar_lea.vmem [#allocation2], 48
      %v760 = vld [vmem:[%s759] sm:$0xff]
      %v761 = vld [vmem:[%s759 + $0x8] sm:$0xff]
      %v762 = vld [vmem:[%s759 + $0x18] sm:$0xff]
      %v763 = vld [vmem:[%s759 + $0x20] sm:$0xff]
      %v764 = vld [vmem:[%s759 + $0x30] sm:$0xff]
      %v765 = vld [vmem:[%s759 + $0x38] sm:$0xff]
      %v766 = vld [vmem:[%s759 + $0x48] sm:$0xff]
      %v767 = vld [vmem:[%s759 + $0x50] sm:$0xff]
      %v768 = vld [vmem:[%s759 + $0x60] sm:$0xff]
      %v769 = vld [vmem:[%s759 + $0x68] sm:$0xff]
      %v770 = vld [vmem:[%s759 + $0x78] sm:$0xff]
      %v771 = vld [vmem:[%s759 + $0x80] sm:$0xff]
      %v772 = vld [vmem:[%s759 + $0x90] sm:$0xff]
      %v773 = vld [vmem:[%s759 + $0x98] sm:$0xff]
      %v774 = vld [vmem:[%s759 + $0xa8] sm:$0xff]
      %v775 = vld [vmem:[%s759 + $0xb0] sm:$0xff]
      %v776 = vld [vmem:[%s759 + $0xc0] sm:$0xff]
      %v777 = vld [vmem:[%s759 + $0xc8] sm:$0xff]
      %v778 = vld [vmem:[%s759 + $0xd8] sm:$0xff]
      %v779 = vld [vmem:[%s759 + $0xe0] sm:$0xff]
      %v780 = vld [vmem:[%s759 + $0xf0] sm:$0xff]
      %v781 = vld [vmem:[%s759 + $0xf8] sm:$0xff]
      %v782 = vld [vmem:[%s759 + $0x108] sm:$0xff]
      %v783 = vld [vmem:[%s759 + $0x110] sm:$0xff]
      %v784 = vld [vmem:[%s759 + $0x120] sm:$0xff]
      %v785 = vld [vmem:[%s759 + $0x128] sm:$0xff]
      %v786 = vld [vmem:[%s759 + $0x138] sm:$0xff]
      %v787 = vld [vmem:[%s759 + $0x140] sm:$0xff]
      %v788 = vld [vmem:[%s759 + $0x150] sm:$0xff]
      %v789 = vld [vmem:[%s759 + $0x158] sm:$0xff]
      %v790 = vld [vmem:[%s759 + $0x168] sm:$0xff]
      %v791 = vld [vmem:[%s759 + $0x170] sm:$0xff]
      %v792 = vld [vmem:[%s759 + $0x1] sm:$0xff]
      %v793 = vld [vmem:[%s759 + $0x9] sm:$0xff]
      %v794 = vld [vmem:[%s759 + $0x19] sm:$0xff]
      %v795 = vld [vmem:[%s759 + $0x21] sm:$0xff]
      %v796 = vld [vmem:[%s759 + $0x31] sm:$0xff]
      %v797 = vld [vmem:[%s759 + $0x39] sm:$0xff]
      %v798 = vld [vmem:[%s759 + $0x49] sm:$0xff]
      %v799 = vld [vmem:[%s759 + $0x51] sm:$0xff]
      %v800 = vld [vmem:[%s759 + $0x61] sm:$0xff]
      %v801 = vld [vmem:[%s759 + $0x69] sm:$0xff]
      %v802 = vld [vmem:[%s759 + $0x79] sm:$0xff]
      %v803 = vld [vmem:[%s759 + $0x81] sm:$0xff]
      %v804 = vld [vmem:[%s759 + $0x91] sm:$0xff]
      %v805 = vld [vmem:[%s759 + $0x99] sm:$0xff]
      %v806 = vld [vmem:[%s759 + $0xa9] sm:$0xff]
      %v807 = vld [vmem:[%s759 + $0xb1] sm:$0xff]
      %v808 = vld [vmem:[%s759 + $0xc1] sm:$0xff]
      %v809 = vld [vmem:[%s759 + $0xc9] sm:$0xff]
      %v810 = vld [vmem:[%s759 + $0xd9] sm:$0xff]
      %v811 = vld [vmem:[%s759 + $0xe1] sm:$0xff]
      %v812 = vld [vmem:[%s759 + $0xf1] sm:$0xff]
      %v813 = vld [vmem:[%s759 + $0xf9] sm:$0xff]
      %v814 = vld [vmem:[%s759 + $0x109] sm:$0xff]
      %v815 = vld [vmem:[%s759 + $0x111] sm:$0xff]
      %v816 = vld [vmem:[%s759 + $0x121] sm:$0xff]
      %v817 = vld [vmem:[%s759 + $0x129] sm:$0xff]
      %v818 = vld [vmem:[%s759 + $0x139] sm:$0xff]
      %v819 = vld [vmem:[%s759 + $0x141] sm:$0xff]
      %v820 = vld [vmem:[%s759 + $0x151] sm:$0xff]
      %v821 = vld [vmem:[%s759 + $0x159] sm:$0xff]
      %v822 = vld [vmem:[%s759 + $0x169] sm:$0xff]
      %v823 = vld [vmem:[%s759 + $0x171] sm:$0xff]
      %v824 = vld [vmem:[%s759 + $0x2] sm:$0xff]
      %v825 = vld [vmem:[%s759 + $0xa] sm:$0xff]
      %v826 = vld [vmem:[%s759 + $0x1a] sm:$0xff]
      %v827 = vld [vmem:[%s759 + $0x22] sm:$0xff]
      %v828 = vld [vmem:[%s759 + $0x32] sm:$0xff]
      %v829 = vld [vmem:[%s759 + $0x3a] sm:$0xff]
      %v830 = vld [vmem:[%s759 + $0x4a] sm:$0xff]
      %v831 = vld [vmem:[%s759 + $0x52] sm:$0xff]
      %v832 = vld [vmem:[%s759 + $0x62] sm:$0xff]
      %v833 = vld [vmem:[%s759 + $0x6a] sm:$0xff]
      %v834 = vld [vmem:[%s759 + $0x7a] sm:$0xff]
      %v835 = vld [vmem:[%s759 + $0x82] sm:$0xff]
      %v836 = vld [vmem:[%s759 + $0x92] sm:$0xff]
      %v837 = vld [vmem:[%s759 + $0x9a] sm:$0xff]
      %v838 = vld [vmem:[%s759 + $0xaa] sm:$0xff]
      %v839 = vld [vmem:[%s759 + $0xb2] sm:$0xff]
      %v840 = vld [vmem:[%s759 + $0xc2] sm:$0xff]
      %v841 = vld [vmem:[%s759 + $0xca] sm:$0xff]
      %v842 = vld [vmem:[%s759 + $0xda] sm:$0xff]
      %v843 = vld [vmem:[%s759 + $0xe2] sm:$0xff]
      %v844 = vld [vmem:[%s759 + $0xf2] sm:$0xff]
      %v845 = vld [vmem:[%s759 + $0xfa] sm:$0xff]
      %v846 = vld [vmem:[%s759 + $0x10a] sm:$0xff]
      %v847 = vld [vmem:[%s759 + $0x112] sm:$0xff]
      %v848 = vld [vmem:[%s759 + $0x122] sm:$0xff]
      %v849 = vld [vmem:[%s759 + $0x12a] sm:$0xff]
      %v850 = vld [vmem:[%s759 + $0x13a] sm:$0xff]
      %v851 = vld [vmem:[%s759 + $0x142] sm:$0xff]
      %v852 = vld [vmem:[%s759 + $0x152] sm:$0xff]
      %v853 = vld [vmem:[%s759 + $0x15a] sm:$0xff]
      %v854 = vld [vmem:[%s759 + $0x16a] sm:$0xff]
      %v855 = vld [vmem:[%s759 + $0x172] sm:$0xff]
      %v856 = vld [vmem:[#allocation3] sm:$0xff]
      %v857 = vld [vmem:[#allocation3 + $0x8] sm:$0xff]
      %v858 = vld [vmem:[#allocation3 + $0x18] sm:$0xff]
      %v859 = vld [vmem:[#allocation3 + $0x20] sm:$0xff]
      %v860 = vld [vmem:[#allocation3 + $0x30] sm:$0xff]
      %v861 = vld [vmem:[#allocation3 + $0x38] sm:$0xff]
      %v862 = vld [vmem:[#allocation3 + $0x48] sm:$0xff]
      %v863 = vld [vmem:[#allocation3 + $0x50] sm:$0xff]
      %v864 = vld [vmem:[#allocation3 + $0x60] sm:$0xff]
      %v865 = vld [vmem:[#allocation3 + $0x68] sm:$0xff]
      %v866 = vld [vmem:[#allocation3 + $0x78] sm:$0xff]
      %v867 = vld [vmem:[#allocation3 + $0x80] sm:$0xff]
      %v868 = vld [vmem:[#allocation3 + $0x90] sm:$0xff]
      %v869 = vld [vmem:[#allocation3 + $0x98] sm:$0xff]
      %v870 = vld [vmem:[#allocation3 + $0xa8] sm:$0xff]
      %v871 = vld [vmem:[#allocation3 + $0xb0] sm:$0xff]
      %v872 = vld [vmem:[#allocation3 + $0xc0] sm:$0xff]
      %v873 = vld [vmem:[#allocation3 + $0xc8] sm:$0xff]
      %v874 = vld [vmem:[#allocation3 + $0xd8] sm:$0xff]
      %v875 = vld [vmem:[#allocation3 + $0xe0] sm:$0xff]
      %v876 = vld [vmem:[#allocation3 + $0xf0] sm:$0xff]
      %v877 = vld [vmem:[#allocation3 + $0xf8] sm:$0xff]
      %v878 = vld [vmem:[#allocation3 + $0x108] sm:$0xff]
      %v879 = vld [vmem:[#allocation3 + $0x110] sm:$0xff]
      %v880 = vld [vmem:[#allocation3 + $0x120] sm:$0xff]
      %v881 = vld [vmem:[#allocation3 + $0x128] sm:$0xff]
      %v882 = vld [vmem:[#allocation3 + $0x138] sm:$0xff]
      %v883 = vld [vmem:[#allocation3 + $0x140] sm:$0xff]
      %v884 = vld [vmem:[#allocation3 + $0x150] sm:$0xff]
      %v885 = vld [vmem:[#allocation3 + $0x158] sm:$0xff]
      %v886 = vld [vmem:[#allocation3 + $0x168] sm:$0xff]
      %v887 = vld [vmem:[#allocation3 + $0x170] sm:$0xff]
      %v888 = vld [vmem:[#allocation3 + $0x1] sm:$0xff]
      %v889 = vld [vmem:[#allocation3 + $0x9] sm:$0xff]
      %v890 = vld [vmem:[#allocation3 + $0x19] sm:$0xff]
      %v891 = vld [vmem:[#allocation3 + $0x21] sm:$0xff]
      %v892 = vld [vmem:[#allocation3 + $0x31] sm:$0xff]
      %v893 = vld [vmem:[#allocation3 + $0x39] sm:$0xff]
      %v894 = vld [vmem:[#allocation3 + $0x49] sm:$0xff]
      %v895 = vld [vmem:[#allocation3 + $0x51] sm:$0xff]
      %v896 = vld [vmem:[#allocation3 + $0x61] sm:$0xff]
      %v897 = vld [vmem:[#allocation3 + $0x69] sm:$0xff]
      %v898 = vld [vmem:[#allocation3 + $0x79] sm:$0xff]
      %v899 = vld [vmem:[#allocation3 + $0x81] sm:$0xff]
      %v900 = vld [vmem:[#allocation3 + $0x91] sm:$0xff]
      %v901 = vld [vmem:[#allocation3 + $0x99] sm:$0xff]
      %v902 = vld [vmem:[#allocation3 + $0xa9] sm:$0xff]
      %v903 = vld [vmem:[#allocation3 + $0xb1] sm:$0xff]
      %v904 = vld [vmem:[#allocation3 + $0xc1] sm:$0xff]
      %v905 = vld [vmem:[#allocation3 + $0xc9] sm:$0xff]
      %v906 = vld [vmem:[#allocation3 + $0xd9] sm:$0xff]
      %v907 = vld [vmem:[#allocation3 + $0xe1] sm:$0xff]
      %v908 = vld [vmem:[#allocation3 + $0xf1] sm:$0xff]
      %v909 = vld [vmem:[#allocation3 + $0xf9] sm:$0xff]
      %v910 = vld [vmem:[#allocation3 + $0x109] sm:$0xff]
      %v911 = vld [vmem:[#allocation3 + $0x111] sm:$0xff]
      %v912 = vld [vmem:[#allocation3 + $0x121] sm:$0xff]
      %v913 = vld [vmem:[#allocation3 + $0x129] sm:$0xff]
      %v914 = vld [vmem:[#allocation3 + $0x139] sm:$0xff]
      %v915 = vld [vmem:[#allocation3 + $0x141] sm:$0xff]
      %v916 = vld [vmem:[#allocation3 + $0x151] sm:$0xff]
      %v917 = vld [vmem:[#allocation3 + $0x159] sm:$0xff]
      %v918 = vld [vmem:[#allocation3 + $0x169] sm:$0xff]
      %v919 = vld [vmem:[#allocation3 + $0x171] sm:$0xff]
      %v920 = vld [vmem:[#allocation3 + $0x2] sm:$0xff]
      %v921 = vld [vmem:[#allocation3 + $0xa] sm:$0xff]
      %v922 = vld [vmem:[#allocation3 + $0x1a] sm:$0xff]
      %v923 = vld [vmem:[#allocation3 + $0x22] sm:$0xff]
      %v924 = vld [vmem:[#allocation3 + $0x32] sm:$0xff]
      %v925 = vld [vmem:[#allocation3 + $0x3a] sm:$0xff]
      %v926 = vld [vmem:[#allocation3 + $0x4a] sm:$0xff]
      %v927 = vld [vmem:[#allocation3 + $0x52] sm:$0xff]
      %v928 = vld [vmem:[#allocation3 + $0x62] sm:$0xff]
      %v929 = vld [vmem:[#allocation3 + $0x6a] sm:$0xff]
      %v930 = vld [vmem:[#allocation3 + $0x7a] sm:$0xff]
      %v931 = vld [vmem:[#allocation3 + $0x82] sm:$0xff]
      %v932 = vld [vmem:[#allocation3 + $0x92] sm:$0xff]
      %v933 = vld [vmem:[#allocation3 + $0x9a] sm:$0xff]
      %v934 = vld [vmem:[#allocation3 + $0xaa] sm:$0xff]
      %v935 = vld [vmem:[#allocation3 + $0xb2] sm:$0xff]
      %v936 = vld [vmem:[#allocation3 + $0xc2] sm:$0xff]
      %v937 = vld [vmem:[#allocation3 + $0xca] sm:$0xff]
      %v938 = vld [vmem:[#allocation3 + $0xda] sm:$0xff]
      %v939 = vld [vmem:[#allocation3 + $0xe2] sm:$0xff]
      %v940 = vld [vmem:[#allocation3 + $0xf2] sm:$0xff]
      %v941 = vld [vmem:[#allocation3 + $0xfa] sm:$0xff]
      %v942 = vld [vmem:[#allocation3 + $0x10a] sm:$0xff]
      %v943 = vld [vmem:[#allocation3 + $0x112] sm:$0xff]
      %v944 = vld [vmem:[#allocation3 + $0x122] sm:$0xff]
      %v945 = vld [vmem:[#allocation3 + $0x12a] sm:$0xff]
      %v946 = vld [vmem:[#allocation3 + $0x13a] sm:$0xff]
      %v947 = vld [vmem:[#allocation3 + $0x142] sm:$0xff]
      %v948 = vld [vmem:[#allocation3 + $0x152] sm:$0xff]
      %v949 = vld [vmem:[#allocation3 + $0x15a] sm:$0xff]
      %v950 = vld [vmem:[#allocation3 + $0x16a] sm:$0xff]
      %v951 = vld [vmem:[#allocation3 + $0x172] sm:$0xff]
      %v952 = vld [vmem:[%s534] sm:$0xff]
      %v953 = vld [vmem:[%s534 + $0x8] sm:$0xff]
      %v954 = vld [vmem:[%s534 + $0x18] sm:$0xff]
      %v955 = vld [vmem:[%s534 + $0x20] sm:$0xff]
      %v956 = vld [vmem:[%s534 + $0x30] sm:$0xff]
      %v957 = vld [vmem:[%s534 + $0x38] sm:$0xff]
      %v958 = vld [vmem:[%s534 + $0x48] sm:$0xff]
      %v959 = vld [vmem:[%s534 + $0x50] sm:$0xff]
      %v960 = vld [vmem:[%s534 + $0x60] sm:$0xff]
      %v961 = vld [vmem:[%s534 + $0x68] sm:$0xff]
      %v962 = vld [vmem:[%s534 + $0x78] sm:$0xff]
      %v963 = vld [vmem:[%s534 + $0x80] sm:$0xff]
      %v964 = vld [vmem:[%s534 + $0x90] sm:$0xff]
      %v965 = vld [vmem:[%s534 + $0x98] sm:$0xff]
      %v966 = vld [vmem:[%s534 + $0xa8] sm:$0xff]
      %v967 = vld [vmem:[%s534 + $0xb0] sm:$0xff]
      %v968 = vld [vmem:[%s534 + $0xc0] sm:$0xff]
      %v969 = vld [vmem:[%s534 + $0xc8] sm:$0xff]
      %v970 = vld [vmem:[%s534 + $0xd8] sm:$0xff]
      %v971 = vld [vmem:[%s534 + $0xe0] sm:$0xff]
      %v972 = vld [vmem:[%s534 + $0xf0] sm:$0xff]
      %v973 = vld [vmem:[%s534 + $0xf8] sm:$0xff]
      %v974 = vld [vmem:[%s534 + $0x108] sm:$0xff]
      %v975 = vld [vmem:[%s534 + $0x110] sm:$0xff]
      %v976 = vld [vmem:[%s534 + $0x120] sm:$0xff]
      %v977 = vld [vmem:[%s534 + $0x128] sm:$0xff]
      %v978 = vld [vmem:[%s534 + $0x138] sm:$0xff]
      %v979 = vld [vmem:[%s534 + $0x140] sm:$0xff]
      %v980 = vld [vmem:[%s534 + $0x150] sm:$0xff]
      %v981 = vld [vmem:[%s534 + $0x158] sm:$0xff]
      %v982 = vld [vmem:[%s534 + $0x168] sm:$0xff]
      %v983 = vld [vmem:[%s534 + $0x170] sm:$0xff]
      %v984 = vld [vmem:[%s534 + $0x1] sm:$0xff]
      %v985 = vld [vmem:[%s534 + $0x9] sm:$0xff]
      %v986 = vld [vmem:[%s534 + $0x19] sm:$0xff]
      %v987 = vld [vmem:[%s534 + $0x21] sm:$0xff]
      %v988 = vld [vmem:[%s534 + $0x31] sm:$0xff]
      %v989 = vld [vmem:[%s534 + $0x39] sm:$0xff]
      %v990 = vld [vmem:[%s534 + $0x49] sm:$0xff]
      %v991 = vld [vmem:[%s534 + $0x51] sm:$0xff]
      %v992 = vld [vmem:[%s534 + $0x61] sm:$0xff]
      %v993 = vld [vmem:[%s534 + $0x69] sm:$0xff]
      %v994 = vld [vmem:[%s534 + $0x79] sm:$0xff]
      %v995 = vld [vmem:[%s534 + $0x81] sm:$0xff]
      %v996 = vld [vmem:[%s534 + $0x91] sm:$0xff]
      %v997 = vld [vmem:[%s534 + $0x99] sm:$0xff]
      %v998 = vld [vmem:[%s534 + $0xa9] sm:$0xff]
      %v999 = vld [vmem:[%s534 + $0xb1] sm:$0xff]
      %v1000 = vld [vmem:[%s534 + $0xc1] sm:$0xff]
      %v1001 = vld [vmem:[%s534 + $0xc9] sm:$0xff]
      %v1002 = vld [vmem:[%s534 + $0xd9] sm:$0xff]
      %v1003 = vld [vmem:[%s534 + $0xe1] sm:$0xff]
      %v1004 = vld [vmem:[%s534 + $0xf1] sm:$0xff]
      %v1005 = vld [vmem:[%s534 + $0xf9] sm:$0xff]
      %v1006 = vld [vmem:[%s534 + $0x109] sm:$0xff]
      %v1007 = vld [vmem:[%s534 + $0x111] sm:$0xff]
      %v1008 = vld [vmem:[%s534 + $0x121] sm:$0xff]
      %v1009 = vld [vmem:[%s534 + $0x129] sm:$0xff]
      %v1010 = vld [vmem:[%s534 + $0x139] sm:$0xff]
      %v1011 = vld [vmem:[%s534 + $0x141] sm:$0xff]
      %v1012 = vld [vmem:[%s534 + $0x151] sm:$0xff]
      %v1013 = vld [vmem:[%s534 + $0x159] sm:$0xff]
      %v1014 = vld [vmem:[%s534 + $0x169] sm:$0xff]
      %v1015 = vld [vmem:[%s534 + $0x171] sm:$0xff]
      %v1016 = vld [vmem:[%s534 + $0x2] sm:$0xff]
      %v1017 = vld [vmem:[%s534 + $0xa] sm:$0xff]
      %v1018 = vld [vmem:[%s534 + $0x1a] sm:$0xff]
      %v1019 = vld [vmem:[%s534 + $0x22] sm:$0xff]
      %v1020 = vld [vmem:[%s534 + $0x32] sm:$0xff]
      %v1021 = vld [vmem:[%s534 + $0x3a] sm:$0xff]
      %v1022 = vld [vmem:[%s534 + $0x4a] sm:$0xff]
      %v1023 = vld [vmem:[%s534 + $0x52] sm:$0xff]
      %v1024 = vld [vmem:[%s534 + $0x62] sm:$0xff]
      %v1025 = vld [vmem:[%s534 + $0x6a] sm:$0xff]
      %v1026 = vld [vmem:[%s534 + $0x7a] sm:$0xff]
      %v1027 = vld [vmem:[%s534 + $0x82] sm:$0xff]
      %v1028 = vld [vmem:[%s534 + $0x92] sm:$0xff]
      %v1029 = vld [vmem:[%s534 + $0x9a] sm:$0xff]
      %v1030 = vld [vmem:[%s534 + $0xaa] sm:$0xff]
      %v1031 = vld [vmem:[%s534 + $0xb2] sm:$0xff]
      %v1032 = vld [vmem:[%s534 + $0xc2] sm:$0xff]
      %v1033 = vld [vmem:[%s534 + $0xca] sm:$0xff]
      %v1034 = vld [vmem:[%s534 + $0xda] sm:$0xff]
      %v1035 = vld [vmem:[%s534 + $0xe2] sm:$0xff]
      %v1036 = vld [vmem:[%s534 + $0xf2] sm:$0xff]
      %v1037 = vld [vmem:[%s534 + $0xfa] sm:$0xff]
      %v1038 = vld [vmem:[%s534 + $0x10a] sm:$0xff]
      %v1039 = vld [vmem:[%s534 + $0x112] sm:$0xff]
      %v1040 = vld [vmem:[%s534 + $0x122] sm:$0xff]
      %v1041 = vld [vmem:[%s534 + $0x12a] sm:$0xff]
      %v1042 = vld [vmem:[%s534 + $0x13a] sm:$0xff]
      %v1043 = vld [vmem:[%s534 + $0x142] sm:$0xff]
      %v1044 = vld [vmem:[%s534 + $0x152] sm:$0xff]
      %v1045 = vld [vmem:[%s534 + $0x15a] sm:$0xff]
      %v1046 = vld [vmem:[%s534 + $0x16a] sm:$0xff]
      %v1047 = vld [vmem:[%s534 + $0x172] sm:$0xff]
      %s1048 = scalar_lea.vmem [#allocation3], 48
      %v1049 = vld [vmem:[%s1048] sm:$0xff]
      %v1050 = vld [vmem:[%s1048 + $0x8] sm:$0xff]
      %v1051 = vld [vmem:[%s1048 + $0x18] sm:$0xff]
      %v1052 = vld [vmem:[%s1048 + $0x20] sm:$0xff]
      %v1053 = vld [vmem:[%s1048 + $0x30] sm:$0xff]
      %v1054 = vld [vmem:[%s1048 + $0x38] sm:$0xff]
      %v1055 = vld [vmem:[%s1048 + $0x48] sm:$0xff]
      %v1056 = vld [vmem:[%s1048 + $0x50] sm:$0xff]
      %v1057 = vld [vmem:[%s1048 + $0x60] sm:$0xff]
      %v1058 = vld [vmem:[%s1048 + $0x68] sm:$0xff]
      %v1059 = vld [vmem:[%s1048 + $0x78] sm:$0xff]
      %v1060 = vld [vmem:[%s1048 + $0x80] sm:$0xff]
      %v1061 = vld [vmem:[%s1048 + $0x90] sm:$0xff]
      %v1062 = vld [vmem:[%s1048 + $0x98] sm:$0xff]
      %v1063 = vld [vmem:[%s1048 + $0xa8] sm:$0xff]
      %v1064 = vld [vmem:[%s1048 + $0xb0] sm:$0xff]
      %v1065 = vld [vmem:[%s1048 + $0xc0] sm:$0xff]
      %v1066 = vld [vmem:[%s1048 + $0xc8] sm:$0xff]
      %v1067 = vld [vmem:[%s1048 + $0xd8] sm:$0xff]
      %v1068 = vld [vmem:[%s1048 + $0xe0] sm:$0xff]
      %v1069 = vld [vmem:[%s1048 + $0xf0] sm:$0xff]
      %v1070 = vld [vmem:[%s1048 + $0xf8] sm:$0xff]
      %v1071 = vld [vmem:[%s1048 + $0x108] sm:$0xff]
      %v1072 = vld [vmem:[%s1048 + $0x110] sm:$0xff]
      %v1073 = vld [vmem:[%s1048 + $0x120] sm:$0xff]
      %v1074 = vld [vmem:[%s1048 + $0x128] sm:$0xff]
      %v1075 = vld [vmem:[%s1048 + $0x138] sm:$0xff]
      %v1076 = vld [vmem:[%s1048 + $0x140] sm:$0xff]
      %v1077 = vld [vmem:[%s1048 + $0x150] sm:$0xff]
      %v1078 = vld [vmem:[%s1048 + $0x158] sm:$0xff]
      %v1079 = vld [vmem:[%s1048 + $0x168] sm:$0xff]
      %v1080 = vld [vmem:[%s1048 + $0x170] sm:$0xff]
      %v1081 = vld [vmem:[%s1048 + $0x1] sm:$0xff]
      %v1082 = vld [vmem:[%s1048 + $0x9] sm:$0xff]
      %v1083 = vld [vmem:[%s1048 + $0x19] sm:$0xff]
      %v1084 = vld [vmem:[%s1048 + $0x21] sm:$0xff]
      %v1085 = vld [vmem:[%s1048 + $0x31] sm:$0xff]
      %v1086 = vld [vmem:[%s1048 + $0x39] sm:$0xff]
      %v1087 = vld [vmem:[%s1048 + $0x49] sm:$0xff]
      %v1088 = vld [vmem:[%s1048 + $0x51] sm:$0xff]
      %v1089 = vld [vmem:[%s1048 + $0x61] sm:$0xff]
      %v1090 = vld [vmem:[%s1048 + $0x69] sm:$0xff]
      %v1091 = vld [vmem:[%s1048 + $0x79] sm:$0xff]
      %v1092 = vld [vmem:[%s1048 + $0x81] sm:$0xff]
      %v1093 = vld [vmem:[%s1048 + $0x91] sm:$0xff]
      %v1094 = vld [vmem:[%s1048 + $0x99] sm:$0xff]
      %v1095 = vld [vmem:[%s1048 + $0xa9] sm:$0xff]
      %v1096 = vld [vmem:[%s1048 + $0xb1] sm:$0xff]
      %v1097 = vld [vmem:[%s1048 + $0xc1] sm:$0xff]
      %v1098 = vld [vmem:[%s1048 + $0xc9] sm:$0xff]
      %v1099 = vld [vmem:[%s1048 + $0xd9] sm:$0xff]
      %v1100 = vld [vmem:[%s1048 + $0xe1] sm:$0xff]
      %v1101 = vld [vmem:[%s1048 + $0xf1] sm:$0xff]
      %v1102 = vld [vmem:[%s1048 + $0xf9] sm:$0xff]
      %v1103 = vld [vmem:[%s1048 + $0x109] sm:$0xff]
      %v1104 = vld [vmem:[%s1048 + $0x111] sm:$0xff]
      %v1105 = vld [vmem:[%s1048 + $0x121] sm:$0xff]
      %v1106 = vld [vmem:[%s1048 + $0x129] sm:$0xff]
      %v1107 = vld [vmem:[%s1048 + $0x139] sm:$0xff]
      %v1108 = vld [vmem:[%s1048 + $0x141] sm:$0xff]
      %v1109 = vld [vmem:[%s1048 + $0x151] sm:$0xff]
      %v1110 = vld [vmem:[%s1048 + $0x159] sm:$0xff]
      %v1111 = vld [vmem:[%s1048 + $0x169] sm:$0xff]
      %v1112 = vld [vmem:[%s1048 + $0x171] sm:$0xff]
      %v1113 = vld [vmem:[%s1048 + $0x2] sm:$0xff]
      %v1114 = vld [vmem:[%s1048 + $0xa] sm:$0xff]
      %v1115 = vld [vmem:[%s1048 + $0x1a] sm:$0xff]
      %v1116 = vld [vmem:[%s1048 + $0x22] sm:$0xff]
      %v1117 = vld [vmem:[%s1048 + $0x32] sm:$0xff]
      %v1118 = vld [vmem:[%s1048 + $0x3a] sm:$0xff]
      %v1119 = vld [vmem:[%s1048 + $0x4a] sm:$0xff]
      %v1120 = vld [vmem:[%s1048 + $0x52] sm:$0xff]
      %v1121 = vld [vmem:[%s1048 + $0x62] sm:$0xff]
      %v1122 = vld [vmem:[%s1048 + $0x6a] sm:$0xff]
      %v1123 = vld [vmem:[%s1048 + $0x7a] sm:$0xff]
      %v1124 = vld [vmem:[%s1048 + $0x82] sm:$0xff]
      %v1125 = vld [vmem:[%s1048 + $0x92] sm:$0xff]
      %v1126 = vld [vmem:[%s1048 + $0x9a] sm:$0xff]
      %v1127 = vld [vmem:[%s1048 + $0xaa] sm:$0xff]
      %v1128 = vld [vmem:[%s1048 + $0xb2] sm:$0xff]
      %v1129 = vld [vmem:[%s1048 + $0xc2] sm:$0xff]
      %v1130 = vld [vmem:[%s1048 + $0xca] sm:$0xff]
      %v1131 = vld [vmem:[%s1048 + $0xda] sm:$0xff]
      %v1132 = vld [vmem:[%s1048 + $0xe2] sm:$0xff]
      %v1133 = vld [vmem:[%s1048 + $0xf2] sm:$0xff]
      %v1134 = vld [vmem:[%s1048 + $0xfa] sm:$0xff]
      %v1135 = vld [vmem:[%s1048 + $0x10a] sm:$0xff]
      %v1136 = vld [vmem:[%s1048 + $0x112] sm:$0xff]
      %v1137 = vld [vmem:[%s1048 + $0x122] sm:$0xff]
      %v1138 = vld [vmem:[%s1048 + $0x12a] sm:$0xff]
      %v1139 = vld [vmem:[%s1048 + $0x13a] sm:$0xff]
      %v1140 = vld [vmem:[%s1048 + $0x142] sm:$0xff]
      %v1141 = vld [vmem:[%s1048 + $0x152] sm:$0xff]
      %v1142 = vld [vmem:[%s1048 + $0x15a] sm:$0xff]
      %v1143 = vld [vmem:[%s1048 + $0x16a] sm:$0xff]
      %v1144 = vld [vmem:[%s1048 + $0x172] sm:$0xff]
      %1177 = vrot.lane.b32.xlu0 %v599, 4
      %v1178 = vpop.permute.xlu0 %1177
      %1179 = vrot.lane.b32.xlu0 %v600, 4
      %v1180 = vpop.permute.xlu0 %1179
      %1181 = vrot.lane.b32.xlu0 %v601, 4
      %v1182 = vpop.permute.xlu0 %1181
      %1183 = vrot.lane.b32.xlu0 %v602, 4
      %v1184 = vpop.permute.xlu0 %1183
      %1185 = vrot.lane.b32.xlu0 %v603, 4
      %v1186 = vpop.permute.xlu0 %1185
      %1187 = vrot.lane.b32.xlu0 %v604, 4
      %v1188 = vpop.permute.xlu0 %1187
      %1189 = vrot.lane.b32.xlu0 %v605, 4
      %v1190 = vpop.permute.xlu0 %1189
      %1191 = vrot.lane.b32.xlu0 %v606, 4
      %v1192 = vpop.permute.xlu0 %1191
      %1193 = vrot.lane.b32.xlu0 %v607, 4
      %v1194 = vpop.permute.xlu0 %1193
      %1195 = vrot.lane.b32.xlu0 %v608, 4
      %v1196 = vpop.permute.xlu0 %1195
      %1197 = vrot.lane.b32.xlu0 %v609, 4
      %v1198 = vpop.permute.xlu0 %1197
      %1199 = vrot.lane.b32.xlu0 %v610, 4
      %v1200 = vpop.permute.xlu0 %1199
      %1201 = vrot.lane.b32.xlu0 %v611, 4
      %v1202 = vpop.permute.xlu0 %1201
      %1203 = vrot.lane.b32.xlu0 %v612, 4
      %v1204 = vpop.permute.xlu0 %1203
      %1205 = vrot.lane.b32.xlu0 %v613, 4
      %v1206 = vpop.permute.xlu0 %1205
      %1207 = vrot.lane.b32.xlu0 %v614, 4
      %v1208 = vpop.permute.xlu0 %1207
      %1209 = vrot.lane.b32.xlu0 %v615, 4
      %v1210 = vpop.permute.xlu0 %1209
      %1211 = vrot.lane.b32.xlu0 %v616, 4
      %v1212 = vpop.permute.xlu0 %1211
      %1213 = vrot.lane.b32.xlu0 %v617, 4
      %v1214 = vpop.permute.xlu0 %1213
      %1215 = vrot.lane.b32.xlu0 %v618, 4
      %v1216 = vpop.permute.xlu0 %1215
      %1217 = vrot.lane.b32.xlu0 %v619, 4
      %v1218 = vpop.permute.xlu0 %1217
      %1219 = vrot.lane.b32.xlu0 %v620, 4
      %v1220 = vpop.permute.xlu0 %1219
      %1221 = vrot.lane.b32.xlu0 %v621, 4
      %v1222 = vpop.permute.xlu0 %1221
      %1223 = vrot.lane.b32.xlu0 %v622, 4
      %v1224 = vpop.permute.xlu0 %1223
      %1225 = vrot.lane.b32.xlu0 %v623, 4
      %v1226 = vpop.permute.xlu0 %1225
      %1227 = vrot.lane.b32.xlu0 %v624, 4
      %v1228 = vpop.permute.xlu0 %1227
      %1229 = vrot.lane.b32.xlu0 %v625, 4
      %v1230 = vpop.permute.xlu0 %1229
      %1231 = vrot.lane.b32.xlu0 %v626, 4
      %v1232 = vpop.permute.xlu0 %1231
      %1233 = vrot.lane.b32.xlu0 %v627, 4
      %v1234 = vpop.permute.xlu0 %1233
      %1235 = vrot.lane.b32.xlu0 %v628, 4
      %v1236 = vpop.permute.xlu0 %1235
      %1237 = vrot.lane.b32.xlu0 %v629, 4
      %v1238 = vpop.permute.xlu0 %1237
      %1239 = vrot.lane.b32.xlu0 %v630, 4
      %v1240 = vpop.permute.xlu0 %1239
      %1305 = vrot.lane.b32.xlu0 %v631, 8
      %v1306 = vpop.permute.xlu0 %1305
      %1307 = vrot.lane.b32.xlu0 %v632, 8
      %v1308 = vpop.permute.xlu0 %1307
      %1309 = vrot.lane.b32.xlu0 %v633, 8
      %v1310 = vpop.permute.xlu0 %1309
      %1311 = vrot.lane.b32.xlu0 %v634, 8
      %v1312 = vpop.permute.xlu0 %1311
      %1313 = vrot.lane.b32.xlu0 %v635, 8
      %v1314 = vpop.permute.xlu0 %1313
      %1315 = vrot.lane.b32.xlu0 %v636, 8
      %v1316 = vpop.permute.xlu0 %1315
      %1317 = vrot.lane.b32.xlu0 %v637, 8
      %v1318 = vpop.permute.xlu0 %1317
      %1319 = vrot.lane.b32.xlu0 %v638, 8
      %v1320 = vpop.permute.xlu0 %1319
      %1321 = vrot.lane.b32.xlu0 %v639, 8
      %v1322 = vpop.permute.xlu0 %1321
      %1323 = vrot.lane.b32.xlu0 %v640, 8
      %v1324 = vpop.permute.xlu0 %1323
      %1325 = vrot.lane.b32.xlu0 %v641, 8
      %v1326 = vpop.permute.xlu0 %1325
      %1327 = vrot.lane.b32.xlu0 %v642, 8
      %v1328 = vpop.permute.xlu0 %1327
      %1329 = vrot.lane.b32.xlu0 %v643, 8
      %v1330 = vpop.permute.xlu0 %1329
      %1331 = vrot.lane.b32.xlu0 %v644, 8
      %v1332 = vpop.permute.xlu0 %1331
      %1333 = vrot.lane.b32.xlu0 %v645, 8
      %v1334 = vpop.permute.xlu0 %1333
      %1335 = vrot.lane.b32.xlu0 %v646, 8
      %v1336 = vpop.permute.xlu0 %1335
      %1337 = vrot.lane.b32.xlu0 %v647, 8
      %v1338 = vpop.permute.xlu0 %1337
      %1339 = vrot.lane.b32.xlu0 %v648, 8
      %v1340 = vpop.permute.xlu0 %1339
      %1341 = vrot.lane.b32.xlu0 %v649, 8
      %v1342 = vpop.permute.xlu0 %1341
      %1343 = vrot.lane.b32.xlu0 %v650, 8
      %v1344 = vpop.permute.xlu0 %1343
      %1345 = vrot.lane.b32.xlu0 %v651, 8
      %v1346 = vpop.permute.xlu0 %1345
      %1347 = vrot.lane.b32.xlu0 %v652, 8
      %v1348 = vpop.permute.xlu0 %1347
      %1349 = vrot.lane.b32.xlu0 %v653, 8
      %v1350 = vpop.permute.xlu0 %1349
      %1351 = vrot.lane.b32.xlu0 %v654, 8
      %v1352 = vpop.permute.xlu0 %1351
      %1353 = vrot.lane.b32.xlu0 %v655, 8
      %v1354 = vpop.permute.xlu0 %1353
      %1355 = vrot.lane.b32.xlu0 %v656, 8
      %v1356 = vpop.permute.xlu0 %1355
      %1357 = vrot.lane.b32.xlu0 %v657, 8
      %v1358 = vpop.permute.xlu0 %1357
      %1359 = vrot.lane.b32.xlu0 %v658, 8
      %v1360 = vpop.permute.xlu0 %1359
      %1361 = vrot.lane.b32.xlu0 %v659, 8
      %v1362 = vpop.permute.xlu0 %1361
      %1363 = vrot.lane.b32.xlu0 %v660, 8
      %v1364 = vpop.permute.xlu0 %1363
      %1365 = vrot.lane.b32.xlu0 %v661, 8
      %v1366 = vpop.permute.xlu0 %1365
      %1367 = vrot.lane.b32.xlu0 %v662, 8
      %v1368 = vpop.permute.xlu0 %1367
      %1433 = vrot.lane.b32.xlu0 %v663, 12
      %v1434 = vpop.permute.xlu0 %1433
      %1435 = vrot.lane.b32.xlu0 %v664, 12
      %v1436 = vpop.permute.xlu0 %1435
      %1437 = vrot.lane.b32.xlu0 %v665, 12
      %v1438 = vpop.permute.xlu0 %1437
      %1439 = vrot.lane.b32.xlu0 %v666, 12
      %v1440 = vpop.permute.xlu0 %1439
      %1441 = vrot.lane.b32.xlu0 %v667, 12
      %v1442 = vpop.permute.xlu0 %1441
      %1443 = vrot.lane.b32.xlu0 %v668, 12
      %v1444 = vpop.permute.xlu0 %1443
      %1445 = vrot.lane.b32.xlu0 %v669, 12
      %v1446 = vpop.permute.xlu0 %1445
      %1447 = vrot.lane.b32.xlu0 %v670, 12
      %v1448 = vpop.permute.xlu0 %1447
      %1449 = vrot.lane.b32.xlu0 %v671, 12
      %v1450 = vpop.permute.xlu0 %1449
      %1451 = vrot.lane.b32.xlu0 %v672, 12
      %v1452 = vpop.permute.xlu0 %1451
      %1453 = vrot.lane.b32.xlu0 %v673, 12
      %v1454 = vpop.permute.xlu0 %1453
      %1455 = vrot.lane.b32.xlu0 %v674, 12
      %v1456 = vpop.permute.xlu0 %1455
      %1457 = vrot.lane.b32.xlu0 %v675, 12
      %v1458 = vpop.permute.xlu0 %1457
      %1459 = vrot.lane.b32.xlu0 %v676, 12
      %v1460 = vpop.permute.xlu0 %1459
      %1461 = vrot.lane.b32.xlu0 %v677, 12
      %v1462 = vpop.permute.xlu0 %1461
      %1463 = vrot.lane.b32.xlu0 %v678, 12
      %v1464 = vpop.permute.xlu0 %1463
      %1465 = vrot.lane.b32.xlu0 %v679, 12
      %v1466 = vpop.permute.xlu0 %1465
      %1467 = vrot.lane.b32.xlu0 %v680, 12
      %v1468 = vpop.permute.xlu0 %1467
      %1469 = vrot.lane.b32.xlu0 %v681, 12
      %v1470 = vpop.permute.xlu0 %1469
      %1471 = vrot.lane.b32.xlu0 %v682, 12
      %v1472 = vpop.permute.xlu0 %1471
      %1473 = vrot.lane.b32.xlu0 %v683, 12
      %v1474 = vpop.permute.xlu0 %1473
      %1475 = vrot.lane.b32.xlu0 %v684, 12
      %v1476 = vpop.permute.xlu0 %1475
      %1477 = vrot.lane.b32.xlu0 %v685, 12
      %v1478 = vpop.permute.xlu0 %1477
      %1479 = vrot.lane.b32.xlu0 %v686, 12
      %v1480 = vpop.permute.xlu0 %1479
      %1481 = vrot.lane.b32.xlu0 %v687, 12
      %v1482 = vpop.permute.xlu0 %1481
      %1483 = vrot.lane.b32.xlu0 %v688, 12
      %v1484 = vpop.permute.xlu0 %1483
      %1485 = vrot.lane.b32.xlu0 %v689, 12
      %v1486 = vpop.permute.xlu0 %1485
      %1487 = vrot.lane.b32.xlu0 %v690, 12
      %v1488 = vpop.permute.xlu0 %1487
      %1489 = vrot.lane.b32.xlu0 %v691, 12
      %v1490 = vpop.permute.xlu0 %1489
      %1491 = vrot.lane.b32.xlu0 %v692, 12
      %v1492 = vpop.permute.xlu0 %1491
      %1493 = vrot.lane.b32.xlu0 %v693, 12
      %v1494 = vpop.permute.xlu0 %1493
      %1495 = vrot.lane.b32.xlu0 %v694, 12
      %v1496 = vpop.permute.xlu0 %1495
      %1561 = vrot.lane.b32.xlu0 %v695, 16
      %v1562 = vpop.permute.xlu0 %1561
      %1563 = vrot.lane.b32.xlu0 %v696, 16
      %v1564 = vpop.permute.xlu0 %1563
      %1565 = vrot.lane.b32.xlu0 %v697, 16
      %v1566 = vpop.permute.xlu0 %1565
      %1567 = vrot.lane.b32.xlu0 %v698, 16
      %v1568 = vpop.permute.xlu0 %1567
      %1569 = vrot.lane.b32.xlu0 %v699, 16
      %v1570 = vpop.permute.xlu0 %1569
      %1571 = vrot.lane.b32.xlu0 %v700, 16
      %v1572 = vpop.permute.xlu0 %1571
      %1573 = vrot.lane.b32.xlu0 %v701, 16
      %v1574 = vpop.permute.xlu0 %1573
      %1575 = vrot.lane.b32.xlu0 %v702, 16
      %v1576 = vpop.permute.xlu0 %1575
      %1577 = vrot.lane.b32.xlu0 %v703, 16
      %v1578 = vpop.permute.xlu0 %1577
      %1579 = vrot.lane.b32.xlu0 %v704, 16
      %v1580 = vpop.permute.xlu0 %1579
      %1581 = vrot.lane.b32.xlu0 %v705, 16
      %v1582 = vpop.permute.xlu0 %1581
      %1583 = vrot.lane.b32.xlu0 %v706, 16
      %v1584 = vpop.permute.xlu0 %1583
      %1585 = vrot.lane.b32.xlu0 %v707, 16
      %v1586 = vpop.permute.xlu0 %1585
      %1587 = vrot.lane.b32.xlu0 %v708, 16
      %v1588 = vpop.permute.xlu0 %1587
      %1589 = vrot.lane.b32.xlu0 %v709, 16
      %v1590 = vpop.permute.xlu0 %1589
      %1591 = vrot.lane.b32.xlu0 %v710, 16
      %v1592 = vpop.permute.xlu0 %1591
      %1593 = vrot.lane.b32.xlu0 %v711, 16
      %v1594 = vpop.permute.xlu0 %1593
      %1595 = vrot.lane.b32.xlu0 %v712, 16
      %v1596 = vpop.permute.xlu0 %1595
      %1597 = vrot.lane.b32.xlu0 %v713, 16
      %v1598 = vpop.permute.xlu0 %1597
      %1599 = vrot.lane.b32.xlu0 %v714, 16
      %v1600 = vpop.permute.xlu0 %1599
      %1601 = vrot.lane.b32.xlu0 %v715, 16
      %v1602 = vpop.permute.xlu0 %1601
      %1603 = vrot.lane.b32.xlu0 %v716, 16
      %v1604 = vpop.permute.xlu0 %1603
      %1605 = vrot.lane.b32.xlu0 %v717, 16
      %v1606 = vpop.permute.xlu0 %1605
      %1607 = vrot.lane.b32.xlu0 %v718, 16
      %v1608 = vpop.permute.xlu0 %1607
      %1609 = vrot.lane.b32.xlu0 %v719, 16
      %v1610 = vpop.permute.xlu0 %1609
      %1611 = vrot.lane.b32.xlu0 %v720, 16
      %v1612 = vpop.permute.xlu0 %1611
      %1613 = vrot.lane.b32.xlu0 %v721, 16
      %v1614 = vpop.permute.xlu0 %1613
      %1615 = vrot.lane.b32.xlu0 %v722, 16
      %v1616 = vpop.permute.xlu0 %1615
      %1617 = vrot.lane.b32.xlu0 %v723, 16
      %v1618 = vpop.permute.xlu0 %1617
      %1619 = vrot.lane.b32.xlu0 %v724, 16
      %v1620 = vpop.permute.xlu0 %1619
      %1621 = vrot.lane.b32.xlu0 %v725, 16
      %v1622 = vpop.permute.xlu0 %1621
      %1623 = vrot.lane.b32.xlu0 %v726, 16
      %v1624 = vpop.permute.xlu0 %1623
      %1689 = vrot.lane.b32.xlu0 %v727, 20
      %v1690 = vpop.permute.xlu0 %1689
      %1691 = vrot.lane.b32.xlu0 %v728, 20
      %v1692 = vpop.permute.xlu0 %1691
      %1693 = vrot.lane.b32.xlu0 %v729, 20
      %v1694 = vpop.permute.xlu0 %1693
      %1695 = vrot.lane.b32.xlu0 %v730, 20
      %v1696 = vpop.permute.xlu0 %1695
      %1697 = vrot.lane.b32.xlu0 %v731, 20
      %v1698 = vpop.permute.xlu0 %1697
      %1699 = vrot.lane.b32.xlu0 %v732, 20
      %v1700 = vpop.permute.xlu0 %1699
      %1701 = vrot.lane.b32.xlu0 %v733, 20
      %v1702 = vpop.permute.xlu0 %1701
      %1703 = vrot.lane.b32.xlu0 %v734, 20
      %v1704 = vpop.permute.xlu0 %1703
      %1705 = vrot.lane.b32.xlu0 %v735, 20
      %v1706 = vpop.permute.xlu0 %1705
      %1707 = vrot.lane.b32.xlu0 %v736, 20
      %v1708 = vpop.permute.xlu0 %1707
      %1709 = vrot.lane.b32.xlu0 %v737, 20
      %v1710 = vpop.permute.xlu0 %1709
      %1711 = vrot.lane.b32.xlu0 %v738, 20
      %v1712 = vpop.permute.xlu0 %1711
      %1713 = vrot.lane.b32.xlu0 %v739, 20
      %v1714 = vpop.permute.xlu0 %1713
      %1715 = vrot.lane.b32.xlu0 %v740, 20
      %v1716 = vpop.permute.xlu0 %1715
      %1717 = vrot.lane.b32.xlu0 %v741, 20
      %v1718 = vpop.permute.xlu0 %1717
      %1719 = vrot.lane.b32.xlu0 %v742, 20
      %v1720 = vpop.permute.xlu0 %1719
      %1721 = vrot.lane.b32.xlu0 %v743, 20
      %v1722 = vpop.permute.xlu0 %1721
      %1723 = vrot.lane.b32.xlu0 %v744, 20
      %v1724 = vpop.permute.xlu0 %1723
      %1725 = vrot.lane.b32.xlu0 %v745, 20
      %v1726 = vpop.permute.xlu0 %1725
      %1727 = vrot.lane.b32.xlu0 %v746, 20
      %v1728 = vpop.permute.xlu0 %1727
      %1729 = vrot.lane.b32.xlu0 %v747, 20
      %v1730 = vpop.permute.xlu0 %1729
      %1731 = vrot.lane.b32.xlu0 %v748, 20
      %v1732 = vpop.permute.xlu0 %1731
      %1733 = vrot.lane.b32.xlu0 %v749, 20
      %v1734 = vpop.permute.xlu0 %1733
      %1735 = vrot.lane.b32.xlu0 %v750, 20
      %v1736 = vpop.permute.xlu0 %1735
      %1737 = vrot.lane.b32.xlu0 %v751, 20
      %v1738 = vpop.permute.xlu0 %1737
      %1739 = vrot.lane.b32.xlu0 %v752, 20
      %v1740 = vpop.permute.xlu0 %1739
      %1741 = vrot.lane.b32.xlu0 %v753, 20
      %v1742 = vpop.permute.xlu0 %1741
      %1743 = vrot.lane.b32.xlu0 %v754, 20
      %v1744 = vpop.permute.xlu0 %1743
      %1745 = vrot.lane.b32.xlu0 %v755, 20
      %v1746 = vpop.permute.xlu0 %1745
      %1747 = vrot.lane.b32.xlu0 %v756, 20
      %v1748 = vpop.permute.xlu0 %1747
      %1749 = vrot.lane.b32.xlu0 %v757, 20
      %v1750 = vpop.permute.xlu0 %1749
      %1751 = vrot.lane.b32.xlu0 %v758, 20
      %v1752 = vpop.permute.xlu0 %1751
      %1817 = vrot.lane.b32.xlu0 %v760, 24
      %v1818 = vpop.permute.xlu0 %1817
      %1819 = vrot.lane.b32.xlu0 %v761, 24
      %v1820 = vpop.permute.xlu0 %1819
      %1821 = vrot.lane.b32.xlu0 %v762, 24
      %v1822 = vpop.permute.xlu0 %1821
      %1823 = vrot.lane.b32.xlu0 %v763, 24
      %v1824 = vpop.permute.xlu0 %1823
      %1825 = vrot.lane.b32.xlu0 %v764, 24
      %v1826 = vpop.permute.xlu0 %1825
      %1827 = vrot.lane.b32.xlu0 %v765, 24
      %v1828 = vpop.permute.xlu0 %1827
      %1829 = vrot.lane.b32.xlu0 %v766, 24
      %v1830 = vpop.permute.xlu0 %1829
      %1831 = vrot.lane.b32.xlu0 %v767, 24
      %v1832 = vpop.permute.xlu0 %1831
      %1833 = vrot.lane.b32.xlu0 %v768, 24
      %v1834 = vpop.permute.xlu0 %1833
      %1835 = vrot.lane.b32.xlu0 %v769, 24
      %v1836 = vpop.permute.xlu0 %1835
      %1837 = vrot.lane.b32.xlu0 %v770, 24
      %v1838 = vpop.permute.xlu0 %1837
      %1839 = vrot.lane.b32.xlu0 %v771, 24
      %v1840 = vpop.permute.xlu0 %1839
      %1841 = vrot.lane.b32.xlu0 %v772, 24
      %v1842 = vpop.permute.xlu0 %1841
      %1843 = vrot.lane.b32.xlu0 %v773, 24
      %v1844 = vpop.permute.xlu0 %1843
      %1845 = vrot.lane.b32.xlu0 %v774, 24
      %v1846 = vpop.permute.xlu0 %1845
      %1847 = vrot.lane.b32.xlu0 %v775, 24
      %v1848 = vpop.permute.xlu0 %1847
      %1849 = vrot.lane.b32.xlu0 %v776, 24
      %v1850 = vpop.permute.xlu0 %1849
      %1851 = vrot.lane.b32.xlu0 %v777, 24
      %v1852 = vpop.permute.xlu0 %1851
      %1853 = vrot.lane.b32.xlu0 %v778, 24
      %v1854 = vpop.permute.xlu0 %1853
      %1855 = vrot.lane.b32.xlu0 %v779, 24
      %v1856 = vpop.permute.xlu0 %1855
      %1857 = vrot.lane.b32.xlu0 %v780, 24
      %v1858 = vpop.permute.xlu0 %1857
      %1859 = vrot.lane.b32.xlu0 %v781, 24
      %v1860 = vpop.permute.xlu0 %1859
      %1861 = vrot.lane.b32.xlu0 %v782, 24
      %v1862 = vpop.permute.xlu0 %1861
      %1863 = vrot.lane.b32.xlu0 %v783, 24
      %v1864 = vpop.permute.xlu0 %1863
      %1865 = vrot.lane.b32.xlu0 %v784, 24
      %v1866 = vpop.permute.xlu0 %1865
      %1867 = vrot.lane.b32.xlu0 %v785, 24
      %v1868 = vpop.permute.xlu0 %1867
      %1869 = vrot.lane.b32.xlu0 %v786, 24
      %v1870 = vpop.permute.xlu0 %1869
      %1871 = vrot.lane.b32.xlu0 %v787, 24
      %v1872 = vpop.permute.xlu0 %1871
      %1873 = vrot.lane.b32.xlu0 %v788, 24
      %v1874 = vpop.permute.xlu0 %1873
      %1875 = vrot.lane.b32.xlu0 %v789, 24
      %v1876 = vpop.permute.xlu0 %1875
      %1877 = vrot.lane.b32.xlu0 %v790, 24
      %v1878 = vpop.permute.xlu0 %1877
      %1879 = vrot.lane.b32.xlu0 %v791, 24
      %v1880 = vpop.permute.xlu0 %1879
      %1945 = vrot.lane.b32.xlu0 %v792, 28
      %v1946 = vpop.permute.xlu0 %1945
      %1947 = vrot.lane.b32.xlu0 %v793, 28
      %v1948 = vpop.permute.xlu0 %1947
      %1949 = vrot.lane.b32.xlu0 %v794, 28
      %v1950 = vpop.permute.xlu0 %1949
      %1951 = vrot.lane.b32.xlu0 %v795, 28
      %v1952 = vpop.permute.xlu0 %1951
      %1953 = vrot.lane.b32.xlu0 %v796, 28
      %v1954 = vpop.permute.xlu0 %1953
      %1955 = vrot.lane.b32.xlu0 %v797, 28
      %v1956 = vpop.permute.xlu0 %1955
      %1957 = vrot.lane.b32.xlu0 %v798, 28
      %v1958 = vpop.permute.xlu0 %1957
      %1959 = vrot.lane.b32.xlu0 %v799, 28
      %v1960 = vpop.permute.xlu0 %1959
      %1961 = vrot.lane.b32.xlu0 %v800, 28
      %v1962 = vpop.permute.xlu0 %1961
      %1963 = vrot.lane.b32.xlu0 %v801, 28
      %v1964 = vpop.permute.xlu0 %1963
      %1965 = vrot.lane.b32.xlu0 %v802, 28
      %v1966 = vpop.permute.xlu0 %1965
      %1967 = vrot.lane.b32.xlu0 %v803, 28
      %v1968 = vpop.permute.xlu0 %1967
      %1969 = vrot.lane.b32.xlu0 %v804, 28
      %v1970 = vpop.permute.xlu0 %1969
      %1971 = vrot.lane.b32.xlu0 %v805, 28
      %v1972 = vpop.permute.xlu0 %1971
      %1973 = vrot.lane.b32.xlu0 %v806, 28
      %v1974 = vpop.permute.xlu0 %1973
      %1975 = vrot.lane.b32.xlu0 %v807, 28
      %v1976 = vpop.permute.xlu0 %1975
      %1977 = vrot.lane.b32.xlu0 %v808, 28
      %v1978 = vpop.permute.xlu0 %1977
      %1979 = vrot.lane.b32.xlu0 %v809, 28
      %v1980 = vpop.permute.xlu0 %1979
      %1981 = vrot.lane.b32.xlu0 %v810, 28
      %v1982 = vpop.permute.xlu0 %1981
      %1983 = vrot.lane.b32.xlu0 %v811, 28
      %v1984 = vpop.permute.xlu0 %1983
      %1985 = vrot.lane.b32.xlu0 %v812, 28
      %v1986 = vpop.permute.xlu0 %1985
      %1987 = vrot.lane.b32.xlu0 %v813, 28
      %v1988 = vpop.permute.xlu0 %1987
      %1989 = vrot.lane.b32.xlu0 %v814, 28
      %v1990 = vpop.permute.xlu0 %1989
      %1991 = vrot.lane.b32.xlu0 %v815, 28
      %v1992 = vpop.permute.xlu0 %1991
      %1993 = vrot.lane.b32.xlu0 %v816, 28
      %v1994 = vpop.permute.xlu0 %1993
      %1995 = vrot.lane.b32.xlu0 %v817, 28
      %v1996 = vpop.permute.xlu0 %1995
      %1997 = vrot.lane.b32.xlu0 %v818, 28
      %v1998 = vpop.permute.xlu0 %1997
      %1999 = vrot.lane.b32.xlu0 %v819, 28
      %v2000 = vpop.permute.xlu0 %1999
      %2001 = vrot.lane.b32.xlu0 %v820, 28
      %v2002 = vpop.permute.xlu0 %2001
      %2003 = vrot.lane.b32.xlu0 %v821, 28
      %v2004 = vpop.permute.xlu0 %2003
      %2005 = vrot.lane.b32.xlu0 %v822, 28
      %v2006 = vpop.permute.xlu0 %2005
      %2007 = vrot.lane.b32.xlu0 %v823, 28
      %v2008 = vpop.permute.xlu0 %2007
      %2073 = vrot.lane.b32.xlu0 %v824, 32
      %v2074 = vpop.permute.xlu0 %2073
      %2075 = vrot.lane.b32.xlu0 %v825, 32
      %v2076 = vpop.permute.xlu0 %2075
      %2077 = vrot.lane.b32.xlu0 %v826, 32
      %v2078 = vpop.permute.xlu0 %2077
      %2079 = vrot.lane.b32.xlu0 %v827, 32
      %v2080 = vpop.permute.xlu0 %2079
      %2081 = vrot.lane.b32.xlu0 %v828, 32
      %v2082 = vpop.permute.xlu0 %2081
      %2083 = vrot.lane.b32.xlu0 %v829, 32
      %v2084 = vpop.permute.xlu0 %2083
      %2085 = vrot.lane.b32.xlu0 %v830, 32
      %v2086 = vpop.permute.xlu0 %2085
      %2087 = vrot.lane.b32.xlu0 %v831, 32
      %v2088 = vpop.permute.xlu0 %2087
      %2089 = vrot.lane.b32.xlu0 %v832, 32
      %v2090 = vpop.permute.xlu0 %2089
      %2091 = vrot.lane.b32.xlu0 %v833, 32
      %v2092 = vpop.permute.xlu0 %2091
      %2093 = vrot.lane.b32.xlu0 %v834, 32
      %v2094 = vpop.permute.xlu0 %2093
      %2095 = vrot.lane.b32.xlu0 %v835, 32
      %v2096 = vpop.permute.xlu0 %2095
      %2097 = vrot.lane.b32.xlu0 %v836, 32
      %v2098 = vpop.permute.xlu0 %2097
      %2099 = vrot.lane.b32.xlu0 %v837, 32
      %v2100 = vpop.permute.xlu0 %2099
      %2101 = vrot.lane.b32.xlu0 %v838, 32
      %v2102 = vpop.permute.xlu0 %2101
      %2103 = vrot.lane.b32.xlu0 %v839, 32
      %v2104 = vpop.permute.xlu0 %2103
      %2105 = vrot.lane.b32.xlu0 %v840, 32
      %v2106 = vpop.permute.xlu0 %2105
      %2107 = vrot.lane.b32.xlu0 %v841, 32
      %v2108 = vpop.permute.xlu0 %2107
      %2109 = vrot.lane.b32.xlu0 %v842, 32
      %v2110 = vpop.permute.xlu0 %2109
      %2111 = vrot.lane.b32.xlu0 %v843, 32
      %v2112 = vpop.permute.xlu0 %2111
      %2113 = vrot.lane.b32.xlu0 %v844, 32
      %v2114 = vpop.permute.xlu0 %2113
      %2115 = vrot.lane.b32.xlu0 %v845, 32
      %v2116 = vpop.permute.xlu0 %2115
      %2117 = vrot.lane.b32.xlu0 %v846, 32
      %v2118 = vpop.permute.xlu0 %2117
      %2119 = vrot.lane.b32.xlu0 %v847, 32
      %v2120 = vpop.permute.xlu0 %2119
      %2121 = vrot.lane.b32.xlu0 %v848, 32
      %v2122 = vpop.permute.xlu0 %2121
      %2123 = vrot.lane.b32.xlu0 %v849, 32
      %v2124 = vpop.permute.xlu0 %2123
      %2125 = vrot.lane.b32.xlu0 %v850, 32
      %v2126 = vpop.permute.xlu0 %2125
      %2127 = vrot.lane.b32.xlu0 %v851, 32
      %v2128 = vpop.permute.xlu0 %2127
      %2129 = vrot.lane.b32.xlu0 %v852, 32
      %v2130 = vpop.permute.xlu0 %2129
      %2131 = vrot.lane.b32.xlu0 %v853, 32
      %v2132 = vpop.permute.xlu0 %2131
      %2133 = vrot.lane.b32.xlu0 %v854, 32
      %v2134 = vpop.permute.xlu0 %2133
      %2135 = vrot.lane.b32.xlu0 %v855, 32
      %v2136 = vpop.permute.xlu0 %2135
      %2201 = vrot.lane.b32.xlu0 %v856, 36
      %v2202 = vpop.permute.xlu0 %2201
      %2203 = vrot.lane.b32.xlu0 %v857, 36
      %v2204 = vpop.permute.xlu0 %2203
      %2205 = vrot.lane.b32.xlu0 %v858, 36
      %v2206 = vpop.permute.xlu0 %2205
      %2207 = vrot.lane.b32.xlu0 %v859, 36
      %v2208 = vpop.permute.xlu0 %2207
      %2209 = vrot.lane.b32.xlu0 %v860, 36
      %v2210 = vpop.permute.xlu0 %2209
      %2211 = vrot.lane.b32.xlu0 %v861, 36
      %v2212 = vpop.permute.xlu0 %2211
      %2213 = vrot.lane.b32.xlu0 %v862, 36
      %v2214 = vpop.permute.xlu0 %2213
      %2215 = vrot.lane.b32.xlu0 %v863, 36
      %v2216 = vpop.permute.xlu0 %2215
      %2217 = vrot.lane.b32.xlu0 %v864, 36
      %v2218 = vpop.permute.xlu0 %2217
      %2219 = vrot.lane.b32.xlu0 %v865, 36
      %v2220 = vpop.permute.xlu0 %2219
      %2221 = vrot.lane.b32.xlu0 %v866, 36
      %v2222 = vpop.permute.xlu0 %2221
      %2223 = vrot.lane.b32.xlu0 %v867, 36
      %v2224 = vpop.permute.xlu0 %2223
      %2225 = vrot.lane.b32.xlu0 %v868, 36
      %v2226 = vpop.permute.xlu0 %2225
      %2227 = vrot.lane.b32.xlu0 %v869, 36
      %v2228 = vpop.permute.xlu0 %2227
      %2229 = vrot.lane.b32.xlu0 %v870, 36
      %v2230 = vpop.permute.xlu0 %2229
      %2231 = vrot.lane.b32.xlu0 %v871, 36
      %v2232 = vpop.permute.xlu0 %2231
      %2233 = vrot.lane.b32.xlu0 %v872, 36
      %v2234 = vpop.permute.xlu0 %2233
      %2235 = vrot.lane.b32.xlu0 %v873, 36
      %v2236 = vpop.permute.xlu0 %2235
      %2237 = vrot.lane.b32.xlu0 %v874, 36
      %v2238 = vpop.permute.xlu0 %2237
      %2239 = vrot.lane.b32.xlu0 %v875, 36
      %v2240 = vpop.permute.xlu0 %2239
      %2241 = vrot.lane.b32.xlu0 %v876, 36
      %v2242 = vpop.permute.xlu0 %2241
      %2243 = vrot.lane.b32.xlu0 %v877, 36
      %v2244 = vpop.permute.xlu0 %2243
      %2245 = vrot.lane.b32.xlu0 %v878, 36
      %v2246 = vpop.permute.xlu0 %2245
      %2247 = vrot.lane.b32.xlu0 %v879, 36
      %v2248 = vpop.permute.xlu0 %2247
      %2249 = vrot.lane.b32.xlu0 %v880, 36
      %v2250 = vpop.permute.xlu0 %2249
      %2251 = vrot.lane.b32.xlu0 %v881, 36
      %v2252 = vpop.permute.xlu0 %2251
      %2253 = vrot.lane.b32.xlu0 %v882, 36
      %v2254 = vpop.permute.xlu0 %2253
      %2255 = vrot.lane.b32.xlu0 %v883, 36
      %v2256 = vpop.permute.xlu0 %2255
      %2257 = vrot.lane.b32.xlu0 %v884, 36
      %v2258 = vpop.permute.xlu0 %2257
      %2259 = vrot.lane.b32.xlu0 %v885, 36
      %v2260 = vpop.permute.xlu0 %2259
      %2261 = vrot.lane.b32.xlu0 %v886, 36
      %v2262 = vpop.permute.xlu0 %2261
      %2263 = vrot.lane.b32.xlu0 %v887, 36
      %v2264 = vpop.permute.xlu0 %2263
      %2329 = vrot.lane.b32.xlu0 %v888, 40
      %v2330 = vpop.permute.xlu0 %2329
      %2331 = vrot.lane.b32.xlu0 %v889, 40
      %v2332 = vpop.permute.xlu0 %2331
      %2333 = vrot.lane.b32.xlu0 %v890, 40
      %v2334 = vpop.permute.xlu0 %2333
      %2335 = vrot.lane.b32.xlu0 %v891, 40
      %v2336 = vpop.permute.xlu0 %2335
      %2337 = vrot.lane.b32.xlu0 %v892, 40
      %v2338 = vpop.permute.xlu0 %2337
      %2339 = vrot.lane.b32.xlu0 %v893, 40
      %v2340 = vpop.permute.xlu0 %2339
      %2341 = vrot.lane.b32.xlu0 %v894, 40
      %v2342 = vpop.permute.xlu0 %2341
      %2343 = vrot.lane.b32.xlu0 %v895, 40
      %v2344 = vpop.permute.xlu0 %2343
      %2345 = vrot.lane.b32.xlu0 %v896, 40
      %v2346 = vpop.permute.xlu0 %2345
      %2347 = vrot.lane.b32.xlu0 %v897, 40
      %v2348 = vpop.permute.xlu0 %2347
      %2349 = vrot.lane.b32.xlu0 %v898, 40
      %v2350 = vpop.permute.xlu0 %2349
      %2351 = vrot.lane.b32.xlu0 %v899, 40
      %v2352 = vpop.permute.xlu0 %2351
      %2353 = vrot.lane.b32.xlu0 %v900, 40
      %v2354 = vpop.permute.xlu0 %2353
      %2355 = vrot.lane.b32.xlu0 %v901, 40
      %v2356 = vpop.permute.xlu0 %2355
      %2357 = vrot.lane.b32.xlu0 %v902, 40
      %v2358 = vpop.permute.xlu0 %2357
      %2359 = vrot.lane.b32.xlu0 %v903, 40
      %v2360 = vpop.permute.xlu0 %2359
      %2361 = vrot.lane.b32.xlu0 %v904, 40
      %v2362 = vpop.permute.xlu0 %2361
      %2363 = vrot.lane.b32.xlu0 %v905, 40
      %v2364 = vpop.permute.xlu0 %2363
      %2365 = vrot.lane.b32.xlu0 %v906, 40
      %v2366 = vpop.permute.xlu0 %2365
      %2367 = vrot.lane.b32.xlu0 %v907, 40
      %v2368 = vpop.permute.xlu0 %2367
      %2369 = vrot.lane.b32.xlu0 %v908, 40
      %v2370 = vpop.permute.xlu0 %2369
      %2371 = vrot.lane.b32.xlu0 %v909, 40
      %v2372 = vpop.permute.xlu0 %2371
      %2373 = vrot.lane.b32.xlu0 %v910, 40
      %v2374 = vpop.permute.xlu0 %2373
      %2375 = vrot.lane.b32.xlu0 %v911, 40
      %v2376 = vpop.permute.xlu0 %2375
      %2377 = vrot.lane.b32.xlu0 %v912, 40
      %v2378 = vpop.permute.xlu0 %2377
      %2379 = vrot.lane.b32.xlu0 %v913, 40
      %v2380 = vpop.permute.xlu0 %2379
      %2381 = vrot.lane.b32.xlu0 %v914, 40
      %v2382 = vpop.permute.xlu0 %2381
      %2383 = vrot.lane.b32.xlu0 %v915, 40
      %v2384 = vpop.permute.xlu0 %2383
      %2385 = vrot.lane.b32.xlu0 %v916, 40
      %v2386 = vpop.permute.xlu0 %2385
      %2387 = vrot.lane.b32.xlu0 %v917, 40
      %v2388 = vpop.permute.xlu0 %2387
      %2389 = vrot.lane.b32.xlu0 %v918, 40
      %v2390 = vpop.permute.xlu0 %2389
      %2391 = vrot.lane.b32.xlu0 %v919, 40
      %v2392 = vpop.permute.xlu0 %2391
      %2457 = vrot.lane.b32.xlu0 %v920, 44
      %v2458 = vpop.permute.xlu0 %2457
      %2459 = vrot.lane.b32.xlu0 %v921, 44
      %v2460 = vpop.permute.xlu0 %2459
      %2461 = vrot.lane.b32.xlu0 %v922, 44
      %v2462 = vpop.permute.xlu0 %2461
      %2463 = vrot.lane.b32.xlu0 %v923, 44
      %v2464 = vpop.permute.xlu0 %2463
      %2465 = vrot.lane.b32.xlu0 %v924, 44
      %v2466 = vpop.permute.xlu0 %2465
      %2467 = vrot.lane.b32.xlu0 %v925, 44
      %v2468 = vpop.permute.xlu0 %2467
      %2469 = vrot.lane.b32.xlu0 %v926, 44
      %v2470 = vpop.permute.xlu0 %2469
      %2471 = vrot.lane.b32.xlu0 %v927, 44
      %v2472 = vpop.permute.xlu0 %2471
      %2473 = vrot.lane.b32.xlu0 %v928, 44
      %v2474 = vpop.permute.xlu0 %2473
      %2475 = vrot.lane.b32.xlu0 %v929, 44
      %v2476 = vpop.permute.xlu0 %2475
      %2477 = vrot.lane.b32.xlu0 %v930, 44
      %v2478 = vpop.permute.xlu0 %2477
      %2479 = vrot.lane.b32.xlu0 %v931, 44
      %v2480 = vpop.permute.xlu0 %2479
      %2481 = vrot.lane.b32.xlu0 %v932, 44
      %v2482 = vpop.permute.xlu0 %2481
      %2483 = vrot.lane.b32.xlu0 %v933, 44
      %v2484 = vpop.permute.xlu0 %2483
      %2485 = vrot.lane.b32.xlu0 %v934, 44
      %v2486 = vpop.permute.xlu0 %2485
      %2487 = vrot.lane.b32.xlu0 %v935, 44
      %v2488 = vpop.permute.xlu0 %2487
      %2489 = vrot.lane.b32.xlu0 %v936, 44
      %v2490 = vpop.permute.xlu0 %2489
      %2491 = vrot.lane.b32.xlu0 %v937, 44
      %v2492 = vpop.permute.xlu0 %2491
      %2493 = vrot.lane.b32.xlu0 %v938, 44
      %v2494 = vpop.permute.xlu0 %2493
      %2495 = vrot.lane.b32.xlu0 %v939, 44
      %v2496 = vpop.permute.xlu0 %2495
      %2497 = vrot.lane.b32.xlu0 %v940, 44
      %v2498 = vpop.permute.xlu0 %2497
      %2499 = vrot.lane.b32.xlu0 %v941, 44
      %v2500 = vpop.permute.xlu0 %2499
      %2501 = vrot.lane.b32.xlu0 %v942, 44
      %v2502 = vpop.permute.xlu0 %2501
      %2503 = vrot.lane.b32.xlu0 %v943, 44
      %v2504 = vpop.permute.xlu0 %2503
      %2505 = vrot.lane.b32.xlu0 %v944, 44
      %v2506 = vpop.permute.xlu0 %2505
      %2507 = vrot.lane.b32.xlu0 %v945, 44
      %v2508 = vpop.permute.xlu0 %2507
      %2509 = vrot.lane.b32.xlu0 %v946, 44
      %v2510 = vpop.permute.xlu0 %2509
      %2511 = vrot.lane.b32.xlu0 %v947, 44
      %v2512 = vpop.permute.xlu0 %2511
      %2513 = vrot.lane.b32.xlu0 %v948, 44
      %v2514 = vpop.permute.xlu0 %2513
      %2515 = vrot.lane.b32.xlu0 %v949, 44
      %v2516 = vpop.permute.xlu0 %2515
      %2517 = vrot.lane.b32.xlu0 %v950, 44
      %v2518 = vpop.permute.xlu0 %2517
      %2519 = vrot.lane.b32.xlu0 %v951, 44
      %v2520 = vpop.permute.xlu0 %2519
      %2585 = vrot.lane.b32.xlu0 %v952, 48
      %v2586 = vpop.permute.xlu0 %2585
      %2587 = vrot.lane.b32.xlu0 %v953, 48
      %v2588 = vpop.permute.xlu0 %2587
      %2589 = vrot.lane.b32.xlu0 %v954, 48
      %v2590 = vpop.permute.xlu0 %2589
      %2591 = vrot.lane.b32.xlu0 %v955, 48
      %v2592 = vpop.permute.xlu0 %2591
      %2593 = vrot.lane.b32.xlu0 %v956, 48
      %v2594 = vpop.permute.xlu0 %2593
      %2595 = vrot.lane.b32.xlu0 %v957, 48
      %v2596 = vpop.permute.xlu0 %2595
      %2597 = vrot.lane.b32.xlu0 %v958, 48
      %v2598 = vpop.permute.xlu0 %2597
      %2599 = vrot.lane.b32.xlu0 %v959, 48
      %v2600 = vpop.permute.xlu0 %2599
      %2601 = vrot.lane.b32.xlu0 %v960, 48
      %v2602 = vpop.permute.xlu0 %2601
      %2603 = vrot.lane.b32.xlu0 %v961, 48
      %v2604 = vpop.permute.xlu0 %2603
      %2605 = vrot.lane.b32.xlu0 %v962, 48
      %v2606 = vpop.permute.xlu0 %2605
      %2607 = vrot.lane.b32.xlu0 %v963, 48
      %v2608 = vpop.permute.xlu0 %2607
      %2609 = vrot.lane.b32.xlu0 %v964, 48
      %v2610 = vpop.permute.xlu0 %2609
      %2611 = vrot.lane.b32.xlu0 %v965, 48
      %v2612 = vpop.permute.xlu0 %2611
      %2613 = vrot.lane.b32.xlu0 %v966, 48
      %v2614 = vpop.permute.xlu0 %2613
      %2615 = vrot.lane.b32.xlu0 %v967, 48
      %v2616 = vpop.permute.xlu0 %2615
      %2617 = vrot.lane.b32.xlu0 %v968, 48
      %v2618 = vpop.permute.xlu0 %2617
      %2619 = vrot.lane.b32.xlu0 %v969, 48
      %v2620 = vpop.permute.xlu0 %2619
      %2621 = vrot.lane.b32.xlu0 %v970, 48
      %v2622 = vpop.permute.xlu0 %2621
      %2623 = vrot.lane.b32.xlu0 %v971, 48
      %v2624 = vpop.permute.xlu0 %2623
      %2625 = vrot.lane.b32.xlu0 %v972, 48
      %v2626 = vpop.permute.xlu0 %2625
      %2627 = vrot.lane.b32.xlu0 %v973, 48
      %v2628 = vpop.permute.xlu0 %2627
      %2629 = vrot.lane.b32.xlu0 %v974, 48
      %v2630 = vpop.permute.xlu0 %2629
      %2631 = vrot.lane.b32.xlu0 %v975, 48
      %v2632 = vpop.permute.xlu0 %2631
      %2633 = vrot.lane.b32.xlu0 %v976, 48
      %v2634 = vpop.permute.xlu0 %2633
      %2635 = vrot.lane.b32.xlu0 %v977, 48
      %v2636 = vpop.permute.xlu0 %2635
      %2637 = vrot.lane.b32.xlu0 %v978, 48
      %v2638 = vpop.permute.xlu0 %2637
      %2639 = vrot.lane.b32.xlu0 %v979, 48
      %v2640 = vpop.permute.xlu0 %2639
      %2641 = vrot.lane.b32.xlu0 %v980, 48
      %v2642 = vpop.permute.xlu0 %2641
      %2643 = vrot.lane.b32.xlu0 %v981, 48
      %v2644 = vpop.permute.xlu0 %2643
      %2645 = vrot.lane.b32.xlu0 %v982, 48
      %v2646 = vpop.permute.xlu0 %2645
      %2647 = vrot.lane.b32.xlu0 %v983, 48
      %v2648 = vpop.permute.xlu0 %2647
      %2713 = vrot.lane.b32.xlu0 %v984, 52
      %v2714 = vpop.permute.xlu0 %2713
      %2715 = vrot.lane.b32.xlu0 %v985, 52
      %v2716 = vpop.permute.xlu0 %2715
      %2717 = vrot.lane.b32.xlu0 %v986, 52
      %v2718 = vpop.permute.xlu0 %2717
      %2719 = vrot.lane.b32.xlu0 %v987, 52
      %v2720 = vpop.permute.xlu0 %2719
      %2721 = vrot.lane.b32.xlu0 %v988, 52
      %v2722 = vpop.permute.xlu0 %2721
      %2723 = vrot.lane.b32.xlu0 %v989, 52
      %v2724 = vpop.permute.xlu0 %2723
      %2725 = vrot.lane.b32.xlu0 %v990, 52
      %v2726 = vpop.permute.xlu0 %2725
      %2727 = vrot.lane.b32.xlu0 %v991, 52
      %v2728 = vpop.permute.xlu0 %2727
      %2729 = vrot.lane.b32.xlu0 %v992, 52
      %v2730 = vpop.permute.xlu0 %2729
      %2731 = vrot.lane.b32.xlu0 %v993, 52
      %v2732 = vpop.permute.xlu0 %2731
      %2733 = vrot.lane.b32.xlu0 %v994, 52
      %v2734 = vpop.permute.xlu0 %2733
      %2735 = vrot.lane.b32.xlu0 %v995, 52
      %v2736 = vpop.permute.xlu0 %2735
      %2737 = vrot.lane.b32.xlu0 %v996, 52
      %v2738 = vpop.permute.xlu0 %2737
      %2739 = vrot.lane.b32.xlu0 %v997, 52
      %v2740 = vpop.permute.xlu0 %2739
      %2741 = vrot.lane.b32.xlu0 %v998, 52
      %v2742 = vpop.permute.xlu0 %2741
      %2743 = vrot.lane.b32.xlu0 %v999, 52
      %v2744 = vpop.permute.xlu0 %2743
      %2745 = vrot.lane.b32.xlu0 %v1000, 52
      %v2746 = vpop.permute.xlu0 %2745
      %2747 = vrot.lane.b32.xlu0 %v1001, 52
      %v2748 = vpop.permute.xlu0 %2747
      %2749 = vrot.lane.b32.xlu0 %v1002, 52
      %v2750 = vpop.permute.xlu0 %2749
      %2751 = vrot.lane.b32.xlu0 %v1003, 52
      %v2752 = vpop.permute.xlu0 %2751
      %2753 = vrot.lane.b32.xlu0 %v1004, 52
      %v2754 = vpop.permute.xlu0 %2753
      %2755 = vrot.lane.b32.xlu0 %v1005, 52
      %v2756 = vpop.permute.xlu0 %2755
      %2757 = vrot.lane.b32.xlu0 %v1006, 52
      %v2758 = vpop.permute.xlu0 %2757
      %2759 = vrot.lane.b32.xlu0 %v1007, 52
      %v2760 = vpop.permute.xlu0 %2759
      %2761 = vrot.lane.b32.xlu0 %v1008, 52
      %v2762 = vpop.permute.xlu0 %2761
      %2763 = vrot.lane.b32.xlu0 %v1009, 52
      %v2764 = vpop.permute.xlu0 %2763
      %2765 = vrot.lane.b32.xlu0 %v1010, 52
      %v2766 = vpop.permute.xlu0 %2765
      %2767 = vrot.lane.b32.xlu0 %v1011, 52
      %v2768 = vpop.permute.xlu0 %2767
      %2769 = vrot.lane.b32.xlu0 %v1012, 52
      %v2770 = vpop.permute.xlu0 %2769
      %2771 = vrot.lane.b32.xlu0 %v1013, 52
      %v2772 = vpop.permute.xlu0 %2771
      %2773 = vrot.lane.b32.xlu0 %v1014, 52
      %v2774 = vpop.permute.xlu0 %2773
      %2775 = vrot.lane.b32.xlu0 %v1015, 52
      %v2776 = vpop.permute.xlu0 %2775
      %2841 = vrot.lane.b32.xlu0 %v1016, 56
      %v2842 = vpop.permute.xlu0 %2841
      %2843 = vrot.lane.b32.xlu0 %v1017, 56
      %v2844 = vpop.permute.xlu0 %2843
      %2845 = vrot.lane.b32.xlu0 %v1018, 56
      %v2846 = vpop.permute.xlu0 %2845
      %2847 = vrot.lane.b32.xlu0 %v1019, 56
      %v2848 = vpop.permute.xlu0 %2847
      %2849 = vrot.lane.b32.xlu0 %v1020, 56
      %v2850 = vpop.permute.xlu0 %2849
      %2851 = vrot.lane.b32.xlu0 %v1021, 56
      %v2852 = vpop.permute.xlu0 %2851
      %2853 = vrot.lane.b32.xlu0 %v1022, 56
      %v2854 = vpop.permute.xlu0 %2853
      %2855 = vrot.lane.b32.xlu0 %v1023, 56
      %v2856 = vpop.permute.xlu0 %2855
      %2857 = vrot.lane.b32.xlu0 %v1024, 56
      %v2858 = vpop.permute.xlu0 %2857
      %2859 = vrot.lane.b32.xlu0 %v1025, 56
      %v2860 = vpop.permute.xlu0 %2859
      %2861 = vrot.lane.b32.xlu0 %v1026, 56
      %v2862 = vpop.permute.xlu0 %2861
      %2863 = vrot.lane.b32.xlu0 %v1027, 56
      %v2864 = vpop.permute.xlu0 %2863
      %2865 = vrot.lane.b32.xlu0 %v1028, 56
      %v2866 = vpop.permute.xlu0 %2865
      %2867 = vrot.lane.b32.xlu0 %v1029, 56
      %v2868 = vpop.permute.xlu0 %2867
      %2869 = vrot.lane.b32.xlu0 %v1030, 56
      %v2870 = vpop.permute.xlu0 %2869
      %2871 = vrot.lane.b32.xlu0 %v1031, 56
      %v2872 = vpop.permute.xlu0 %2871
      %2873 = vrot.lane.b32.xlu0 %v1032, 56
      %v2874 = vpop.permute.xlu0 %2873
      %2875 = vrot.lane.b32.xlu0 %v1033, 56
      %v2876 = vpop.permute.xlu0 %2875
      %2877 = vrot.lane.b32.xlu0 %v1034, 56
      %v2878 = vpop.permute.xlu0 %2877
      %2879 = vrot.lane.b32.xlu0 %v1035, 56
      %v2880 = vpop.permute.xlu0 %2879
      %2881 = vrot.lane.b32.xlu0 %v1036, 56
      %v2882 = vpop.permute.xlu0 %2881
      %2883 = vrot.lane.b32.xlu0 %v1037, 56
      %v2884 = vpop.permute.xlu0 %2883
      %2885 = vrot.lane.b32.xlu0 %v1038, 56
      %v2886 = vpop.permute.xlu0 %2885
      %2887 = vrot.lane.b32.xlu0 %v1039, 56
      %v2888 = vpop.permute.xlu0 %2887
      %2889 = vrot.lane.b32.xlu0 %v1040, 56
      %v2890 = vpop.permute.xlu0 %2889
      %2891 = vrot.lane.b32.xlu0 %v1041, 56
      %v2892 = vpop.permute.xlu0 %2891
      %2893 = vrot.lane.b32.xlu0 %v1042, 56
      %v2894 = vpop.permute.xlu0 %2893
      %2895 = vrot.lane.b32.xlu0 %v1043, 56
      %v2896 = vpop.permute.xlu0 %2895
      %2897 = vrot.lane.b32.xlu0 %v1044, 56
      %v2898 = vpop.permute.xlu0 %2897
      %2899 = vrot.lane.b32.xlu0 %v1045, 56
      %v2900 = vpop.permute.xlu0 %2899
      %2901 = vrot.lane.b32.xlu0 %v1046, 56
      %v2902 = vpop.permute.xlu0 %2901
      %2903 = vrot.lane.b32.xlu0 %v1047, 56
      %v2904 = vpop.permute.xlu0 %2903
      %2969 = vrot.lane.b32.xlu0 %v1049, 60
      %v2970 = vpop.permute.xlu0 %2969
      %2971 = vrot.lane.b32.xlu0 %v1050, 60
      %v2972 = vpop.permute.xlu0 %2971
      %2973 = vrot.lane.b32.xlu0 %v1051, 60
      %v2974 = vpop.permute.xlu0 %2973
      %2975 = vrot.lane.b32.xlu0 %v1052, 60
      %v2976 = vpop.permute.xlu0 %2975
      %2977 = vrot.lane.b32.xlu0 %v1053, 60
      %v2978 = vpop.permute.xlu0 %2977
      %2979 = vrot.lane.b32.xlu0 %v1054, 60
      %v2980 = vpop.permute.xlu0 %2979
      %2981 = vrot.lane.b32.xlu0 %v1055, 60
      %v2982 = vpop.permute.xlu0 %2981
      %2983 = vrot.lane.b32.xlu0 %v1056, 60
      %v2984 = vpop.permute.xlu0 %2983
      %2985 = vrot.lane.b32.xlu0 %v1057, 60
      %v2986 = vpop.permute.xlu0 %2985
      %2987 = vrot.lane.b32.xlu0 %v1058, 60
      %v2988 = vpop.permute.xlu0 %2987
      %2989 = vrot.lane.b32.xlu0 %v1059, 60
      %v2990 = vpop.permute.xlu0 %2989
      %2991 = vrot.lane.b32.xlu0 %v1060, 60
      %v2992 = vpop.permute.xlu0 %2991
      %2993 = vrot.lane.b32.xlu0 %v1061, 60
      %v2994 = vpop.permute.xlu0 %2993
      %2995 = vrot.lane.b32.xlu0 %v1062, 60
      %v2996 = vpop.permute.xlu0 %2995
      %2997 = vrot.lane.b32.xlu0 %v1063, 60
      %v2998 = vpop.permute.xlu0 %2997
      %2999 = vrot.lane.b32.xlu0 %v1064, 60
      %v3000 = vpop.permute.xlu0 %2999
      %3001 = vrot.lane.b32.xlu0 %v1065, 60
      %v3002 = vpop.permute.xlu0 %3001
      %3003 = vrot.lane.b32.xlu0 %v1066, 60
      %v3004 = vpop.permute.xlu0 %3003
      %3005 = vrot.lane.b32.xlu0 %v1067, 60
      %v3006 = vpop.permute.xlu0 %3005
      %3007 = vrot.lane.b32.xlu0 %v1068, 60
      %v3008 = vpop.permute.xlu0 %3007
      %3009 = vrot.lane.b32.xlu0 %v1069, 60
      %v3010 = vpop.permute.xlu0 %3009
      %3011 = vrot.lane.b32.xlu0 %v1070, 60
      %v3012 = vpop.permute.xlu0 %3011
      %3013 = vrot.lane.b32.xlu0 %v1071, 60
      %v3014 = vpop.permute.xlu0 %3013
      %3015 = vrot.lane.b32.xlu0 %v1072, 60
      %v3016 = vpop.permute.xlu0 %3015
      %3017 = vrot.lane.b32.xlu0 %v1073, 60
      %v3018 = vpop.permute.xlu0 %3017
      %3019 = vrot.lane.b32.xlu0 %v1074, 60
      %v3020 = vpop.permute.xlu0 %3019
      %3021 = vrot.lane.b32.xlu0 %v1075, 60
      %v3022 = vpop.permute.xlu0 %3021
      %3023 = vrot.lane.b32.xlu0 %v1076, 60
      %v3024 = vpop.permute.xlu0 %3023
      %3025 = vrot.lane.b32.xlu0 %v1077, 60
      %v3026 = vpop.permute.xlu0 %3025
      %3027 = vrot.lane.b32.xlu0 %v1078, 60
      %v3028 = vpop.permute.xlu0 %3027
      %3029 = vrot.lane.b32.xlu0 %v1079, 60
      %v3030 = vpop.permute.xlu0 %3029
      %3031 = vrot.lane.b32.xlu0 %v1080, 60
      %v3032 = vpop.permute.xlu0 %3031
      %v3065 = vsel %vm273, %v567, %v1178
      %v3066 = vsel %vm273, %v568, %v1180
      %v3067 = vsel %vm273, %v569, %v1182
      %v3068 = vsel %vm273, %v570, %v1184
      %v3069 = vsel %vm273, %v571, %v1186
      %v3070 = vsel %vm273, %v572, %v1188
      %v3071 = vsel %vm273, %v573, %v1190
      %v3072 = vsel %vm273, %v574, %v1192
      %v3073 = vsel %vm273, %v575, %v1194
      %v3074 = vsel %vm273, %v576, %v1196
      %v3075 = vsel %vm273, %v577, %v1198
      %v3076 = vsel %vm273, %v578, %v1200
      %v3077 = vsel %vm273, %v579, %v1202
      %v3078 = vsel %vm273, %v580, %v1204
      %v3079 = vsel %vm273, %v581, %v1206
      %v3080 = vsel %vm273, %v582, %v1208
      %v3081 = vsel %vm273, %v583, %v1210
      %v3082 = vsel %vm273, %v584, %v1212
      %v3083 = vsel %vm273, %v585, %v1214
      %v3084 = vsel %vm273, %v586, %v1216
      %v3085 = vsel %vm273, %v587, %v1218
      %v3086 = vsel %vm273, %v588, %v1220
      %v3087 = vsel %vm273, %v589, %v1222
      %v3088 = vsel %vm273, %v590, %v1224
      %v3089 = vsel %vm273, %v591, %v1226
      %v3090 = vsel %vm273, %v592, %v1228
      %v3091 = vsel %vm273, %v593, %v1230
      %v3092 = vsel %vm273, %v594, %v1232
      %v3093 = vsel %vm273, %v595, %v1234
      %v3094 = vsel %vm273, %v596, %v1236
      %v3095 = vsel %vm273, %v597, %v1238
      %v3096 = vsel %vm273, %v598, %v1240
      %vm3097 = vcmask 64512
      %v3098 = vsel %vm3097, %v3065, %v1306
      %v3099 = vsel %vm3097, %v3066, %v1308
      %v3100 = vsel %vm3097, %v3067, %v1310
      %v3101 = vsel %vm3097, %v3068, %v1312
      %v3102 = vsel %vm3097, %v3069, %v1314
      %v3103 = vsel %vm3097, %v3070, %v1316
      %v3104 = vsel %vm3097, %v3071, %v1318
      %v3105 = vsel %vm3097, %v3072, %v1320
      %v3106 = vsel %vm3097, %v3073, %v1322
      %v3107 = vsel %vm3097, %v3074, %v1324
      %v3108 = vsel %vm3097, %v3075, %v1326
      %v3109 = vsel %vm3097, %v3076, %v1328
      %v3110 = vsel %vm3097, %v3077, %v1330
      %v3111 = vsel %vm3097, %v3078, %v1332
      %v3112 = vsel %vm3097, %v3079, %v1334
      %v3113 = vsel %vm3097, %v3080, %v1336
      %v3114 = vsel %vm3097, %v3081, %v1338
      %v3115 = vsel %vm3097, %v3082, %v1340
      %v3116 = vsel %vm3097, %v3083, %v1342
      %v3117 = vsel %vm3097, %v3084, %v1344
      %v3118 = vsel %vm3097, %v3085, %v1346
      %v3119 = vsel %vm3097, %v3086, %v1348
      %v3120 = vsel %vm3097, %v3087, %v1350
      %v3121 = vsel %vm3097, %v3088, %v1352
      %v3122 = vsel %vm3097, %v3089, %v1354
      %v3123 = vsel %vm3097, %v3090, %v1356
      %v3124 = vsel %vm3097, %v3091, %v1358
      %v3125 = vsel %vm3097, %v3092, %v1360
      %v3126 = vsel %vm3097, %v3093, %v1362
      %v3127 = vsel %vm3097, %v3094, %v1364
      %v3128 = vsel %vm3097, %v3095, %v1366
      %v3129 = vsel %vm3097, %v3096, %v1368
      %vm3130 = vcmask 97280
      %v3131 = vsel %vm3130, %v3098, %v1434
      %v3132 = vsel %vm3130, %v3099, %v1436
      %v3133 = vsel %vm3130, %v3100, %v1438
      %v3134 = vsel %vm3130, %v3101, %v1440
      %v3135 = vsel %vm3130, %v3102, %v1442
      %v3136 = vsel %vm3130, %v3103, %v1444
      %v3137 = vsel %vm3130, %v3104, %v1446
      %v3138 = vsel %vm3130, %v3105, %v1448
      %v3139 = vsel %vm3130, %v3106, %v1450
      %v3140 = vsel %vm3130, %v3107, %v1452
      %v3141 = vsel %vm3130, %v3108, %v1454
      %v3142 = vsel %vm3130, %v3109, %v1456
      %v3143 = vsel %vm3130, %v3110, %v1458
      %v3144 = vsel %vm3130, %v3111, %v1460
      %v3145 = vsel %vm3130, %v3112, %v1462
      %v3146 = vsel %vm3130, %v3113, %v1464
      %v3147 = vsel %vm3130, %v3114, %v1466
      %v3148 = vsel %vm3130, %v3115, %v1468
      %v3149 = vsel %vm3130, %v3116, %v1470
      %v3150 = vsel %vm3130, %v3117, %v1472
      %v3151 = vsel %vm3130, %v3118, %v1474
      %v3152 = vsel %vm3130, %v3119, %v1476
      %v3153 = vsel %vm3130, %v3120, %v1478
      %v3154 = vsel %vm3130, %v3121, %v1480
      %v3155 = vsel %vm3130, %v3122, %v1482
      %v3156 = vsel %vm3130, %v3123, %v1484
      %v3157 = vsel %vm3130, %v3124, %v1486
      %v3158 = vsel %vm3130, %v3125, %v1488
      %v3159 = vsel %vm3130, %v3126, %v1490
      %v3160 = vsel %vm3130, %v3127, %v1492
      %v3161 = vsel %vm3130, %v3128, %v1494
      %v3162 = vsel %vm3130, %v3129, %v1496
      %vm3163 = vcmask 130048
      %v3164 = vsel %vm3163, %v3131, %v1562
      %v3165 = vsel %vm3163, %v3132, %v1564
      %v3166 = vsel %vm3163, %v3133, %v1566
      %v3167 = vsel %vm3163, %v3134, %v1568
      %v3168 = vsel %vm3163, %v3135, %v1570
      %v3169 = vsel %vm3163, %v3136, %v1572
      %v3170 = vsel %vm3163, %v3137, %v1574
      %v3171 = vsel %vm3163, %v3138, %v1576
      %v3172 = vsel %vm3163, %v3139, %v1578
      %v3173 = vsel %vm3163, %v3140, %v1580
      %v3174 = vsel %vm3163, %v3141, %v1582
      %v3175 = vsel %vm3163, %v3142, %v1584
      %v3176 = vsel %vm3163, %v3143, %v1586
      %v3177 = vsel %vm3163, %v3144, %v1588
      %v3178 = vsel %vm3163, %v3145, %v1590
      %v3179 = vsel %vm3163, %v3146, %v1592
      %v3180 = vsel %vm3163, %v3147, %v1594
      %v3181 = vsel %vm3163, %v3148, %v1596
      %v3182 = vsel %vm3163, %v3149, %v1598
      %v3183 = vsel %vm3163, %v3150, %v1600
      %v3184 = vsel %vm3163, %v3151, %v1602
      %v3185 = vsel %vm3163, %v3152, %v1604
      %v3186 = vsel %vm3163, %v3153, %v1606
      %v3187 = vsel %vm3163, %v3154, %v1608
      %v3188 = vsel %vm3163, %v3155, %v1610
      %v3189 = vsel %vm3163, %v3156, %v1612
      %v3190 = vsel %vm3163, %v3157, %v1614
      %v3191 = vsel %vm3163, %v3158, %v1616
      %v3192 = vsel %vm3163, %v3159, %v1618
      %v3193 = vsel %vm3163, %v3160, %v1620
      %v3194 = vsel %vm3163, %v3161, %v1622
      %v3195 = vsel %vm3163, %v3162, %v1624
      %vm3196 = vcmask 162816
      %v3197 = vsel %vm3196, %v3164, %v1690
      %v3198 = vsel %vm3196, %v3165, %v1692
      %v3199 = vsel %vm3196, %v3166, %v1694
      %v3200 = vsel %vm3196, %v3167, %v1696
      %v3201 = vsel %vm3196, %v3168, %v1698
      %v3202 = vsel %vm3196, %v3169, %v1700
      %v3203 = vsel %vm3196, %v3170, %v1702
      %v3204 = vsel %vm3196, %v3171, %v1704
      %v3205 = vsel %vm3196, %v3172, %v1706
      %v3206 = vsel %vm3196, %v3173, %v1708
      %v3207 = vsel %vm3196, %v3174, %v1710
      %v3208 = vsel %vm3196, %v3175, %v1712
      %v3209 = vsel %vm3196, %v3176, %v1714
      %v3210 = vsel %vm3196, %v3177, %v1716
      %v3211 = vsel %vm3196, %v3178, %v1718
      %v3212 = vsel %vm3196, %v3179, %v1720
      %v3213 = vsel %vm3196, %v3180, %v1722
      %v3214 = vsel %vm3196, %v3181, %v1724
      %v3215 = vsel %vm3196, %v3182, %v1726
      %v3216 = vsel %vm3196, %v3183, %v1728
      %v3217 = vsel %vm3196, %v3184, %v1730
      %v3218 = vsel %vm3196, %v3185, %v1732
      %v3219 = vsel %vm3196, %v3186, %v1734
      %v3220 = vsel %vm3196, %v3187, %v1736
      %v3221 = vsel %vm3196, %v3188, %v1738
      %v3222 = vsel %vm3196, %v3189, %v1740
      %v3223 = vsel %vm3196, %v3190, %v1742
      %v3224 = vsel %vm3196, %v3191, %v1744
      %v3225 = vsel %vm3196, %v3192, %v1746
      %v3226 = vsel %vm3196, %v3193, %v1748
      %v3227 = vsel %vm3196, %v3194, %v1750
      %v3228 = vsel %vm3196, %v3195, %v1752
      %vm3229 = vcmask 195584
      %v3230 = vsel %vm3229, %v3197, %v1818
      %v3231 = vsel %vm3229, %v3198, %v1820
      %v3232 = vsel %vm3229, %v3199, %v1822
      %v3233 = vsel %vm3229, %v3200, %v1824
      %v3234 = vsel %vm3229, %v3201, %v1826
      %v3235 = vsel %vm3229, %v3202, %v1828
      %v3236 = vsel %vm3229, %v3203, %v1830
      %v3237 = vsel %vm3229, %v3204, %v1832
      %v3238 = vsel %vm3229, %v3205, %v1834
      %v3239 = vsel %vm3229, %v3206, %v1836
      %v3240 = vsel %vm3229, %v3207, %v1838
      %v3241 = vsel %vm3229, %v3208, %v1840
      %v3242 = vsel %vm3229, %v3209, %v1842
      %v3243 = vsel %vm3229, %v3210, %v1844
      %v3244 = vsel %vm3229, %v3211, %v1846
      %v3245 = vsel %vm3229, %v3212, %v1848
      %v3246 = vsel %vm3229, %v3213, %v1850
      %v3247 = vsel %vm3229, %v3214, %v1852
      %v3248 = vsel %vm3229, %v3215, %v1854
      %v3249 = vsel %vm3229, %v3216, %v1856
      %v3250 = vsel %vm3229, %v3217, %v1858
      %v3251 = vsel %vm3229, %v3218, %v1860
      %v3252 = vsel %vm3229, %v3219, %v1862
      %v3253 = vsel %vm3229, %v3220, %v1864
      %v3254 = vsel %vm3229, %v3221, %v1866
      %v3255 = vsel %vm3229, %v3222, %v1868
      %v3256 = vsel %vm3229, %v3223, %v1870
      %v3257 = vsel %vm3229, %v3224, %v1872
      %v3258 = vsel %vm3229, %v3225, %v1874
      %v3259 = vsel %vm3229, %v3226, %v1876
      %v3260 = vsel %vm3229, %v3227, %v1878
      %v3261 = vsel %vm3229, %v3228, %v1880
      %vm3262 = vcmask 228352
      %v3263 = vsel %vm3262, %v3230, %v1946
      %v3264 = vsel %vm3262, %v3231, %v1948
      %v3265 = vsel %vm3262, %v3232, %v1950
      %v3266 = vsel %vm3262, %v3233, %v1952
      %v3267 = vsel %vm3262, %v3234, %v1954
      %v3268 = vsel %vm3262, %v3235, %v1956
      %v3269 = vsel %vm3262, %v3236, %v1958
      %v3270 = vsel %vm3262, %v3237, %v1960
      %v3271 = vsel %vm3262, %v3238, %v1962
      %v3272 = vsel %vm3262, %v3239, %v1964
      %v3273 = vsel %vm3262, %v3240, %v1966
      %v3274 = vsel %vm3262, %v3241, %v1968
      %v3275 = vsel %vm3262, %v3242, %v1970
      %v3276 = vsel %vm3262, %v3243, %v1972
      %v3277 = vsel %vm3262, %v3244, %v1974
      %v3278 = vsel %vm3262, %v3245, %v1976
      %v3279 = vsel %vm3262, %v3246, %v1978
      %v3280 = vsel %vm3262, %v3247, %v1980
      %v3281 = vsel %vm3262, %v3248, %v1982
      %v3282 = vsel %vm3262, %v3249, %v1984
      %v3283 = vsel %vm3262, %v3250, %v1986
      %v3284 = vsel %vm3262, %v3251, %v1988
      %v3285 = vsel %vm3262, %v3252, %v1990
      %v3286 = vsel %vm3262, %v3253, %v1992
      %v3287 = vsel %vm3262, %v3254, %v1994
      %v3288 = vsel %vm3262, %v3255, %v1996
      %v3289 = vsel %vm3262, %v3256, %v1998
      %v3290 = vsel %vm3262, %v3257, %v2000
      %v3291 = vsel %vm3262, %v3258, %v2002
      %v3292 = vsel %vm3262, %v3259, %v2004
      %v3293 = vsel %vm3262, %v3260, %v2006
      %v3294 = vsel %vm3262, %v3261, %v2008
      %vm3295 = vcmask 261120
      %v3296 = vsel %vm3295, %v3263, %v2074
      %v3297 = vsel %vm3295, %v3264, %v2076
      %v3298 = vsel %vm3295, %v3265, %v2078
      %v3299 = vsel %vm3295, %v3266, %v2080
      %v3300 = vsel %vm3295, %v3267, %v2082
      %v3301 = vsel %vm3295, %v3268, %v2084
      %v3302 = vsel %vm3295, %v3269, %v2086
      %v3303 = vsel %vm3295, %v3270, %v2088
      %v3304 = vsel %vm3295, %v3271, %v2090
      %v3305 = vsel %vm3295, %v3272, %v2092
      %v3306 = vsel %vm3295, %v3273, %v2094
      %v3307 = vsel %vm3295, %v3274, %v2096
      %v3308 = vsel %vm3295, %v3275, %v2098
      %v3309 = vsel %vm3295, %v3276, %v2100
      %v3310 = vsel %vm3295, %v3277, %v2102
      %v3311 = vsel %vm3295, %v3278, %v2104
      %v3312 = vsel %vm3295, %v3279, %v2106
      %v3313 = vsel %vm3295, %v3280, %v2108
      %v3314 = vsel %vm3295, %v3281, %v2110
      %v3315 = vsel %vm3295, %v3282, %v2112
      %v3316 = vsel %vm3295, %v3283, %v2114
      %v3317 = vsel %vm3295, %v3284, %v2116
      %v3318 = vsel %vm3295, %v3285, %v2118
      %v3319 = vsel %vm3295, %v3286, %v2120
      %v3320 = vsel %vm3295, %v3287, %v2122
      %v3321 = vsel %vm3295, %v3288, %v2124
      %v3322 = vsel %vm3295, %v3289, %v2126
      %v3323 = vsel %vm3295, %v3290, %v2128
      %v3324 = vsel %vm3295, %v3291, %v2130
      %v3325 = vsel %vm3295, %v3292, %v2132
      %v3326 = vsel %vm3295, %v3293, %v2134
      %v3327 = vsel %vm3295, %v3294, %v2136
      %vm3328 = vcmask 293888
      %v3329 = vsel %vm3328, %v3296, %v2202
      %v3330 = vsel %vm3328, %v3297, %v2204
      %v3331 = vsel %vm3328, %v3298, %v2206
      %v3332 = vsel %vm3328, %v3299, %v2208
      %v3333 = vsel %vm3328, %v3300, %v2210
      %v3334 = vsel %vm3328, %v3301, %v2212
      %v3335 = vsel %vm3328, %v3302, %v2214
      %v3336 = vsel %vm3328, %v3303, %v2216
      %v3337 = vsel %vm3328, %v3304, %v2218
      %v3338 = vsel %vm3328, %v3305, %v2220
      %v3339 = vsel %vm3328, %v3306, %v2222
      %v3340 = vsel %vm3328, %v3307, %v2224
      %v3341 = vsel %vm3328, %v3308, %v2226
      %v3342 = vsel %vm3328, %v3309, %v2228
      %v3343 = vsel %vm3328, %v3310, %v2230
      %v3344 = vsel %vm3328, %v3311, %v2232
      %v3345 = vsel %vm3328, %v3312, %v2234
      %v3346 = vsel %vm3328, %v3313, %v2236
      %v3347 = vsel %vm3328, %v3314, %v2238
      %v3348 = vsel %vm3328, %v3315, %v2240
      %v3349 = vsel %vm3328, %v3316, %v2242
      %v3350 = vsel %vm3328, %v3317, %v2244
      %v3351 = vsel %vm3328, %v3318, %v2246
      %v3352 = vsel %vm3328, %v3319, %v2248
      %v3353 = vsel %vm3328, %v3320, %v2250
      %v3354 = vsel %vm3328, %v3321, %v2252
      %v3355 = vsel %vm3328, %v3322, %v2254
      %v3356 = vsel %vm3328, %v3323, %v2256
      %v3357 = vsel %vm3328, %v3324, %v2258
      %v3358 = vsel %vm3328, %v3325, %v2260
      %v3359 = vsel %vm3328, %v3326, %v2262
      %v3360 = vsel %vm3328, %v3327, %v2264
      %vm3361 = vcmask 326656
      %v3362 = vsel %vm3361, %v3329, %v2330
      %v3363 = vsel %vm3361, %v3330, %v2332
      %v3364 = vsel %vm3361, %v3331, %v2334
      %v3365 = vsel %vm3361, %v3332, %v2336
      %v3366 = vsel %vm3361, %v3333, %v2338
      %v3367 = vsel %vm3361, %v3334, %v2340
      %v3368 = vsel %vm3361, %v3335, %v2342
      %v3369 = vsel %vm3361, %v3336, %v2344
      %v3370 = vsel %vm3361, %v3337, %v2346
      %v3371 = vsel %vm3361, %v3338, %v2348
      %v3372 = vsel %vm3361, %v3339, %v2350
      %v3373 = vsel %vm3361, %v3340, %v2352
      %v3374 = vsel %vm3361, %v3341, %v2354
      %v3375 = vsel %vm3361, %v3342, %v2356
      %v3376 = vsel %vm3361, %v3343, %v2358
      %v3377 = vsel %vm3361, %v3344, %v2360
      %v3378 = vsel %vm3361, %v3345, %v2362
      %v3379 = vsel %vm3361, %v3346, %v2364
      %v3380 = vsel %vm3361, %v3347, %v2366
      %v3381 = vsel %vm3361, %v3348, %v2368
      %v3382 = vsel %vm3361, %v3349, %v2370
      %v3383 = vsel %vm3361, %v3350, %v2372
      %v3384 = vsel %vm3361, %v3351, %v2374
      %v3385 = vsel %vm3361, %v3352, %v2376
      %v3386 = vsel %vm3361, %v3353, %v2378
      %v3387 = vsel %vm3361, %v3354, %v2380
      %v3388 = vsel %vm3361, %v3355, %v2382
      %v3389 = vsel %vm3361, %v3356, %v2384
      %v3390 = vsel %vm3361, %v3357, %v2386
      %v3391 = vsel %vm3361, %v3358, %v2388
      %v3392 = vsel %vm3361, %v3359, %v2390
      %v3393 = vsel %vm3361, %v3360, %v2392
      %vm3394 = vcmask 359424
      %v3395 = vsel %vm3394, %v3362, %v2458
      %v3396 = vsel %vm3394, %v3363, %v2460
      %v3397 = vsel %vm3394, %v3364, %v2462
      %v3398 = vsel %vm3394, %v3365, %v2464
      %v3399 = vsel %vm3394, %v3366, %v2466
      %v3400 = vsel %vm3394, %v3367, %v2468
      %v3401 = vsel %vm3394, %v3368, %v2470
      %v3402 = vsel %vm3394, %v3369, %v2472
      %v3403 = vsel %vm3394, %v3370, %v2474
      %v3404 = vsel %vm3394, %v3371, %v2476
      %v3405 = vsel %vm3394, %v3372, %v2478
      %v3406 = vsel %vm3394, %v3373, %v2480
      %v3407 = vsel %vm3394, %v3374, %v2482
      %v3408 = vsel %vm3394, %v3375, %v2484
      %v3409 = vsel %vm3394, %v3376, %v2486
      %v3410 = vsel %vm3394, %v3377, %v2488
      %v3411 = vsel %vm3394, %v3378, %v2490
      %v3412 = vsel %vm3394, %v3379, %v2492
      %v3413 = vsel %vm3394, %v3380, %v2494
      %v3414 = vsel %vm3394, %v3381, %v2496
      %v3415 = vsel %vm3394, %v3382, %v2498
      %v3416 = vsel %vm3394, %v3383, %v2500
      %v3417 = vsel %vm3394, %v3384, %v2502
      %v3418 = vsel %vm3394, %v3385, %v2504
      %v3419 = vsel %vm3394, %v3386, %v2506
      %v3420 = vsel %vm3394, %v3387, %v2508
      %v3421 = vsel %vm3394, %v3388, %v2510
      %v3422 = vsel %vm3394, %v3389, %v2512
      %v3423 = vsel %vm3394, %v3390, %v2514
      %v3424 = vsel %vm3394, %v3391, %v2516
      %v3425 = vsel %vm3394, %v3392, %v2518
      %v3426 = vsel %vm3394, %v3393, %v2520
      %vm3427 = vcmask 392192
      %v3428 = vsel %vm3427, %v3395, %v2586
      %v3429 = vsel %vm3427, %v3396, %v2588
      %v3430 = vsel %vm3427, %v3397, %v2590
      %v3431 = vsel %vm3427, %v3398, %v2592
      %v3432 = vsel %vm3427, %v3399, %v2594
      %v3433 = vsel %vm3427, %v3400, %v2596
      %v3434 = vsel %vm3427, %v3401, %v2598
      %v3435 = vsel %vm3427, %v3402, %v2600
      %v3436 = vsel %vm3427, %v3403, %v2602
      %v3437 = vsel %vm3427, %v3404, %v2604
      %v3438 = vsel %vm3427, %v3405, %v2606
      %v3439 = vsel %vm3427, %v3406, %v2608
      %v3440 = vsel %vm3427, %v3407, %v2610
      %v3441 = vsel %vm3427, %v3408, %v2612
      %v3442 = vsel %vm3427, %v3409, %v2614
      %v3443 = vsel %vm3427, %v3410, %v2616
      %v3444 = vsel %vm3427, %v3411, %v2618
      %v3445 = vsel %vm3427, %v3412, %v2620
      %v3446 = vsel %vm3427, %v3413, %v2622
      %v3447 = vsel %vm3427, %v3414, %v2624
      %v3448 = vsel %vm3427, %v3415, %v2626
      %v3449 = vsel %vm3427, %v3416, %v2628
      %v3450 = vsel %vm3427, %v3417, %v2630
      %v3451 = vsel %vm3427, %v3418, %v2632
      %v3452 = vsel %vm3427, %v3419, %v2634
      %v3453 = vsel %vm3427, %v3420, %v2636
      %v3454 = vsel %vm3427, %v3421, %v2638
      %v3455 = vsel %vm3427, %v3422, %v2640
      %v3456 = vsel %vm3427, %v3423, %v2642
      %v3457 = vsel %vm3427, %v3424, %v2644
      %v3458 = vsel %vm3427, %v3425, %v2646
      %v3459 = vsel %vm3427, %v3426, %v2648
      %vm3460 = vcmask 424960
      %v3461 = vsel %vm3460, %v3428, %v2714
      %v3462 = vsel %vm3460, %v3429, %v2716
      %v3463 = vsel %vm3460, %v3430, %v2718
      %v3464 = vsel %vm3460, %v3431, %v2720
      %v3465 = vsel %vm3460, %v3432, %v2722
      %v3466 = vsel %vm3460, %v3433, %v2724
      %v3467 = vsel %vm3460, %v3434, %v2726
      %v3468 = vsel %vm3460, %v3435, %v2728
      %v3469 = vsel %vm3460, %v3436, %v2730
      %v3470 = vsel %vm3460, %v3437, %v2732
      %v3471 = vsel %vm3460, %v3438, %v2734
      %v3472 = vsel %vm3460, %v3439, %v2736
      %v3473 = vsel %vm3460, %v3440, %v2738
      %v3474 = vsel %vm3460, %v3441, %v2740
      %v3475 = vsel %vm3460, %v3442, %v2742
      %v3476 = vsel %vm3460, %v3443, %v2744
      %v3477 = vsel %vm3460, %v3444, %v2746
      %v3478 = vsel %vm3460, %v3445, %v2748
      %v3479 = vsel %vm3460, %v3446, %v2750
      %v3480 = vsel %vm3460, %v3447, %v2752
      %v3481 = vsel %vm3460, %v3448, %v2754
      %v3482 = vsel %vm3460, %v3449, %v2756
      %v3483 = vsel %vm3460, %v3450, %v2758
      %v3484 = vsel %vm3460, %v3451, %v2760
      %v3485 = vsel %vm3460, %v3452, %v2762
      %v3486 = vsel %vm3460, %v3453, %v2764
      %v3487 = vsel %vm3460, %v3454, %v2766
      %v3488 = vsel %vm3460, %v3455, %v2768
      %v3489 = vsel %vm3460, %v3456, %v2770
      %v3490 = vsel %vm3460, %v3457, %v2772
      %v3491 = vsel %vm3460, %v3458, %v2774
      %v3492 = vsel %vm3460, %v3459, %v2776
      %vm3493 = vcmask 457728
      %v3494 = vsel %vm3493, %v3461, %v2842
      %v3495 = vsel %vm3493, %v3462, %v2844
      %v3496 = vsel %vm3493, %v3463, %v2846
      %v3497 = vsel %vm3493, %v3464, %v2848
      %v3498 = vsel %vm3493, %v3465, %v2850
      %v3499 = vsel %vm3493, %v3466, %v2852
      %v3500 = vsel %vm3493, %v3467, %v2854
      %v3501 = vsel %vm3493, %v3468, %v2856
      %v3502 = vsel %vm3493, %v3469, %v2858
      %v3503 = vsel %vm3493, %v3470, %v2860
      %v3504 = vsel %vm3493, %v3471, %v2862
      %v3505 = vsel %vm3493, %v3472, %v2864
      %v3506 = vsel %vm3493, %v3473, %v2866
      %v3507 = vsel %vm3493, %v3474, %v2868
      %v3508 = vsel %vm3493, %v3475, %v2870
      %v3509 = vsel %vm3493, %v3476, %v2872
      %v3510 = vsel %vm3493, %v3477, %v2874
      %v3511 = vsel %vm3493, %v3478, %v2876
      %v3512 = vsel %vm3493, %v3479, %v2878
      %v3513 = vsel %vm3493, %v3480, %v2880
      %v3514 = vsel %vm3493, %v3481, %v2882
      %v3515 = vsel %vm3493, %v3482, %v2884
      %v3516 = vsel %vm3493, %v3483, %v2886
      %v3517 = vsel %vm3493, %v3484, %v2888
      %v3518 = vsel %vm3493, %v3485, %v2890
      %v3519 = vsel %vm3493, %v3486, %v2892
      %v3520 = vsel %vm3493, %v3487, %v2894
      %v3521 = vsel %vm3493, %v3488, %v2896
      %v3522 = vsel %vm3493, %v3489, %v2898
      %v3523 = vsel %vm3493, %v3490, %v2900
      %v3524 = vsel %vm3493, %v3491, %v2902
      %v3525 = vsel %vm3493, %v3492, %v2904
      %vm3526 = vcmask 490496
      %v3527 = vsel %vm3526, %v3494, %v2970
      %v3528 = vsel %vm3526, %v3495, %v2972
      %v3529 = vsel %vm3526, %v3496, %v2974
      %v3530 = vsel %vm3526, %v3497, %v2976
      %v3531 = vsel %vm3526, %v3498, %v2978
      %v3532 = vsel %vm3526, %v3499, %v2980
      %v3533 = vsel %vm3526, %v3500, %v2982
      %v3534 = vsel %vm3526, %v3501, %v2984
      %v3535 = vsel %vm3526, %v3502, %v2986
      %v3536 = vsel %vm3526, %v3503, %v2988
      %v3537 = vsel %vm3526, %v3504, %v2990
      %v3538 = vsel %vm3526, %v3505, %v2992
      %v3539 = vsel %vm3526, %v3506, %v2994
      %v3540 = vsel %vm3526, %v3507, %v2996
      %v3541 = vsel %vm3526, %v3508, %v2998
      %v3542 = vsel %vm3526, %v3509, %v3000
      %v3543 = vsel %vm3526, %v3510, %v3002
      %v3544 = vsel %vm3526, %v3511, %v3004
      %v3545 = vsel %vm3526, %v3512, %v3006
      %v3546 = vsel %vm3526, %v3513, %v3008
      %v3547 = vsel %vm3526, %v3514, %v3010
      %v3548 = vsel %vm3526, %v3515, %v3012
      %v3549 = vsel %vm3526, %v3516, %v3014
      %v3550 = vsel %vm3526, %v3517, %v3016
      %v3551 = vsel %vm3526, %v3518, %v3018
      %v3552 = vsel %vm3526, %v3519, %v3020
      %v3553 = vsel %vm3526, %v3520, %v3022
      %v3554 = vsel %vm3526, %v3521, %v3024
      %v3555 = vsel %vm3526, %v3522, %v3026
      %v3556 = vsel %vm3526, %v3523, %v3028
      %v3557 = vsel %vm3526, %v3524, %v3030
      %v3558 = vsel %vm3526, %v3525, %v3032
      %3591 = vrot.lane.b32.xlu0 %v1113, 4
      %v3592 = vpop.permute.xlu0 %3591
      %3593 = vrot.lane.b32.xlu0 %v1114, 4
      %v3594 = vpop.permute.xlu0 %3593
      %3595 = vrot.lane.b32.xlu0 %v1115, 4
      %v3596 = vpop.permute.xlu0 %3595
      %3597 = vrot.lane.b32.xlu0 %v1116, 4
      %v3598 = vpop.permute.xlu0 %3597
      %3599 = vrot.lane.b32.xlu0 %v1117, 4
      %v3600 = vpop.permute.xlu0 %3599
      %3601 = vrot.lane.b32.xlu0 %v1118, 4
      %v3602 = vpop.permute.xlu0 %3601
      %3603 = vrot.lane.b32.xlu0 %v1119, 4
      %v3604 = vpop.permute.xlu0 %3603
      %3605 = vrot.lane.b32.xlu0 %v1120, 4
      %v3606 = vpop.permute.xlu0 %3605
      %3607 = vrot.lane.b32.xlu0 %v1121, 4
      %v3608 = vpop.permute.xlu0 %3607
      %3609 = vrot.lane.b32.xlu0 %v1122, 4
      %v3610 = vpop.permute.xlu0 %3609
      %3611 = vrot.lane.b32.xlu0 %v1123, 4
      %v3612 = vpop.permute.xlu0 %3611
      %3613 = vrot.lane.b32.xlu0 %v1124, 4
      %v3614 = vpop.permute.xlu0 %3613
      %3615 = vrot.lane.b32.xlu0 %v1125, 4
      %v3616 = vpop.permute.xlu0 %3615
      %3617 = vrot.lane.b32.xlu0 %v1126, 4
      %v3618 = vpop.permute.xlu0 %3617
      %3619 = vrot.lane.b32.xlu0 %v1127, 4
      %v3620 = vpop.permute.xlu0 %3619
      %3621 = vrot.lane.b32.xlu0 %v1128, 4
      %v3622 = vpop.permute.xlu0 %3621
      %3623 = vrot.lane.b32.xlu0 %v1129, 4
      %v3624 = vpop.permute.xlu0 %3623
      %3625 = vrot.lane.b32.xlu0 %v1130, 4
      %v3626 = vpop.permute.xlu0 %3625
      %3627 = vrot.lane.b32.xlu0 %v1131, 4
      %v3628 = vpop.permute.xlu0 %3627
      %3629 = vrot.lane.b32.xlu0 %v1132, 4
      %v3630 = vpop.permute.xlu0 %3629
      %3631 = vrot.lane.b32.xlu0 %v1133, 4
      %v3632 = vpop.permute.xlu0 %3631
      %3633 = vrot.lane.b32.xlu0 %v1134, 4
      %v3634 = vpop.permute.xlu0 %3633
      %3635 = vrot.lane.b32.xlu0 %v1135, 4
      %v3636 = vpop.permute.xlu0 %3635
      %3637 = vrot.lane.b32.xlu0 %v1136, 4
      %v3638 = vpop.permute.xlu0 %3637
      %3639 = vrot.lane.b32.xlu0 %v1137, 4
      %v3640 = vpop.permute.xlu0 %3639
      %3641 = vrot.lane.b32.xlu0 %v1138, 4
      %v3642 = vpop.permute.xlu0 %3641
      %3643 = vrot.lane.b32.xlu0 %v1139, 4
      %v3644 = vpop.permute.xlu0 %3643
      %3645 = vrot.lane.b32.xlu0 %v1140, 4
      %v3646 = vpop.permute.xlu0 %3645
      %3647 = vrot.lane.b32.xlu0 %v1141, 4
      %v3648 = vpop.permute.xlu0 %3647
      %3649 = vrot.lane.b32.xlu0 %v1142, 4
      %v3650 = vpop.permute.xlu0 %3649
      %3651 = vrot.lane.b32.xlu0 %v1143, 4
      %v3652 = vpop.permute.xlu0 %3651
      %3653 = vrot.lane.b32.xlu0 %v1144, 4
      %v3654 = vpop.permute.xlu0 %3653
      %v3687 = vsel %vm273, %v1081, %v3592
      %v3688 = vsel %vm273, %v1082, %v3594
      %v3689 = vsel %vm273, %v1083, %v3596
      %v3690 = vsel %vm273, %v1084, %v3598
      %v3691 = vsel %vm273, %v1085, %v3600
      %v3692 = vsel %vm273, %v1086, %v3602
      %v3693 = vsel %vm273, %v1087, %v3604
      %v3694 = vsel %vm273, %v1088, %v3606
      %v3695 = vsel %vm273, %v1089, %v3608
      %v3696 = vsel %vm273, %v1090, %v3610
      %v3697 = vsel %vm273, %v1091, %v3612
      %v3698 = vsel %vm273, %v1092, %v3614
      %v3699 = vsel %vm273, %v1093, %v3616
      %v3700 = vsel %vm273, %v1094, %v3618
      %v3701 = vsel %vm273, %v1095, %v3620
      %v3702 = vsel %vm273, %v1096, %v3622
      %v3703 = vsel %vm273, %v1097, %v3624
      %v3704 = vsel %vm273, %v1098, %v3626
      %v3705 = vsel %vm273, %v1099, %v3628
      %v3706 = vsel %vm273, %v1100, %v3630
      %v3707 = vsel %vm273, %v1101, %v3632
      %v3708 = vsel %vm273, %v1102, %v3634
      %v3709 = vsel %vm273, %v1103, %v3636
      %v3710 = vsel %vm273, %v1104, %v3638
      %v3711 = vsel %vm273, %v1105, %v3640
      %v3712 = vsel %vm273, %v1106, %v3642
      %v3713 = vsel %vm273, %v1107, %v3644
      %v3714 = vsel %vm273, %v1108, %v3646
      %v3715 = vsel %vm273, %v1109, %v3648
      %v3716 = vsel %vm273, %v1110, %v3650
      %v3717 = vsel %vm273, %v1111, %v3652
      %v3718 = vsel %vm273, %v1112, %v3654
      %3751 = vrot.lane.b32.xlu0 %v3687, 64
      %v3752 = vpop.permute.xlu0 %3751
      %3753 = vrot.lane.b32.xlu0 %v3688, 64
      %v3754 = vpop.permute.xlu0 %3753
      %3755 = vrot.lane.b32.xlu0 %v3689, 64
      %v3756 = vpop.permute.xlu0 %3755
      %3757 = vrot.lane.b32.xlu0 %v3690, 64
      %v3758 = vpop.permute.xlu0 %3757
      %3759 = vrot.lane.b32.xlu0 %v3691, 64
      %v3760 = vpop.permute.xlu0 %3759
      %3761 = vrot.lane.b32.xlu0 %v3692, 64
      %v3762 = vpop.permute.xlu0 %3761
      %3763 = vrot.lane.b32.xlu0 %v3693, 64
      %v3764 = vpop.permute.xlu0 %3763
      %3765 = vrot.lane.b32.xlu0 %v3694, 64
      %v3766 = vpop.permute.xlu0 %3765
      %3767 = vrot.lane.b32.xlu0 %v3695, 64
      %v3768 = vpop.permute.xlu0 %3767
      %3769 = vrot.lane.b32.xlu0 %v3696, 64
      %v3770 = vpop.permute.xlu0 %3769
      %3771 = vrot.lane.b32.xlu0 %v3697, 64
      %v3772 = vpop.permute.xlu0 %3771
      %3773 = vrot.lane.b32.xlu0 %v3698, 64
      %v3774 = vpop.permute.xlu0 %3773
      %3775 = vrot.lane.b32.xlu0 %v3699, 64
      %v3776 = vpop.permute.xlu0 %3775
      %3777 = vrot.lane.b32.xlu0 %v3700, 64
      %v3778 = vpop.permute.xlu0 %3777
      %3779 = vrot.lane.b32.xlu0 %v3701, 64
      %v3780 = vpop.permute.xlu0 %3779
      %3781 = vrot.lane.b32.xlu0 %v3702, 64
      %v3782 = vpop.permute.xlu0 %3781
      %3783 = vrot.lane.b32.xlu0 %v3703, 64
      %v3784 = vpop.permute.xlu0 %3783
      %3785 = vrot.lane.b32.xlu0 %v3704, 64
      %v3786 = vpop.permute.xlu0 %3785
      %3787 = vrot.lane.b32.xlu0 %v3705, 64
      %v3788 = vpop.permute.xlu0 %3787
      %3789 = vrot.lane.b32.xlu0 %v3706, 64
      %v3790 = vpop.permute.xlu0 %3789
      %3791 = vrot.lane.b32.xlu0 %v3707, 64
      %v3792 = vpop.permute.xlu0 %3791
      %3793 = vrot.lane.b32.xlu0 %v3708, 64
      %v3794 = vpop.permute.xlu0 %3793
      %3795 = vrot.lane.b32.xlu0 %v3709, 64
      %v3796 = vpop.permute.xlu0 %3795
      %3797 = vrot.lane.b32.xlu0 %v3710, 64
      %v3798 = vpop.permute.xlu0 %3797
      %3799 = vrot.lane.b32.xlu0 %v3711, 64
      %v3800 = vpop.permute.xlu0 %3799
      %3801 = vrot.lane.b32.xlu0 %v3712, 64
      %v3802 = vpop.permute.xlu0 %3801
      %3803 = vrot.lane.b32.xlu0 %v3713, 64
      %v3804 = vpop.permute.xlu0 %3803
      %3805 = vrot.lane.b32.xlu0 %v3714, 64
      %v3806 = vpop.permute.xlu0 %3805
      %3807 = vrot.lane.b32.xlu0 %v3715, 64
      %v3808 = vpop.permute.xlu0 %3807
      %3809 = vrot.lane.b32.xlu0 %v3716, 64
      %v3810 = vpop.permute.xlu0 %3809
      %3811 = vrot.lane.b32.xlu0 %v3717, 64
      %v3812 = vpop.permute.xlu0 %3811
      %3813 = vrot.lane.b32.xlu0 %v3718, 64
      %v3814 = vpop.permute.xlu0 %3813
      %vm3847 = vcmask 523264
      %v3848 = vsel %vm3847, %v3527, %v3752
      %v3849 = vsel %vm3847, %v3528, %v3754
      %v3850 = vsel %vm3847, %v3529, %v3756
      %v3851 = vsel %vm3847, %v3530, %v3758
      %v3852 = vsel %vm3847, %v3531, %v3760
      %v3853 = vsel %vm3847, %v3532, %v3762
      %v3854 = vsel %vm3847, %v3533, %v3764
      %v3855 = vsel %vm3847, %v3534, %v3766
      %v3856 = vsel %vm3847, %v3535, %v3768
      %v3857 = vsel %vm3847, %v3536, %v3770
      %v3858 = vsel %vm3847, %v3537, %v3772
      %v3859 = vsel %vm3847, %v3538, %v3774
      %v3860 = vsel %vm3847, %v3539, %v3776
      %v3861 = vsel %vm3847, %v3540, %v3778
      %v3862 = vsel %vm3847, %v3541, %v3780
      %v3863 = vsel %vm3847, %v3542, %v3782
      %v3864 = vsel %vm3847, %v3543, %v3784
      %v3865 = vsel %vm3847, %v3544, %v3786
      %v3866 = vsel %vm3847, %v3545, %v3788
      %v3867 = vsel %vm3847, %v3546, %v3790
      %v3868 = vsel %vm3847, %v3547, %v3792
      %v3869 = vsel %vm3847, %v3548, %v3794
      %v3870 = vsel %vm3847, %v3549, %v3796
      %v3871 = vsel %vm3847, %v3550, %v3798
      %v3872 = vsel %vm3847, %v3551, %v3800
      %v3873 = vsel %vm3847, %v3552, %v3802
      %v3874 = vsel %vm3847, %v3553, %v3804
      %v3875 = vsel %vm3847, %v3554, %v3806
      %v3876 = vsel %vm3847, %v3555, %v3808
      %v3877 = vsel %vm3847, %v3556, %v3810
      %v3878 = vsel %vm3847, %v3557, %v3812
      %v3879 = vsel %vm3847, %v3558, %v3814
      %v3880 = vld [vmem:[%s3] sm:$0x1]
      %v3882 = vlaneseq
      %v3883 = vshrl.u32 %v3882, 7
      %v3884 = vsub.s32 0, %v3883
      %v3885 = vrot.slane %v3880, %v3884
      %v3887 = vpack.c.bf16 %v3849, %v3848
      %v3888 = vpack.c.bf16 %v3851, %v3850
      %v3889 = vpack.c.bf16 %v3853, %v3852
      %v3890 = vpack.c.bf16 %v3855, %v3854
      %v3891 = vpack.c.bf16 %v3857, %v3856
      %v3892 = vpack.c.bf16 %v3859, %v3858
      %v3893 = vpack.c.bf16 %v3861, %v3860
      %v3894 = vpack.c.bf16 %v3863, %v3862
      %v3895 = vpack.c.bf16 %v3865, %v3864
      %v3896 = vpack.c.bf16 %v3867, %v3866
      %v3897 = vpack.c.bf16 %v3869, %v3868
      %v3898 = vpack.c.bf16 %v3871, %v3870
      %v3899 = vpack.c.bf16 %v3873, %v3872
      %v3900 = vpack.c.bf16 %v3875, %v3874
      %v3901 = vpack.c.bf16 %v3877, %v3876
      %v3902 = vpack.c.bf16 %v3879, %v3878
      %v3903 = vld [vmem:[%s2] sm:$0xf]
      %v3904 = vld [vmem:[%s2 + $0x4] sm:$0xf]
      %v3905 = vld [vmem:[%s2 + $0x8] sm:$0xf]
      %v3906 = vld [vmem:[%s2 + $0xc] sm:$0xf]
      %v3907 = vld [vmem:[%s2 + $0x10] sm:$0xf]
      %v3908 = vld [vmem:[%s2 + $0x14] sm:$0xf]
      %v3909 = vld [vmem:[%s2 + $0x18] sm:$0xf]
      %v3910 = vld [vmem:[%s2 + $0x1c] sm:$0xf]
      %v3911 = vld [vmem:[%s2 + $0x20] sm:$0xf]
      %v3921 = vunpack.c.l.b16 %v3903
      %v3922 = vunpack.c.l.b16 %v3904
      %v3923 = vunpack.c.l.b16 %v3905
      %v3924 = vunpack.c.l.b16 %v3906
      %v3925 = vunpack.c.l.b16 %v3907
      %v3926 = vunpack.c.l.b16 %v3908
      %v3927 = vunpack.c.l.b16 %v3909
      %v3928 = vunpack.c.l.b16 %v3910
      %v3929 = vunpack.c.l.b16 %v3911
      %v3930 = vpack.c.b16 %v3922, %v3921
      %v3931 = vpack.c.b16 %v3924, %v3923
      %v3932 = vpack.c.b16 %v3926, %v3925
      %v3933 = vpack.c.b16 %v3928, %v3927
      %v3934 = vpack.c.b16 %v3929, %v3929
      %vm3939 = vcmask 588800
      %v3941 = vsel %vm3939, %v3887, 0
      %v3944 = vsel %vm3939, %v3888, 0
      %v3947 = vsel %vm3939, %v3889, 0
      %v3950 = vsel %vm3939, %v3890, 0
      %v3953 = vsel %vm3939, %v3891, 0
      %v3956 = vsel %vm3939, %v3892, 0
      %v3959 = vsel %vm3939, %v3893, 0
      %v3962 = vsel %vm3939, %v3894, 0
      %v3965 = vsel %vm3939, %v3895, 0
      %v3968 = vsel %vm3939, %v3896, 0
      %v3971 = vsel %vm3939, %v3897, 0
      %v3974 = vsel %vm3939, %v3898, 0
      %v3977 = vsel %vm3939, %v3899, 0
      %v3980 = vsel %vm3939, %v3900, 0
      %v3983 = vsel %vm3939, %v3901, 0
      %v3986 = vsel %vm3939, %v3902, 0
      %vm3988 = vcmask 1043456
      %v3990 = vsel %vm3988, %v3934, 0
      %3992 = vmatprep.subr.bf16.mxu0 0
      %3993 = vmatpush1.bf16.msra.mxu0 %v3930
      %3994 = vmatprep.subr.bf16.mxu0 0
      %3995 = vmatpush1.bf16.msra.mxu0 %v3931
      %3996 = vmatprep.subr.bf16.mxu0 0
      %3997 = vmatpush1.bf16.msra.mxu0 %v3932
      %3998 = vmatprep.subr.bf16.mxu0 0
      %3999 = vmatpush1.bf16.msra.mxu0 %v3933
      %4000 = vmatprep.subr.bf16.mxu0 0
      %4001 = vmatpush1.bf16.msra.mxu0 %v3990
      %4002 = vmatprep.subr.bf16.mxu0 0
      %4003 = vmatpush1.bf16.msra.mxu0 0
      %4004 = vmatprep.subr.bf16.mxu0 0
      %4005 = vmatpush1.bf16.msra.mxu0 0
      %4006 = vmatprep.subr.bf16.mxu0 0
      %4007 = vmatpush1.bf16.msra.mxu0 0
      %4008 = vmatprep.subr.bf16.mxu0 0
      %4009 = vmatpush1.bf16.msra.mxu0 0
      %4010 = vmatprep.subr.bf16.mxu0 0
      %4011 = vmatpush1.bf16.msra.mxu0 0
      %4012 = vmatprep.subr.bf16.mxu0 0
      %4013 = vmatpush1.bf16.msra.mxu0 0
      %4014 = vmatprep.subr.bf16.mxu0 0
      %4015 = vmatpush1.bf16.msra.mxu0 0
      %4016 = vmatprep.subr.bf16.mxu0 0
      %4017 = vmatpush1.bf16.msra.mxu0 0
      %4018 = vmatprep.subr.bf16.mxu0 0
      %4019 = vmatpush1.bf16.msra.mxu0 0
      %4020 = vmatprep.subr.bf16.mxu0 0
      %4021 = vmatpush1.bf16.msra.mxu0 0
      %4022 = vmatprep.subr.bf16.mxu0 0
      %4023 = vmatpush1.bf16.msra.mxu0 0
      %4024 = vmatprep.mubr.bf16.mxu0 0
      %4025 = vmatmul.mubr.bf16.gmra.mrb[0].mxu0 %v3941
      %v4026 = vpop.f32.mrb[0].mxu0
      %v4027 = vadd.f32 0.0, %v4026
      %v4028 = vpop.f32.mrb[0].mxu0
      %v4029 = vpop.f32.mrb[0].mxu0
      %v4030 = vadd.f32 0.0, %v4029
      %v4031 = vpop.f32.mrb[0].mxu0
      %4032 = vmatprep.mubr.bf16.mxu0 0
      %4033 = vmatmul.mubr.bf16.gmra.mrb[0].mxu0 %v3944
      %v4034 = vpop.f32.mrb[0].mxu0
      %v4035 = vadd.f32 0.0, %v4034
      %v4036 = vpop.f32.mrb[0].mxu0
      %v4037 = vpop.f32.mrb[0].mxu0
      %v4038 = vadd.f32 0.0, %v4037
      %v4039 = vpop.f32.mrb[0].mxu0
      %4040 = vmatprep.mubr.bf16.mxu0 0
      %4041 = vmatmul.mubr.bf16.gmra.mrb[0].mxu0 %v3947
      %v4042 = vpop.f32.mrb[0].mxu0
      %v4043 = vadd.f32 0.0, %v4042
      %v4044 = vpop.f32.mrb[0].mxu0
      %v4045 = vpop.f32.mrb[0].mxu0
      %v4046 = vadd.f32 0.0, %v4045
      %v4047 = vpop.f32.mrb[0].mxu0
      %4048 = vmatprep.mubr.bf16.mxu0 0
      %4049 = vmatmul.mubr.bf16.gmra.mrb[0].mxu0 %v3950
      %v4050 = vpop.f32.mrb[0].mxu0
      %v4051 = vadd.f32 0.0, %v4050
      %v4052 = vpop.f32.mrb[0].mxu0
      %v4053 = vpop.f32.mrb[0].mxu0
      %v4054 = vadd.f32 0.0, %v4053
      %v4055 = vpop.f32.mrb[0].mxu0
      %4056 = vmatprep.mubr.bf16.mxu0 0
      %4057 = vmatmul.mubr.bf16.gmra.mrb[0].mxu0 %v3953
      %v4058 = vpop.f32.mrb[0].mxu0
      %v4059 = vadd.f32 0.0, %v4058
      %v4060 = vpop.f32.mrb[0].mxu0
      %v4061 = vpop.f32.mrb[0].mxu0
      %v4062 = vadd.f32 0.0, %v4061
      %v4063 = vpop.f32.mrb[0].mxu0
      %4064 = vmatprep.mubr.bf16.mxu0 0
      %4065 = vmatmul.mubr.bf16.gmra.mrb[0].mxu0 %v3956
      %v4066 = vpop.f32.mrb[0].mxu0
      %v4067 = vadd.f32 0.0, %v4066
      %v4068 = vpop.f32.mrb[0].mxu0
      %v4069 = vpop.f32.mrb[0].mxu0
      %v4070 = vadd.f32 0.0, %v4069
      %v4071 = vpop.f32.mrb[0].mxu0
      %4072 = vmatprep.mubr.bf16.mxu0 0
      %4073 = vmatmul.mubr.bf16.gmra.mrb[0].mxu0 %v3959
      %v4074 = vpop.f32.mrb[0].mxu0
      %v4075 = vadd.f32 0.0, %v4074
      %v4076 = vpop.f32.mrb[0].mxu0
      %v4077 = vpop.f32.mrb[0].mxu0
      %v4078 = vadd.f32 0.0, %v4077
      %v4079 = vpop.f32.mrb[0].mxu0
      %4080 = vmatprep.mubr.bf16.mxu0 0
      %4081 = vmatmul.mubr.bf16.gmra.mrb[0].mxu0 %v3962
      %v4082 = vpop.f32.mrb[0].mxu0
      %v4083 = vadd.f32 0.0, %v4082
      %v4084 = vpop.f32.mrb[0].mxu0
      %v4085 = vpop.f32.mrb[0].mxu0
      %v4086 = vadd.f32 0.0, %v4085
      %v4087 = vpop.f32.mrb[0].mxu0
      %4088 = vmatprep.mubr.bf16.mxu0 0
      %4089 = vmatmul.mubr.bf16.gmra.mrb[0].mxu0 %v3965
      %v4090 = vpop.f32.mrb[0].mxu0
      %v4091 = vadd.f32 0.0, %v4090
      %v4092 = vpop.f32.mrb[0].mxu0
      %v4093 = vpop.f32.mrb[0].mxu0
      %v4094 = vadd.f32 0.0, %v4093
      %v4095 = vpop.f32.mrb[0].mxu0
      %4096 = vmatprep.mubr.bf16.mxu0 0
      %4097 = vmatmul.mubr.bf16.gmra.mrb[0].mxu0 %v3968
      %v4098 = vpop.f32.mrb[0].mxu0
      %v4099 = vadd.f32 0.0, %v4098
      %v4100 = vpop.f32.mrb[0].mxu0
      %v4101 = vpop.f32.mrb[0].mxu0
      %v4102 = vadd.f32 0.0, %v4101
      %v4103 = vpop.f32.mrb[0].mxu0
      %4104 = vmatprep.mubr.bf16.mxu0 0
      %4105 = vmatmul.mubr.bf16.gmra.mrb[0].mxu0 %v3971
      %v4106 = vpop.f32.mrb[0].mxu0
      %v4107 = vadd.f32 0.0, %v4106
      %v4108 = vpop.f32.mrb[0].mxu0
      %v4109 = vpop.f32.mrb[0].mxu0
      %v4110 = vadd.f32 0.0, %v4109
      %v4111 = vpop.f32.mrb[0].mxu0
      %4112 = vmatprep.mubr.bf16.mxu0 0
      %4113 = vmatmul.mubr.bf16.gmra.mrb[0].mxu0 %v3974
      %v4114 = vpop.f32.mrb[0].mxu0
      %v4115 = vadd.f32 0.0, %v4114
      %v4116 = vpop.f32.mrb[0].mxu0
      %v4117 = vpop.f32.mrb[0].mxu0
      %v4118 = vadd.f32 0.0, %v4117
      %v4119 = vpop.f32.mrb[0].mxu0
      %4120 = vmatprep.mubr.bf16.mxu0 0
      %4121 = vmatmul.mubr.bf16.gmra.mrb[0].mxu0 %v3977
      %v4122 = vpop.f32.mrb[0].mxu0
      %v4123 = vadd.f32 0.0, %v4122
      %v4124 = vpop.f32.mrb[0].mxu0
      %v4125 = vpop.f32.mrb[0].mxu0
      %v4126 = vadd.f32 0.0, %v4125
      %v4127 = vpop.f32.mrb[0].mxu0
      %4128 = vmatprep.mubr.bf16.mxu0 0
      %4129 = vmatmul.mubr.bf16.gmra.mrb[0].mxu0 %v3980
      %v4130 = vpop.f32.mrb[0].mxu0
      %v4131 = vadd.f32 0.0, %v4130
      %v4132 = vpop.f32.mrb[0].mxu0
      %v4133 = vpop.f32.mrb[0].mxu0
      %v4134 = vadd.f32 0.0, %v4133
      %v4135 = vpop.f32.mrb[0].mxu0
      %4136 = vmatprep.mubr.bf16.mxu0 0
      %4137 = vmatmul.mubr.bf16.gmra.mrb[0].mxu0 %v3983
      %v4138 = vpop.f32.mrb[0].mxu0
      %v4139 = vadd.f32 0.0, %v4138
      %v4140 = vpop.f32.mrb[0].mxu0
      %v4141 = vpop.f32.mrb[0].mxu0
      %v4142 = vadd.f32 0.0, %v4141
      %v4143 = vpop.f32.mrb[0].mxu0
      %4144 = vmatprep.mubr.bf16.mxu0 0
      %4145 = vmatmul.mubr.bf16.gmra.mrb[0].mxu0 %v3986
      %v4146 = vpop.f32.mrb[0].mxu0
      %v4147 = vadd.f32 0.0, %v4146
      %v4148 = vpop.f32.mrb[0].mxu0
      %v4149 = vpop.f32.mrb[0].mxu0
      %v4150 = vadd.f32 0.0, %v4149
      %v4151 = vpop.f32.mrb[0].mxu0
      %4152 = vdwg.mxu0
      %v4153 = vadd.f32 %v3885, %v4027
      %v4154 = vadd.f32 %v3885, %v4030
      %v4155 = vadd.f32 %v3885, %v4035
      %v4156 = vadd.f32 %v3885, %v4038
      %v4157 = vadd.f32 %v3885, %v4043
      %v4158 = vadd.f32 %v3885, %v4046
      %v4159 = vadd.f32 %v3885, %v4051
      %v4160 = vadd.f32 %v3885, %v4054
      %v4161 = vadd.f32 %v3885, %v4059
      %v4162 = vadd.f32 %v3885, %v4062
      %v4163 = vadd.f32 %v3885, %v4067
      %v4164 = vadd.f32 %v3885, %v4070
      %v4165 = vadd.f32 %v3885, %v4075
      %v4166 = vadd.f32 %v3885, %v4078
      %v4167 = vadd.f32 %v3885, %v4083
      %v4168 = vadd.f32 %v3885, %v4086
      %v4169 = vadd.f32 %v3885, %v4091
      %v4170 = vadd.f32 %v3885, %v4094
      %v4171 = vadd.f32 %v3885, %v4099
      %v4172 = vadd.f32 %v3885, %v4102
      %v4173 = vadd.f32 %v3885, %v4107
      %v4174 = vadd.f32 %v3885, %v4110
      %v4175 = vadd.f32 %v3885, %v4115
      %v4176 = vadd.f32 %v3885, %v4118
      %v4177 = vadd.f32 %v3885, %v4123
      %v4178 = vadd.f32 %v3885, %v4126
      %v4179 = vadd.f32 %v3885, %v4131
      %v4180 = vadd.f32 %v3885, %v4134
      %v4181 = vadd.f32 %v3885, %v4139
      %v4182 = vadd.f32 %v3885, %v4142
      %v4183 = vadd.f32 %v3885, %v4147
      %v4184 = vadd.f32 %v3885, %v4150
      %v4185 = vmax.f32 %v4153, 0.0
      %v4186 = vmax.f32 %v4154, 0.0
      %v4187 = vmax.f32 %v4155, 0.0
      %v4188 = vmax.f32 %v4156, 0.0
      %v4189 = vmax.f32 %v4157, 0.0
      %v4190 = vmax.f32 %v4158, 0.0
      %v4191 = vmax.f32 %v4159, 0.0
      %v4192 = vmax.f32 %v4160, 0.0
      %v4193 = vmax.f32 %v4161, 0.0
      %v4194 = vmax.f32 %v4162, 0.0
      %v4195 = vmax.f32 %v4163, 0.0
      %v4196 = vmax.f32 %v4164, 0.0
      %v4197 = vmax.f32 %v4165, 0.0
      %v4198 = vmax.f32 %v4166, 0.0
      %v4199 = vmax.f32 %v4167, 0.0
      %v4200 = vmax.f32 %v4168, 0.0
      %v4201 = vmax.f32 %v4169, 0.0
      %v4202 = vmax.f32 %v4170, 0.0
      %v4203 = vmax.f32 %v4171, 0.0
      %v4204 = vmax.f32 %v4172, 0.0
      %v4205 = vmax.f32 %v4173, 0.0
      %v4206 = vmax.f32 %v4174, 0.0
      %v4207 = vmax.f32 %v4175, 0.0
      %v4208 = vmax.f32 %v4176, 0.0
      %v4209 = vmax.f32 %v4177, 0.0
      %v4210 = vmax.f32 %v4178, 0.0
      %v4211 = vmax.f32 %v4179, 0.0
      %v4212 = vmax.f32 %v4180, 0.0
      %v4213 = vmax.f32 %v4181, 0.0
      %v4214 = vmax.f32 %v4182, 0.0
      %v4215 = vmax.f32 %v4183, 0.0
      %v4216 = vmax.f32 %v4184, 0.0
      %v4217 = vmin.f32 %v4185, 6.0
      %v4218 = vmin.f32 %v4186, 6.0
      %v4219 = vmin.f32 %v4187, 6.0
      %v4220 = vmin.f32 %v4188, 6.0
      %v4221 = vmin.f32 %v4189, 6.0
      %v4222 = vmin.f32 %v4190, 6.0
      %v4223 = vmin.f32 %v4191, 6.0
      %v4224 = vmin.f32 %v4192, 6.0
      %v4225 = vmin.f32 %v4193, 6.0
      %v4226 = vmin.f32 %v4194, 6.0
      %v4227 = vmin.f32 %v4195, 6.0
      %v4228 = vmin.f32 %v4196, 6.0
      %v4229 = vmin.f32 %v4197, 6.0
      %v4230 = vmin.f32 %v4198, 6.0
      %v4231 = vmin.f32 %v4199, 6.0
      %v4232 = vmin.f32 %v4200, 6.0
      %v4233 = vmin.f32 %v4201, 6.0
      %v4234 = vmin.f32 %v4202, 6.0
      %v4235 = vmin.f32 %v4203, 6.0
      %v4236 = vmin.f32 %v4204, 6.0
      %v4237 = vmin.f32 %v4205, 6.0
      %v4238 = vmin.f32 %v4206, 6.0
      %v4239 = vmin.f32 %v4207, 6.0
      %v4240 = vmin.f32 %v4208, 6.0
      %v4241 = vmin.f32 %v4209, 6.0
      %v4242 = vmin.f32 %v4210, 6.0
      %v4243 = vmin.f32 %v4211, 6.0
      %v4244 = vmin.f32 %v4212, 6.0
      %v4245 = vmin.f32 %v4213, 6.0
      %v4246 = vmin.f32 %v4214, 6.0
      %v4247 = vmin.f32 %v4215, 6.0
      %v4248 = vmin.f32 %v4216, 6.0
      %s4249 = scalar_lea.vmem [#allocation4], 24
      %4250 = vst.msk [vmem:[%s4249 + $0x1] sm:$0xff] %vm273, %v4217
      %4251 = vst.msk [vmem:[%s4249 + $0x9] sm:$0xff] %vm273, %v4218
      %4252 = vst.msk [vmem:[%s4249 + $0x19] sm:$0xff] %vm273, %v4219
      %4253 = vst.msk [vmem:[%s4249 + $0x21] sm:$0xff] %vm273, %v4220
      %4254 = vst.msk [vmem:[%s4249 + $0x31] sm:$0xff] %vm273, %v4221
      %4255 = vst.msk [vmem:[%s4249 + $0x39] sm:$0xff] %vm273, %v4222
      %4256 = vst.msk [vmem:[%s4249 + $0x49] sm:$0xff] %vm273, %v4223
      %4257 = vst.msk [vmem:[%s4249 + $0x51] sm:$0xff] %vm273, %v4224
      %4258 = vst.msk [vmem:[%s4249 + $0x61] sm:$0xff] %vm273, %v4225
      %4259 = vst.msk [vmem:[%s4249 + $0x69] sm:$0xff] %vm273, %v4226
      %4260 = vst.msk [vmem:[%s4249 + $0x79] sm:$0xff] %vm273, %v4227
      %4261 = vst.msk [vmem:[%s4249 + $0x81] sm:$0xff] %vm273, %v4228
      %4262 = vst.msk [vmem:[%s4249 + $0x91] sm:$0xff] %vm273, %v4229
      %4263 = vst.msk [vmem:[%s4249 + $0x99] sm:$0xff] %vm273, %v4230
      %4264 = vst.msk [vmem:[%s4249 + $0xa9] sm:$0xff] %vm273, %v4231
      %4265 = vst.msk [vmem:[%s4249 + $0xb1] sm:$0xff] %vm273, %v4232
      %4266 = vst.msk [vmem:[%s4249 + $0xc1] sm:$0xff] %vm273, %v4233
      %4267 = vst.msk [vmem:[%s4249 + $0xc9] sm:$0xff] %vm273, %v4234
      %4268 = vst.msk [vmem:[%s4249 + $0xd9] sm:$0xff] %vm273, %v4235
      %4269 = vst.msk [vmem:[%s4249 + $0xe1] sm:$0xff] %vm273, %v4236
      %4270 = vst.msk [vmem:[%s4249 + $0xf1] sm:$0xff] %vm273, %v4237
      %4271 = vst.msk [vmem:[%s4249 + $0xf9] sm:$0xff] %vm273, %v4238
      %4272 = vst.msk [vmem:[%s4249 + $0x109] sm:$0xff] %vm273, %v4239
      %4273 = vst.msk [vmem:[%s4249 + $0x111] sm:$0xff] %vm273, %v4240
      %4274 = vst.msk [vmem:[%s4249 + $0x121] sm:$0xff] %vm273, %v4241
      %4275 = vst.msk [vmem:[%s4249 + $0x129] sm:$0xff] %vm273, %v4242
      %4276 = vst.msk [vmem:[%s4249 + $0x139] sm:$0xff] %vm273, %v4243
      %4277 = vst.msk [vmem:[%s4249 + $0x141] sm:$0xff] %vm273, %v4244
      %4278 = vst.msk [vmem:[%s4249 + $0x151] sm:$0xff] %vm273, %v4245
      %4279 = vst.msk [vmem:[%s4249 + $0x159] sm:$0xff] %vm273, %v4246
      %4280 = vst.msk [vmem:[%s4249 + $0x169] sm:$0xff] %vm273, %v4247
      %4281 = vst.msk [vmem:[%s4249 + $0x171] sm:$0xff] %vm273, %v4248
      %v4282 = vld [vmem:[#allocation4] sm:$0xff]
      %v4283 = vld [vmem:[#allocation4 + $0x8] sm:$0xff]
      %v4284 = vld [vmem:[#allocation4 + $0x18] sm:$0xff]
      %v4285 = vld [vmem:[#allocation4 + $0x20] sm:$0xff]
      %v4286 = vld [vmem:[#allocation4 + $0x30] sm:$0xff]
      %v4287 = vld [vmem:[#allocation4 + $0x38] sm:$0xff]
      %v4288 = vld [vmem:[#allocation4 + $0x48] sm:$0xff]
      %v4289 = vld [vmem:[#allocation4 + $0x50] sm:$0xff]
      %v4290 = vld [vmem:[#allocation4 + $0x60] sm:$0xff]
      %v4291 = vld [vmem:[#allocation4 + $0x68] sm:$0xff]
      %v4292 = vld [vmem:[#allocation4 + $0x78] sm:$0xff]
      %v4293 = vld [vmem:[#allocation4 + $0x80] sm:$0xff]
      %v4294 = vld [vmem:[#allocation4 + $0x90] sm:$0xff]
      %v4295 = vld [vmem:[#allocation4 + $0x98] sm:$0xff]
      %v4296 = vld [vmem:[#allocation4 + $0xa8] sm:$0xff]
      %v4297 = vld [vmem:[#allocation4 + $0xb0] sm:$0xff]
      %v4298 = vld [vmem:[#allocation4 + $0xc0] sm:$0xff]
      %v4299 = vld [vmem:[#allocation4 + $0xc8] sm:$0xff]
      %v4300 = vld [vmem:[#allocation4 + $0xd8] sm:$0xff]
      %v4301 = vld [vmem:[#allocation4 + $0xe0] sm:$0xff]
      %v4302 = vld [vmem:[#allocation4 + $0xf0] sm:$0xff]
      %v4303 = vld [vmem:[#allocation4 + $0xf8] sm:$0xff]
      %v4304 = vld [vmem:[#allocation4 + $0x108] sm:$0xff]
      %v4305 = vld [vmem:[#allocation4 + $0x110] sm:$0xff]
      %v4306 = vld [vmem:[#allocation4 + $0x120] sm:$0xff]
      %v4307 = vld [vmem:[#allocation4 + $0x128] sm:$0xff]
      %v4308 = vld [vmem:[#allocation4 + $0x138] sm:$0xff]
      %v4309 = vld [vmem:[#allocation4 + $0x140] sm:$0xff]
      %v4310 = vld [vmem:[#allocation4 + $0x150] sm:$0xff]
      %v4311 = vld [vmem:[#allocation4 + $0x158] sm:$0xff]
      %v4312 = vld [vmem:[#allocation4 + $0x168] sm:$0xff]
      %v4313 = vld [vmem:[#allocation4 + $0x170] sm:$0xff]
      %v4314 = vld [vmem:[#allocation4 + $0x1] sm:$0xff]
      %v4315 = vld [vmem:[#allocation4 + $0x9] sm:$0xff]
      %v4316 = vld [vmem:[#allocation4 + $0x19] sm:$0xff]
      %v4317 = vld [vmem:[#allocation4 + $0x21] sm:$0xff]
      %v4318 = vld [vmem:[#allocation4 + $0x31] sm:$0xff]
      %v4319 = vld [vmem:[#allocation4 + $0x39] sm:$0xff]
      %v4320 = vld [vmem:[#allocation4 + $0x49] sm:$0xff]
      %v4321 = vld [vmem:[#allocation4 + $0x51] sm:$0xff]
      %v4322 = vld [vmem:[#allocation4 + $0x61] sm:$0xff]
      %v4323 = vld [vmem:[#allocation4 + $0x69] sm:$0xff]
      %v4324 = vld [vmem:[#allocation4 + $0x79] sm:$0xff]
      %v4325 = vld [vmem:[#allocation4 + $0x81] sm:$0xff]
      %v4326 = vld [vmem:[#allocation4 + $0x91] sm:$0xff]
      %v4327 = vld [vmem:[#allocation4 + $0x99] sm:$0xff]
      %v4328 = vld [vmem:[#allocation4 + $0xa9] sm:$0xff]
      %v4329 = vld [vmem:[#allocation4 + $0xb1] sm:$0xff]
      %v4330 = vld [vmem:[#allocation4 + $0xc1] sm:$0xff]
      %v4331 = vld [vmem:[#allocation4 + $0xc9] sm:$0xff]
      %v4332 = vld [vmem:[#allocation4 + $0xd9] sm:$0xff]
      %v4333 = vld [vmem:[#allocation4 + $0xe1] sm:$0xff]
      %v4334 = vld [vmem:[#allocation4 + $0xf1] sm:$0xff]
      %v4335 = vld [vmem:[#allocation4 + $0xf9] sm:$0xff]
      %v4336 = vld [vmem:[#allocation4 + $0x109] sm:$0xff]
      %v4337 = vld [vmem:[#allocation4 + $0x111] sm:$0xff]
      %v4338 = vld [vmem:[#allocation4 + $0x121] sm:$0xff]
      %v4339 = vld [vmem:[#allocation4 + $0x129] sm:$0xff]
      %v4340 = vld [vmem:[#allocation4 + $0x139] sm:$0xff]
      %v4341 = vld [vmem:[#allocation4 + $0x141] sm:$0xff]
      %v4342 = vld [vmem:[#allocation4 + $0x151] sm:$0xff]
      %v4343 = vld [vmem:[#allocation4 + $0x159] sm:$0xff]
      %v4344 = vld [vmem:[#allocation4 + $0x169] sm:$0xff]
      %v4345 = vld [vmem:[#allocation4 + $0x171] sm:$0xff]
      %v4346 = vld [vmem:[#allocation4 + $0x2] sm:$0xff]
      %v4347 = vld [vmem:[#allocation4 + $0xa] sm:$0xff]
      %v4348 = vld [vmem:[#allocation4 + $0x1a] sm:$0xff]
      %v4349 = vld [vmem:[#allocation4 + $0x22] sm:$0xff]
      %v4350 = vld [vmem:[#allocation4 + $0x32] sm:$0xff]
      %v4351 = vld [vmem:[#allocation4 + $0x3a] sm:$0xff]
      %v4352 = vld [vmem:[#allocation4 + $0x4a] sm:$0xff]
      %v4353 = vld [vmem:[#allocation4 + $0x52] sm:$0xff]
      %v4354 = vld [vmem:[#allocation4 + $0x62] sm:$0xff]
      %v4355 = vld [vmem:[#allocation4 + $0x6a] sm:$0xff]
      %v4356 = vld [vmem:[#allocation4 + $0x7a] sm:$0xff]
      %v4357 = vld [vmem:[#allocation4 + $0x82] sm:$0xff]
      %v4358 = vld [vmem:[#allocation4 + $0x92] sm:$0xff]
      %v4359 = vld [vmem:[#allocation4 + $0x9a] sm:$0xff]
      %v4360 = vld [vmem:[#allocation4 + $0xaa] sm:$0xff]
      %v4361 = vld [vmem:[#allocation4 + $0xb2] sm:$0xff]
      %v4362 = vld [vmem:[#allocation4 + $0xc2] sm:$0xff]
      %v4363 = vld [vmem:[#allocation4 + $0xca] sm:$0xff]
      %v4364 = vld [vmem:[#allocation4 + $0xda] sm:$0xff]
      %v4365 = vld [vmem:[#allocation4 + $0xe2] sm:$0xff]
      %v4366 = vld [vmem:[#allocation4 + $0xf2] sm:$0xff]
      %v4367 = vld [vmem:[#allocation4 + $0xfa] sm:$0xff]
      %v4368 = vld [vmem:[#allocation4 + $0x10a] sm:$0xff]
      %v4369 = vld [vmem:[#allocation4 + $0x112] sm:$0xff]
      %v4370 = vld [vmem:[#allocation4 + $0x122] sm:$0xff]
      %v4371 = vld [vmem:[#allocation4 + $0x12a] sm:$0xff]
      %v4372 = vld [vmem:[#allocation4 + $0x13a] sm:$0xff]
      %v4373 = vld [vmem:[#allocation4 + $0x142] sm:$0xff]
      %v4374 = vld [vmem:[#allocation4 + $0x152] sm:$0xff]
      %v4375 = vld [vmem:[#allocation4 + $0x15a] sm:$0xff]
      %v4376 = vld [vmem:[#allocation4 + $0x16a] sm:$0xff]
      %v4377 = vld [vmem:[#allocation4 + $0x172] sm:$0xff]
      %v4378 = vld [vmem:[%s4249] sm:$0xff]
      %v4379 = vld [vmem:[%s4249 + $0x8] sm:$0xff]
      %v4380 = vld [vmem:[%s4249 + $0x18] sm:$0xff]
      %v4381 = vld [vmem:[%s4249 + $0x20] sm:$0xff]
      %v4382 = vld [vmem:[%s4249 + $0x30] sm:$0xff]
      %v4383 = vld [vmem:[%s4249 + $0x38] sm:$0xff]
      %v4384 = vld [vmem:[%s4249 + $0x48] sm:$0xff]
      %v4385 = vld [vmem:[%s4249 + $0x50] sm:$0xff]
      %v4386 = vld [vmem:[%s4249 + $0x60] sm:$0xff]
      %v4387 = vld [vmem:[%s4249 + $0x68] sm:$0xff]
      %v4388 = vld [vmem:[%s4249 + $0x78] sm:$0xff]
      %v4389 = vld [vmem:[%s4249 + $0x80] sm:$0xff]
      %v4390 = vld [vmem:[%s4249 + $0x90] sm:$0xff]
      %v4391 = vld [vmem:[%s4249 + $0x98] sm:$0xff]
      %v4392 = vld [vmem:[%s4249 + $0xa8] sm:$0xff]
      %v4393 = vld [vmem:[%s4249 + $0xb0] sm:$0xff]
      %v4394 = vld [vmem:[%s4249 + $0xc0] sm:$0xff]
      %v4395 = vld [vmem:[%s4249 + $0xc8] sm:$0xff]
      %v4396 = vld [vmem:[%s4249 + $0xd8] sm:$0xff]
      %v4397 = vld [vmem:[%s4249 + $0xe0] sm:$0xff]
      %v4398 = vld [vmem:[%s4249 + $0xf0] sm:$0xff]
      %v4399 = vld [vmem:[%s4249 + $0xf8] sm:$0xff]
      %v4400 = vld [vmem:[%s4249 + $0x108] sm:$0xff]
      %v4401 = vld [vmem:[%s4249 + $0x110] sm:$0xff]
      %v4402 = vld [vmem:[%s4249 + $0x120] sm:$0xff]
      %v4403 = vld [vmem:[%s4249 + $0x128] sm:$0xff]
      %v4404 = vld [vmem:[%s4249 + $0x138] sm:$0xff]
      %v4405 = vld [vmem:[%s4249 + $0x140] sm:$0xff]
      %v4406 = vld [vmem:[%s4249 + $0x150] sm:$0xff]
      %v4407 = vld [vmem:[%s4249 + $0x158] sm:$0xff]
      %v4408 = vld [vmem:[%s4249 + $0x168] sm:$0xff]
      %v4409 = vld [vmem:[%s4249 + $0x170] sm:$0xff]
      %v4410 = vld [vmem:[%s4249 + $0x1] sm:$0xff]
      %v4411 = vld [vmem:[%s4249 + $0x9] sm:$0xff]
      %v4412 = vld [vmem:[%s4249 + $0x19] sm:$0xff]
      %v4413 = vld [vmem:[%s4249 + $0x21] sm:$0xff]
      %v4414 = vld [vmem:[%s4249 + $0x31] sm:$0xff]
      %v4415 = vld [vmem:[%s4249 + $0x39] sm:$0xff]
      %v4416 = vld [vmem:[%s4249 + $0x49] sm:$0xff]
      %v4417 = vld [vmem:[%s4249 + $0x51] sm:$0xff]
      %v4418 = vld [vmem:[%s4249 + $0x61] sm:$0xff]
      %v4419 = vld [vmem:[%s4249 + $0x69] sm:$0xff]
      %v4420 = vld [vmem:[%s4249 + $0x79] sm:$0xff]
      %v4421 = vld [vmem:[%s4249 + $0x81] sm:$0xff]
      %v4422 = vld [vmem:[%s4249 + $0x91] sm:$0xff]
      %v4423 = vld [vmem:[%s4249 + $0x99] sm:$0xff]
      %v4424 = vld [vmem:[%s4249 + $0xa9] sm:$0xff]
      %v4425 = vld [vmem:[%s4249 + $0xb1] sm:$0xff]
      %v4426 = vld [vmem:[%s4249 + $0xc1] sm:$0xff]
      %v4427 = vld [vmem:[%s4249 + $0xc9] sm:$0xff]
      %v4428 = vld [vmem:[%s4249 + $0xd9] sm:$0xff]
      %v4429 = vld [vmem:[%s4249 + $0xe1] sm:$0xff]
      %v4430 = vld [vmem:[%s4249 + $0xf1] sm:$0xff]
      %v4431 = vld [vmem:[%s4249 + $0xf9] sm:$0xff]
      %v4432 = vld [vmem:[%s4249 + $0x109] sm:$0xff]
      %v4433 = vld [vmem:[%s4249 + $0x111] sm:$0xff]
      %v4434 = vld [vmem:[%s4249 + $0x121] sm:$0xff]
      %v4435 = vld [vmem:[%s4249 + $0x129] sm:$0xff]
      %v4436 = vld [vmem:[%s4249 + $0x139] sm:$0xff]
      %v4437 = vld [vmem:[%s4249 + $0x141] sm:$0xff]
      %v4438 = vld [vmem:[%s4249 + $0x151] sm:$0xff]
      %v4439 = vld [vmem:[%s4249 + $0x159] sm:$0xff]
      %v4440 = vld [vmem:[%s4249 + $0x169] sm:$0xff]
      %v4441 = vld [vmem:[%s4249 + $0x171] sm:$0xff]
      %v4442 = vld [vmem:[%s4249 + $0x2] sm:$0xff]
      %v4443 = vld [vmem:[%s4249 + $0xa] sm:$0xff]
      %v4444 = vld [vmem:[%s4249 + $0x1a] sm:$0xff]
      %v4445 = vld [vmem:[%s4249 + $0x22] sm:$0xff]
      %v4446 = vld [vmem:[%s4249 + $0x32] sm:$0xff]
      %v4447 = vld [vmem:[%s4249 + $0x3a] sm:$0xff]
      %v4448 = vld [vmem:[%s4249 + $0x4a] sm:$0xff]
      %v4449 = vld [vmem:[%s4249 + $0x52] sm:$0xff]
      %v4450 = vld [vmem:[%s4249 + $0x62] sm:$0xff]
      %v4451 = vld [vmem:[%s4249 + $0x6a] sm:$0xff]
      %v4452 = vld [vmem:[%s4249 + $0x7a] sm:$0xff]
      %v4453 = vld [vmem:[%s4249 + $0x82] sm:$0xff]
      %v4454 = vld [vmem:[%s4249 + $0x92] sm:$0xff]
      %v4455 = vld [vmem:[%s4249 + $0x9a] sm:$0xff]
      %v4456 = vld [vmem:[%s4249 + $0xaa] sm:$0xff]
      %v4457 = vld [vmem:[%s4249 + $0xb2] sm:$0xff]
      %v4458 = vld [vmem:[%s4249 + $0xc2] sm:$0xff]
      %v4459 = vld [vmem:[%s4249 + $0xca] sm:$0xff]
      %v4460 = vld [vmem:[%s4249 + $0xda] sm:$0xff]
      %v4461 = vld [vmem:[%s4249 + $0xe2] sm:$0xff]
      %v4462 = vld [vmem:[%s4249 + $0xf2] sm:$0xff]
      %v4463 = vld [vmem:[%s4249 + $0xfa] sm:$0xff]
      %v4464 = vld [vmem:[%s4249 + $0x10a] sm:$0xff]
      %v4465 = vld [vmem:[%s4249 + $0x112] sm:$0xff]
      %v4466 = vld [vmem:[%s4249 + $0x122] sm:$0xff]
      %v4467 = vld [vmem:[%s4249 + $0x12a] sm:$0xff]
      %v4468 = vld [vmem:[%s4249 + $0x13a] sm:$0xff]
      %v4469 = vld [vmem:[%s4249 + $0x142] sm:$0xff]
      %v4470 = vld [vmem:[%s4249 + $0x152] sm:$0xff]
      %v4471 = vld [vmem:[%s4249 + $0x15a] sm:$0xff]
      %v4472 = vld [vmem:[%s4249 + $0x16a] sm:$0xff]
      %v4473 = vld [vmem:[%s4249 + $0x172] sm:$0xff]
      %s4474 = scalar_lea.vmem [#allocation4], 48
      %v4475 = vld [vmem:[%s4474] sm:$0xff]
      %v4476 = vld [vmem:[%s4474 + $0x8] sm:$0xff]
      %v4477 = vld [vmem:[%s4474 + $0x18] sm:$0xff]
      %v4478 = vld [vmem:[%s4474 + $0x20] sm:$0xff]
      %v4479 = vld [vmem:[%s4474 + $0x30] sm:$0xff]
      %v4480 = vld [vmem:[%s4474 + $0x38] sm:$0xff]
      %v4481 = vld [vmem:[%s4474 + $0x48] sm:$0xff]
      %v4482 = vld [vmem:[%s4474 + $0x50] sm:$0xff]
      %v4483 = vld [vmem:[%s4474 + $0x60] sm:$0xff]
      %v4484 = vld [vmem:[%s4474 + $0x68] sm:$0xff]
      %v4485 = vld [vmem:[%s4474 + $0x78] sm:$0xff]
      %v4486 = vld [vmem:[%s4474 + $0x80] sm:$0xff]
      %v4487 = vld [vmem:[%s4474 + $0x90] sm:$0xff]
      %v4488 = vld [vmem:[%s4474 + $0x98] sm:$0xff]
      %v4489 = vld [vmem:[%s4474 + $0xa8] sm:$0xff]
      %v4490 = vld [vmem:[%s4474 + $0xb0] sm:$0xff]
      %v4491 = vld [vmem:[%s4474 + $0xc0] sm:$0xff]
      %v4492 = vld [vmem:[%s4474 + $0xc8] sm:$0xff]
      %v4493 = vld [vmem:[%s4474 + $0xd8] sm:$0xff]
      %v4494 = vld [vmem:[%s4474 + $0xe0] sm:$0xff]
      %v4495 = vld [vmem:[%s4474 + $0xf0] sm:$0xff]
      %v4496 = vld [vmem:[%s4474 + $0xf8] sm:$0xff]
      %v4497 = vld [vmem:[%s4474 + $0x108] sm:$0xff]
      %v4498 = vld [vmem:[%s4474 + $0x110] sm:$0xff]
      %v4499 = vld [vmem:[%s4474 + $0x120] sm:$0xff]
      %v4500 = vld [vmem:[%s4474 + $0x128] sm:$0xff]
      %v4501 = vld [vmem:[%s4474 + $0x138] sm:$0xff]
      %v4502 = vld [vmem:[%s4474 + $0x140] sm:$0xff]
      %v4503 = vld [vmem:[%s4474 + $0x150] sm:$0xff]
      %v4504 = vld [vmem:[%s4474 + $0x158] sm:$0xff]
      %v4505 = vld [vmem:[%s4474 + $0x168] sm:$0xff]
      %v4506 = vld [vmem:[%s4474 + $0x170] sm:$0xff]
      %v4507 = vld [vmem:[%s4474 + $0x1] sm:$0xff]
      %v4508 = vld [vmem:[%s4474 + $0x9] sm:$0xff]
      %v4509 = vld [vmem:[%s4474 + $0x19] sm:$0xff]
      %v4510 = vld [vmem:[%s4474 + $0x21] sm:$0xff]
      %v4511 = vld [vmem:[%s4474 + $0x31] sm:$0xff]
      %v4512 = vld [vmem:[%s4474 + $0x39] sm:$0xff]
      %v4513 = vld [vmem:[%s4474 + $0x49] sm:$0xff]
      %v4514 = vld [vmem:[%s4474 + $0x51] sm:$0xff]
      %v4515 = vld [vmem:[%s4474 + $0x61] sm:$0xff]
      %v4516 = vld [vmem:[%s4474 + $0x69] sm:$0xff]
      %v4517 = vld [vmem:[%s4474 + $0x79] sm:$0xff]
      %v4518 = vld [vmem:[%s4474 + $0x81] sm:$0xff]
      %v4519 = vld [vmem:[%s4474 + $0x91] sm:$0xff]
      %v4520 = vld [vmem:[%s4474 + $0x99] sm:$0xff]
      %v4521 = vld [vmem:[%s4474 + $0xa9] sm:$0xff]
      %v4522 = vld [vmem:[%s4474 + $0xb1] sm:$0xff]
      %v4523 = vld [vmem:[%s4474 + $0xc1] sm:$0xff]
      %v4524 = vld [vmem:[%s4474 + $0xc9] sm:$0xff]
      %v4525 = vld [vmem:[%s4474 + $0xd9] sm:$0xff]
      %v4526 = vld [vmem:[%s4474 + $0xe1] sm:$0xff]
      %v4527 = vld [vmem:[%s4474 + $0xf1] sm:$0xff]
      %v4528 = vld [vmem:[%s4474 + $0xf9] sm:$0xff]
      %v4529 = vld [vmem:[%s4474 + $0x109] sm:$0xff]
      %v4530 = vld [vmem:[%s4474 + $0x111] sm:$0xff]
      %v4531 = vld [vmem:[%s4474 + $0x121] sm:$0xff]
      %v4532 = vld [vmem:[%s4474 + $0x129] sm:$0xff]
      %v4533 = vld [vmem:[%s4474 + $0x139] sm:$0xff]
      %v4534 = vld [vmem:[%s4474 + $0x141] sm:$0xff]
      %v4535 = vld [vmem:[%s4474 + $0x151] sm:$0xff]
      %v4536 = vld [vmem:[%s4474 + $0x159] sm:$0xff]
      %v4537 = vld [vmem:[%s4474 + $0x169] sm:$0xff]
      %v4538 = vld [vmem:[%s4474 + $0x171] sm:$0xff]
      %v4539 = vld [vmem:[%s4474 + $0x2] sm:$0xff]
      %v4540 = vld [vmem:[%s4474 + $0xa] sm:$0xff]
      %v4541 = vld [vmem:[%s4474 + $0x1a] sm:$0xff]
      %v4542 = vld [vmem:[%s4474 + $0x22] sm:$0xff]
      %v4543 = vld [vmem:[%s4474 + $0x32] sm:$0xff]
      %v4544 = vld [vmem:[%s4474 + $0x3a] sm:$0xff]
      %v4545 = vld [vmem:[%s4474 + $0x4a] sm:$0xff]
      %v4546 = vld [vmem:[%s4474 + $0x52] sm:$0xff]
      %v4547 = vld [vmem:[%s4474 + $0x62] sm:$0xff]
      %v4548 = vld [vmem:[%s4474 + $0x6a] sm:$0xff]
      %v4549 = vld [vmem:[%s4474 + $0x7a] sm:$0xff]
      %v4550 = vld [vmem:[%s4474 + $0x82] sm:$0xff]
      %v4551 = vld [vmem:[%s4474 + $0x92] sm:$0xff]
      %v4552 = vld [vmem:[%s4474 + $0x9a] sm:$0xff]
      %v4553 = vld [vmem:[%s4474 + $0xaa] sm:$0xff]
      %v4554 = vld [vmem:[%s4474 + $0xb2] sm:$0xff]
      %v4555 = vld [vmem:[%s4474 + $0xc2] sm:$0xff]
      %v4556 = vld [vmem:[%s4474 + $0xca] sm:$0xff]
      %v4557 = vld [vmem:[%s4474 + $0xda] sm:$0xff]
      %v4558 = vld [vmem:[%s4474 + $0xe2] sm:$0xff]
      %v4559 = vld [vmem:[%s4474 + $0xf2] sm:$0xff]
      %v4560 = vld [vmem:[%s4474 + $0xfa] sm:$0xff]
      %v4561 = vld [vmem:[%s4474 + $0x10a] sm:$0xff]
      %v4562 = vld [vmem:[%s4474 + $0x112] sm:$0xff]
      %v4563 = vld [vmem:[%s4474 + $0x122] sm:$0xff]
      %v4564 = vld [vmem:[%s4474 + $0x12a] sm:$0xff]
      %v4565 = vld [vmem:[%s4474 + $0x13a] sm:$0xff]
      %v4566 = vld [vmem:[%s4474 + $0x142] sm:$0xff]
      %v4567 = vld [vmem:[%s4474 + $0x152] sm:$0xff]
      %v4568 = vld [vmem:[%s4474 + $0x15a] sm:$0xff]
      %v4569 = vld [vmem:[%s4474 + $0x16a] sm:$0xff]
      %v4570 = vld [vmem:[%s4474 + $0x172] sm:$0xff]
      %4603 = vrot.lane.b32.xlu0 %v4314, 4
      %v4604 = vpop.permute.xlu0 %4603
      %4605 = vrot.lane.b32.xlu0 %v4315, 4
      %v4606 = vpop.permute.xlu0 %4605
      %4607 = vrot.lane.b32.xlu0 %v4316, 4
      %v4608 = vpop.permute.xlu0 %4607
      %4609 = vrot.lane.b32.xlu0 %v4317, 4
      %v4610 = vpop.permute.xlu0 %4609
      %4611 = vrot.lane.b32.xlu0 %v4318, 4
      %v4612 = vpop.permute.xlu0 %4611
      %4613 = vrot.lane.b32.xlu0 %v4319, 4
      %v4614 = vpop.permute.xlu0 %4613
      %4615 = vrot.lane.b32.xlu0 %v4320, 4
      %v4616 = vpop.permute.xlu0 %4615
      %4617 = vrot.lane.b32.xlu0 %v4321, 4
      %v4618 = vpop.permute.xlu0 %4617
      %4619 = vrot.lane.b32.xlu0 %v4322, 4
      %v4620 = vpop.permute.xlu0 %4619
      %4621 = vrot.lane.b32.xlu0 %v4323, 4
      %v4622 = vpop.permute.xlu0 %4621
      %4623 = vrot.lane.b32.xlu0 %v4324, 4
      %v4624 = vpop.permute.xlu0 %4623
      %4625 = vrot.lane.b32.xlu0 %v4325, 4
      %v4626 = vpop.permute.xlu0 %4625
      %4627 = vrot.lane.b32.xlu0 %v4326, 4
      %v4628 = vpop.permute.xlu0 %4627
      %4629 = vrot.lane.b32.xlu0 %v4327, 4
      %v4630 = vpop.permute.xlu0 %4629
      %4631 = vrot.lane.b32.xlu0 %v4328, 4
      %v4632 = vpop.permute.xlu0 %4631
      %4633 = vrot.lane.b32.xlu0 %v4329, 4
      %v4634 = vpop.permute.xlu0 %4633
      %4635 = vrot.lane.b32.xlu0 %v4330, 4
      %v4636 = vpop.permute.xlu0 %4635
      %4637 = vrot.lane.b32.xlu0 %v4331, 4
      %v4638 = vpop.permute.xlu0 %4637
      %4639 = vrot.lane.b32.xlu0 %v4332, 4
      %v4640 = vpop.permute.xlu0 %4639
      %4641 = vrot.lane.b32.xlu0 %v4333, 4
      %v4642 = vpop.permute.xlu0 %4641
      %4643 = vrot.lane.b32.xlu0 %v4334, 4
      %v4644 = vpop.permute.xlu0 %4643
      %4645 = vrot.lane.b32.xlu0 %v4335, 4
      %v4646 = vpop.permute.xlu0 %4645
      %4647 = vrot.lane.b32.xlu0 %v4336, 4
      %v4648 = vpop.permute.xlu0 %4647
      %4649 = vrot.lane.b32.xlu0 %v4337, 4
      %v4650 = vpop.permute.xlu0 %4649
      %4651 = vrot.lane.b32.xlu0 %v4338, 4
      %v4652 = vpop.permute.xlu0 %4651
      %4653 = vrot.lane.b32.xlu0 %v4339, 4
      %v4654 = vpop.permute.xlu0 %4653
      %4655 = vrot.lane.b32.xlu0 %v4340, 4
      %v4656 = vpop.permute.xlu0 %4655
      %4657 = vrot.lane.b32.xlu0 %v4341, 4
      %v4658 = vpop.permute.xlu0 %4657
      %4659 = vrot.lane.b32.xlu0 %v4342, 4
      %v4660 = vpop.permute.xlu0 %4659
      %4661 = vrot.lane.b32.xlu0 %v4343, 4
      %v4662 = vpop.permute.xlu0 %4661
      %4663 = vrot.lane.b32.xlu0 %v4344, 4
      %v4664 = vpop.permute.xlu0 %4663
      %4665 = vrot.lane.b32.xlu0 %v4345, 4
      %v4666 = vpop.permute.xlu0 %4665
      %4731 = vrot.lane.b32.xlu0 %v4346, 8
      %v4732 = vpop.permute.xlu0 %4731
      %4733 = vrot.lane.b32.xlu0 %v4347, 8
      %v4734 = vpop.permute.xlu0 %4733
      %4735 = vrot.lane.b32.xlu0 %v4348, 8
      %v4736 = vpop.permute.xlu0 %4735
      %4737 = vrot.lane.b32.xlu0 %v4349, 8
      %v4738 = vpop.permute.xlu0 %4737
      %4739 = vrot.lane.b32.xlu0 %v4350, 8
      %v4740 = vpop.permute.xlu0 %4739
      %4741 = vrot.lane.b32.xlu0 %v4351, 8
      %v4742 = vpop.permute.xlu0 %4741
      %4743 = vrot.lane.b32.xlu0 %v4352, 8
      %v4744 = vpop.permute.xlu0 %4743
      %4745 = vrot.lane.b32.xlu0 %v4353, 8
      %v4746 = vpop.permute.xlu0 %4745
      %4747 = vrot.lane.b32.xlu0 %v4354, 8
      %v4748 = vpop.permute.xlu0 %4747
      %4749 = vrot.lane.b32.xlu0 %v4355, 8
      %v4750 = vpop.permute.xlu0 %4749
      %4751 = vrot.lane.b32.xlu0 %v4356, 8
      %v4752 = vpop.permute.xlu0 %4751
      %4753 = vrot.lane.b32.xlu0 %v4357, 8
      %v4754 = vpop.permute.xlu0 %4753
      %4755 = vrot.lane.b32.xlu0 %v4358, 8
      %v4756 = vpop.permute.xlu0 %4755
      %4757 = vrot.lane.b32.xlu0 %v4359, 8
      %v4758 = vpop.permute.xlu0 %4757
      %4759 = vrot.lane.b32.xlu0 %v4360, 8
      %v4760 = vpop.permute.xlu0 %4759
      %4761 = vrot.lane.b32.xlu0 %v4361, 8
      %v4762 = vpop.permute.xlu0 %4761
      %4763 = vrot.lane.b32.xlu0 %v4362, 8
      %v4764 = vpop.permute.xlu0 %4763
      %4765 = vrot.lane.b32.xlu0 %v4363, 8
      %v4766 = vpop.permute.xlu0 %4765
      %4767 = vrot.lane.b32.xlu0 %v4364, 8
      %v4768 = vpop.permute.xlu0 %4767
      %4769 = vrot.lane.b32.xlu0 %v4365, 8
      %v4770 = vpop.permute.xlu0 %4769
      %4771 = vrot.lane.b32.xlu0 %v4366, 8
      %v4772 = vpop.permute.xlu0 %4771
      %4773 = vrot.lane.b32.xlu0 %v4367, 8
      %v4774 = vpop.permute.xlu0 %4773
      %4775 = vrot.lane.b32.xlu0 %v4368, 8
      %v4776 = vpop.permute.xlu0 %4775
      %4777 = vrot.lane.b32.xlu0 %v4369, 8
      %v4778 = vpop.permute.xlu0 %4777
      %4779 = vrot.lane.b32.xlu0 %v4370, 8
      %v4780 = vpop.permute.xlu0 %4779
      %4781 = vrot.lane.b32.xlu0 %v4371, 8
      %v4782 = vpop.permute.xlu0 %4781
      %4783 = vrot.lane.b32.xlu0 %v4372, 8
      %v4784 = vpop.permute.xlu0 %4783
      %4785 = vrot.lane.b32.xlu0 %v4373, 8
      %v4786 = vpop.permute.xlu0 %4785
      %4787 = vrot.lane.b32.xlu0 %v4374, 8
      %v4788 = vpop.permute.xlu0 %4787
      %4789 = vrot.lane.b32.xlu0 %v4375, 8
      %v4790 = vpop.permute.xlu0 %4789
      %4791 = vrot.lane.b32.xlu0 %v4376, 8
      %v4792 = vpop.permute.xlu0 %4791
      %4793 = vrot.lane.b32.xlu0 %v4377, 8
      %v4794 = vpop.permute.xlu0 %4793
      %4859 = vrot.lane.b32.xlu0 %v4378, 12
      %v4860 = vpop.permute.xlu0 %4859
      %4861 = vrot.lane.b32.xlu0 %v4379, 12
      %v4862 = vpop.permute.xlu0 %4861
      %4863 = vrot.lane.b32.xlu0 %v4380, 12
      %v4864 = vpop.permute.xlu0 %4863
      %4865 = vrot.lane.b32.xlu0 %v4381, 12
      %v4866 = vpop.permute.xlu0 %4865
      %4867 = vrot.lane.b32.xlu0 %v4382, 12
      %v4868 = vpop.permute.xlu0 %4867
      %4869 = vrot.lane.b32.xlu0 %v4383, 12
      %v4870 = vpop.permute.xlu0 %4869
      %4871 = vrot.lane.b32.xlu0 %v4384, 12
      %v4872 = vpop.permute.xlu0 %4871
      %4873 = vrot.lane.b32.xlu0 %v4385, 12
      %v4874 = vpop.permute.xlu0 %4873
      %4875 = vrot.lane.b32.xlu0 %v4386, 12
      %v4876 = vpop.permute.xlu0 %4875
      %4877 = vrot.lane.b32.xlu0 %v4387, 12
      %v4878 = vpop.permute.xlu0 %4877
      %4879 = vrot.lane.b32.xlu0 %v4388, 12
      %v4880 = vpop.permute.xlu0 %4879
      %4881 = vrot.lane.b32.xlu0 %v4389, 12
      %v4882 = vpop.permute.xlu0 %4881
      %4883 = vrot.lane.b32.xlu0 %v4390, 12
      %v4884 = vpop.permute.xlu0 %4883
      %4885 = vrot.lane.b32.xlu0 %v4391, 12
      %v4886 = vpop.permute.xlu0 %4885
      %4887 = vrot.lane.b32.xlu0 %v4392, 12
      %v4888 = vpop.permute.xlu0 %4887
      %4889 = vrot.lane.b32.xlu0 %v4393, 12
      %v4890 = vpop.permute.xlu0 %4889
      %4891 = vrot.lane.b32.xlu0 %v4394, 12
      %v4892 = vpop.permute.xlu0 %4891
      %4893 = vrot.lane.b32.xlu0 %v4395, 12
      %v4894 = vpop.permute.xlu0 %4893
      %4895 = vrot.lane.b32.xlu0 %v4396, 12
      %v4896 = vpop.permute.xlu0 %4895
      %4897 = vrot.lane.b32.xlu0 %v4397, 12
      %v4898 = vpop.permute.xlu0 %4897
      %4899 = vrot.lane.b32.xlu0 %v4398, 12
      %v4900 = vpop.permute.xlu0 %4899
      %4901 = vrot.lane.b32.xlu0 %v4399, 12
      %v4902 = vpop.permute.xlu0 %4901
      %4903 = vrot.lane.b32.xlu0 %v4400, 12
      %v4904 = vpop.permute.xlu0 %4903
      %4905 = vrot.lane.b32.xlu0 %v4401, 12
      %v4906 = vpop.permute.xlu0 %4905
      %4907 = vrot.lane.b32.xlu0 %v4402, 12
      %v4908 = vpop.permute.xlu0 %4907
      %4909 = vrot.lane.b32.xlu0 %v4403, 12
      %v4910 = vpop.permute.xlu0 %4909
      %4911 = vrot.lane.b32.xlu0 %v4404, 12
      %v4912 = vpop.permute.xlu0 %4911
      %4913 = vrot.lane.b32.xlu0 %v4405, 12
      %v4914 = vpop.permute.xlu0 %4913
      %4915 = vrot.lane.b32.xlu0 %v4406, 12
      %v4916 = vpop.permute.xlu0 %4915
      %4917 = vrot.lane.b32.xlu0 %v4407, 12
      %v4918 = vpop.permute.xlu0 %4917
      %4919 = vrot.lane.b32.xlu0 %v4408, 12
      %v4920 = vpop.permute.xlu0 %4919
      %4921 = vrot.lane.b32.xlu0 %v4409, 12
      %v4922 = vpop.permute.xlu0 %4921
      %4987 = vrot.lane.b32.xlu0 %v4410, 16
      %v4988 = vpop.permute.xlu0 %4987
      %4989 = vrot.lane.b32.xlu0 %v4411, 16
      %v4990 = vpop.permute.xlu0 %4989
      %4991 = vrot.lane.b32.xlu0 %v4412, 16
      %v4992 = vpop.permute.xlu0 %4991
      %4993 = vrot.lane.b32.xlu0 %v4413, 16
      %v4994 = vpop.permute.xlu0 %4993
      %4995 = vrot.lane.b32.xlu0 %v4414, 16
      %v4996 = vpop.permute.xlu0 %4995
      %4997 = vrot.lane.b32.xlu0 %v4415, 16
      %v4998 = vpop.permute.xlu0 %4997
      %4999 = vrot.lane.b32.xlu0 %v4416, 16
      %v5000 = vpop.permute.xlu0 %4999
      %5001 = vrot.lane.b32.xlu0 %v4417, 16
      %v5002 = vpop.permute.xlu0 %5001
      %5003 = vrot.lane.b32.xlu0 %v4418, 16
      %v5004 = vpop.permute.xlu0 %5003
      %5005 = vrot.lane.b32.xlu0 %v4419, 16
      %v5006 = vpop.permute.xlu0 %5005
      %5007 = vrot.lane.b32.xlu0 %v4420, 16
      %v5008 = vpop.permute.xlu0 %5007
      %5009 = vrot.lane.b32.xlu0 %v4421, 16
      %v5010 = vpop.permute.xlu0 %5009
      %5011 = vrot.lane.b32.xlu0 %v4422, 16
      %v5012 = vpop.permute.xlu0 %5011
      %5013 = vrot.lane.b32.xlu0 %v4423, 16
      %v5014 = vpop.permute.xlu0 %5013
      %5015 = vrot.lane.b32.xlu0 %v4424, 16
      %v5016 = vpop.permute.xlu0 %5015
      %5017 = vrot.lane.b32.xlu0 %v4425, 16
      %v5018 = vpop.permute.xlu0 %5017
      %5019 = vrot.lane.b32.xlu0 %v4426, 16
      %v5020 = vpop.permute.xlu0 %5019
      %5021 = vrot.lane.b32.xlu0 %v4427, 16
      %v5022 = vpop.permute.xlu0 %5021
      %5023 = vrot.lane.b32.xlu0 %v4428, 16
      %v5024 = vpop.permute.xlu0 %5023
      %5025 = vrot.lane.b32.xlu0 %v4429, 16
      %v5026 = vpop.permute.xlu0 %5025
      %5027 = vrot.lane.b32.xlu0 %v4430, 16
      %v5028 = vpop.permute.xlu0 %5027
      %5029 = vrot.lane.b32.xlu0 %v4431, 16
      %v5030 = vpop.permute.xlu0 %5029
      %5031 = vrot.lane.b32.xlu0 %v4432, 16
      %v5032 = vpop.permute.xlu0 %5031
      %5033 = vrot.lane.b32.xlu0 %v4433, 16
      %v5034 = vpop.permute.xlu0 %5033
      %5035 = vrot.lane.b32.xlu0 %v4434, 16
      %v5036 = vpop.permute.xlu0 %5035
      %5037 = vrot.lane.b32.xlu0 %v4435, 16
      %v5038 = vpop.permute.xlu0 %5037
      %5039 = vrot.lane.b32.xlu0 %v4436, 16
      %v5040 = vpop.permute.xlu0 %5039
      %5041 = vrot.lane.b32.xlu0 %v4437, 16
      %v5042 = vpop.permute.xlu0 %5041
      %5043 = vrot.lane.b32.xlu0 %v4438, 16
      %v5044 = vpop.permute.xlu0 %5043
      %5045 = vrot.lane.b32.xlu0 %v4439, 16
      %v5046 = vpop.permute.xlu0 %5045
      %5047 = vrot.lane.b32.xlu0 %v4440, 16
      %v5048 = vpop.permute.xlu0 %5047
      %5049 = vrot.lane.b32.xlu0 %v4441, 16
      %v5050 = vpop.permute.xlu0 %5049
      %5115 = vrot.lane.b32.xlu0 %v4442, 20
      %v5116 = vpop.permute.xlu0 %5115
      %5117 = vrot.lane.b32.xlu0 %v4443, 20
      %v5118 = vpop.permute.xlu0 %5117
      %5119 = vrot.lane.b32.xlu0 %v4444, 20
      %v5120 = vpop.permute.xlu0 %5119
      %5121 = vrot.lane.b32.xlu0 %v4445, 20
      %v5122 = vpop.permute.xlu0 %5121
      %5123 = vrot.lane.b32.xlu0 %v4446, 20
      %v5124 = vpop.permute.xlu0 %5123
      %5125 = vrot.lane.b32.xlu0 %v4447, 20
      %v5126 = vpop.permute.xlu0 %5125
      %5127 = vrot.lane.b32.xlu0 %v4448, 20
      %v5128 = vpop.permute.xlu0 %5127
      %5129 = vrot.lane.b32.xlu0 %v4449, 20
      %v5130 = vpop.permute.xlu0 %5129
      %5131 = vrot.lane.b32.xlu0 %v4450, 20
      %v5132 = vpop.permute.xlu0 %5131
      %5133 = vrot.lane.b32.xlu0 %v4451, 20
      %v5134 = vpop.permute.xlu0 %5133
      %5135 = vrot.lane.b32.xlu0 %v4452, 20
      %v5136 = vpop.permute.xlu0 %5135
      %5137 = vrot.lane.b32.xlu0 %v4453, 20
      %v5138 = vpop.permute.xlu0 %5137
      %5139 = vrot.lane.b32.xlu0 %v4454, 20
      %v5140 = vpop.permute.xlu0 %5139
      %5141 = vrot.lane.b32.xlu0 %v4455, 20
      %v5142 = vpop.permute.xlu0 %5141
      %5143 = vrot.lane.b32.xlu0 %v4456, 20
      %v5144 = vpop.permute.xlu0 %5143
      %5145 = vrot.lane.b32.xlu0 %v4457, 20
      %v5146 = vpop.permute.xlu0 %5145
      %5147 = vrot.lane.b32.xlu0 %v4458, 20
      %v5148 = vpop.permute.xlu0 %5147
      %5149 = vrot.lane.b32.xlu0 %v4459, 20
      %v5150 = vpop.permute.xlu0 %5149
      %5151 = vrot.lane.b32.xlu0 %v4460, 20
      %v5152 = vpop.permute.xlu0 %5151
      %5153 = vrot.lane.b32.xlu0 %v4461, 20
      %v5154 = vpop.permute.xlu0 %5153
      %5155 = vrot.lane.b32.xlu0 %v4462, 20
      %v5156 = vpop.permute.xlu0 %5155
      %5157 = vrot.lane.b32.xlu0 %v4463, 20
      %v5158 = vpop.permute.xlu0 %5157
      %5159 = vrot.lane.b32.xlu0 %v4464, 20
      %v5160 = vpop.permute.xlu0 %5159
      %5161 = vrot.lane.b32.xlu0 %v4465, 20
      %v5162 = vpop.permute.xlu0 %5161
      %5163 = vrot.lane.b32.xlu0 %v4466, 20
      %v5164 = vpop.permute.xlu0 %5163
      %5165 = vrot.lane.b32.xlu0 %v4467, 20
      %v5166 = vpop.permute.xlu0 %5165
      %5167 = vrot.lane.b32.xlu0 %v4468, 20
      %v5168 = vpop.permute.xlu0 %5167
      %5169 = vrot.lane.b32.xlu0 %v4469, 20
      %v5170 = vpop.permute.xlu0 %5169
      %5171 = vrot.lane.b32.xlu0 %v4470, 20
      %v5172 = vpop.permute.xlu0 %5171
      %5173 = vrot.lane.b32.xlu0 %v4471, 20
      %v5174 = vpop.permute.xlu0 %5173
      %5175 = vrot.lane.b32.xlu0 %v4472, 20
      %v5176 = vpop.permute.xlu0 %5175
      %5177 = vrot.lane.b32.xlu0 %v4473, 20
      %v5178 = vpop.permute.xlu0 %5177
      %5243 = vrot.lane.b32.xlu0 %v4475, 24
      %v5244 = vpop.permute.xlu0 %5243
      %5245 = vrot.lane.b32.xlu0 %v4476, 24
      %v5246 = vpop.permute.xlu0 %5245
      %5247 = vrot.lane.b32.xlu0 %v4477, 24
      %v5248 = vpop.permute.xlu0 %5247
      %5249 = vrot.lane.b32.xlu0 %v4478, 24
      %v5250 = vpop.permute.xlu0 %5249
      %5251 = vrot.lane.b32.xlu0 %v4479, 24
      %v5252 = vpop.permute.xlu0 %5251
      %5253 = vrot.lane.b32.xlu0 %v4480, 24
      %v5254 = vpop.permute.xlu0 %5253
      %5255 = vrot.lane.b32.xlu0 %v4481, 24
      %v5256 = vpop.permute.xlu0 %5255
      %5257 = vrot.lane.b32.xlu0 %v4482, 24
      %v5258 = vpop.permute.xlu0 %5257
      %5259 = vrot.lane.b32.xlu0 %v4483, 24
      %v5260 = vpop.permute.xlu0 %5259
      %5261 = vrot.lane.b32.xlu0 %v4484, 24
      %v5262 = vpop.permute.xlu0 %5261
      %5263 = vrot.lane.b32.xlu0 %v4485, 24
      %v5264 = vpop.permute.xlu0 %5263
      %5265 = vrot.lane.b32.xlu0 %v4486, 24
      %v5266 = vpop.permute.xlu0 %5265
      %5267 = vrot.lane.b32.xlu0 %v4487, 24
      %v5268 = vpop.permute.xlu0 %5267
      %5269 = vrot.lane.b32.xlu0 %v4488, 24
      %v5270 = vpop.permute.xlu0 %5269
      %5271 = vrot.lane.b32.xlu0 %v4489, 24
      %v5272 = vpop.permute.xlu0 %5271
      %5273 = vrot.lane.b32.xlu0 %v4490, 24
      %v5274 = vpop.permute.xlu0 %5273
      %5275 = vrot.lane.b32.xlu0 %v4491, 24
      %v5276 = vpop.permute.xlu0 %5275
      %5277 = vrot.lane.b32.xlu0 %v4492, 24
      %v5278 = vpop.permute.xlu0 %5277
      %5279 = vrot.lane.b32.xlu0 %v4493, 24
      %v5280 = vpop.permute.xlu0 %5279
      %5281 = vrot.lane.b32.xlu0 %v4494, 24
      %v5282 = vpop.permute.xlu0 %5281
      %5283 = vrot.lane.b32.xlu0 %v4495, 24
      %v5284 = vpop.permute.xlu0 %5283
      %5285 = vrot.lane.b32.xlu0 %v4496, 24
      %v5286 = vpop.permute.xlu0 %5285
      %5287 = vrot.lane.b32.xlu0 %v4497, 24
      %v5288 = vpop.permute.xlu0 %5287
      %5289 = vrot.lane.b32.xlu0 %v4498, 24
      %v5290 = vpop.permute.xlu0 %5289
      %5291 = vrot.lane.b32.xlu0 %v4499, 24
      %v5292 = vpop.permute.xlu0 %5291
      %5293 = vrot.lane.b32.xlu0 %v4500, 24
      %v5294 = vpop.permute.xlu0 %5293
      %5295 = vrot.lane.b32.xlu0 %v4501, 24
      %v5296 = vpop.permute.xlu0 %5295
      %5297 = vrot.lane.b32.xlu0 %v4502, 24
      %v5298 = vpop.permute.xlu0 %5297
      %5299 = vrot.lane.b32.xlu0 %v4503, 24
      %v5300 = vpop.permute.xlu0 %5299
      %5301 = vrot.lane.b32.xlu0 %v4504, 24
      %v5302 = vpop.permute.xlu0 %5301
      %5303 = vrot.lane.b32.xlu0 %v4505, 24
      %v5304 = vpop.permute.xlu0 %5303
      %5305 = vrot.lane.b32.xlu0 %v4506, 24
      %v5306 = vpop.permute.xlu0 %5305
      %5371 = vrot.lane.b32.xlu0 %v4507, 28
      %v5372 = vpop.permute.xlu0 %5371
      %5373 = vrot.lane.b32.xlu0 %v4508, 28
      %v5374 = vpop.permute.xlu0 %5373
      %5375 = vrot.lane.b32.xlu0 %v4509, 28
      %v5376 = vpop.permute.xlu0 %5375
      %5377 = vrot.lane.b32.xlu0 %v4510, 28
      %v5378 = vpop.permute.xlu0 %5377
      %5379 = vrot.lane.b32.xlu0 %v4511, 28
      %v5380 = vpop.permute.xlu0 %5379
      %5381 = vrot.lane.b32.xlu0 %v4512, 28
      %v5382 = vpop.permute.xlu0 %5381
      %5383 = vrot.lane.b32.xlu0 %v4513, 28
      %v5384 = vpop.permute.xlu0 %5383
      %5385 = vrot.lane.b32.xlu0 %v4514, 28
      %v5386 = vpop.permute.xlu0 %5385
      %5387 = vrot.lane.b32.xlu0 %v4515, 28
      %v5388 = vpop.permute.xlu0 %5387
      %5389 = vrot.lane.b32.xlu0 %v4516, 28
      %v5390 = vpop.permute.xlu0 %5389
      %5391 = vrot.lane.b32.xlu0 %v4517, 28
      %v5392 = vpop.permute.xlu0 %5391
      %5393 = vrot.lane.b32.xlu0 %v4518, 28
      %v5394 = vpop.permute.xlu0 %5393
      %5395 = vrot.lane.b32.xlu0 %v4519, 28
      %v5396 = vpop.permute.xlu0 %5395
      %5397 = vrot.lane.b32.xlu0 %v4520, 28
      %v5398 = vpop.permute.xlu0 %5397
      %5399 = vrot.lane.b32.xlu0 %v4521, 28
      %v5400 = vpop.permute.xlu0 %5399
      %5401 = vrot.lane.b32.xlu0 %v4522, 28
      %v5402 = vpop.permute.xlu0 %5401
      %5403 = vrot.lane.b32.xlu0 %v4523, 28
      %v5404 = vpop.permute.xlu0 %5403
      %5405 = vrot.lane.b32.xlu0 %v4524, 28
      %v5406 = vpop.permute.xlu0 %5405
      %5407 = vrot.lane.b32.xlu0 %v4525, 28
      %v5408 = vpop.permute.xlu0 %5407
      %5409 = vrot.lane.b32.xlu0 %v4526, 28
      %v5410 = vpop.permute.xlu0 %5409
      %5411 = vrot.lane.b32.xlu0 %v4527, 28
      %v5412 = vpop.permute.xlu0 %5411
      %5413 = vrot.lane.b32.xlu0 %v4528, 28
      %v5414 = vpop.permute.xlu0 %5413
      %5415 = vrot.lane.b32.xlu0 %v4529, 28
      %v5416 = vpop.permute.xlu0 %5415
      %5417 = vrot.lane.b32.xlu0 %v4530, 28
      %v5418 = vpop.permute.xlu0 %5417
      %5419 = vrot.lane.b32.xlu0 %v4531, 28
      %v5420 = vpop.permute.xlu0 %5419
      %5421 = vrot.lane.b32.xlu0 %v4532, 28
      %v5422 = vpop.permute.xlu0 %5421
      %5423 = vrot.lane.b32.xlu0 %v4533, 28
      %v5424 = vpop.permute.xlu0 %5423
      %5425 = vrot.lane.b32.xlu0 %v4534, 28
      %v5426 = vpop.permute.xlu0 %5425
      %5427 = vrot.lane.b32.xlu0 %v4535, 28
      %v5428 = vpop.permute.xlu0 %5427
      %5429 = vrot.lane.b32.xlu0 %v4536, 28
      %v5430 = vpop.permute.xlu0 %5429
      %5431 = vrot.lane.b32.xlu0 %v4537, 28
      %v5432 = vpop.permute.xlu0 %5431
      %5433 = vrot.lane.b32.xlu0 %v4538, 28
      %v5434 = vpop.permute.xlu0 %5433
      %5499 = vrot.lane.b32.xlu0 %v4539, 32
      %v5500 = vpop.permute.xlu0 %5499
      %5501 = vrot.lane.b32.xlu0 %v4540, 32
      %v5502 = vpop.permute.xlu0 %5501
      %5503 = vrot.lane.b32.xlu0 %v4541, 32
      %v5504 = vpop.permute.xlu0 %5503
      %5505 = vrot.lane.b32.xlu0 %v4542, 32
      %v5506 = vpop.permute.xlu0 %5505
      %5507 = vrot.lane.b32.xlu0 %v4543, 32
      %v5508 = vpop.permute.xlu0 %5507
      %5509 = vrot.lane.b32.xlu0 %v4544, 32
      %v5510 = vpop.permute.xlu0 %5509
      %5511 = vrot.lane.b32.xlu0 %v4545, 32
      %v5512 = vpop.permute.xlu0 %5511
      %5513 = vrot.lane.b32.xlu0 %v4546, 32
      %v5514 = vpop.permute.xlu0 %5513
      %5515 = vrot.lane.b32.xlu0 %v4547, 32
      %v5516 = vpop.permute.xlu0 %5515
      %5517 = vrot.lane.b32.xlu0 %v4548, 32
      %v5518 = vpop.permute.xlu0 %5517
      %5519 = vrot.lane.b32.xlu0 %v4549, 32
      %v5520 = vpop.permute.xlu0 %5519
      %5521 = vrot.lane.b32.xlu0 %v4550, 32
      %v5522 = vpop.permute.xlu0 %5521
      %5523 = vrot.lane.b32.xlu0 %v4551, 32
      %v5524 = vpop.permute.xlu0 %5523
      %5525 = vrot.lane.b32.xlu0 %v4552, 32
      %v5526 = vpop.permute.xlu0 %5525
      %5527 = vrot.lane.b32.xlu0 %v4553, 32
      %v5528 = vpop.permute.xlu0 %5527
      %5529 = vrot.lane.b32.xlu0 %v4554, 32
      %v5530 = vpop.permute.xlu0 %5529
      %5531 = vrot.lane.b32.xlu0 %v4555, 32
      %v5532 = vpop.permute.xlu0 %5531
      %5533 = vrot.lane.b32.xlu0 %v4556, 32
      %v5534 = vpop.permute.xlu0 %5533
      %5535 = vrot.lane.b32.xlu0 %v4557, 32
      %v5536 = vpop.permute.xlu0 %5535
      %5537 = vrot.lane.b32.xlu0 %v4558, 32
      %v5538 = vpop.permute.xlu0 %5537
      %5539 = vrot.lane.b32.xlu0 %v4559, 32
      %v5540 = vpop.permute.xlu0 %5539
      %5541 = vrot.lane.b32.xlu0 %v4560, 32
      %v5542 = vpop.permute.xlu0 %5541
      %5543 = vrot.lane.b32.xlu0 %v4561, 32
      %v5544 = vpop.permute.xlu0 %5543
      %5545 = vrot.lane.b32.xlu0 %v4562, 32
      %v5546 = vpop.permute.xlu0 %5545
      %5547 = vrot.lane.b32.xlu0 %v4563, 32
      %v5548 = vpop.permute.xlu0 %5547
      %5549 = vrot.lane.b32.xlu0 %v4564, 32
      %v5550 = vpop.permute.xlu0 %5549
      %5551 = vrot.lane.b32.xlu0 %v4565, 32
      %v5552 = vpop.permute.xlu0 %5551
      %5553 = vrot.lane.b32.xlu0 %v4566, 32
      %v5554 = vpop.permute.xlu0 %5553
      %5555 = vrot.lane.b32.xlu0 %v4567, 32
      %v5556 = vpop.permute.xlu0 %5555
      %5557 = vrot.lane.b32.xlu0 %v4568, 32
      %v5558 = vpop.permute.xlu0 %5557
      %5559 = vrot.lane.b32.xlu0 %v4569, 32
      %v5560 = vpop.permute.xlu0 %5559
      %5561 = vrot.lane.b32.xlu0 %v4570, 32
      %v5562 = vpop.permute.xlu0 %5561
      %v5595 = vsel %vm273, %v4282, %v4604
      %v5596 = vsel %vm273, %v4283, %v4606
      %v5597 = vsel %vm273, %v4284, %v4608
      %v5598 = vsel %vm273, %v4285, %v4610
      %v5599 = vsel %vm273, %v4286, %v4612
      %v5600 = vsel %vm273, %v4287, %v4614
      %v5601 = vsel %vm273, %v4288, %v4616
      %v5602 = vsel %vm273, %v4289, %v4618
      %v5603 = vsel %vm273, %v4290, %v4620
      %v5604 = vsel %vm273, %v4291, %v4622
      %v5605 = vsel %vm273, %v4292, %v4624
      %v5606 = vsel %vm273, %v4293, %v4626
      %v5607 = vsel %vm273, %v4294, %v4628
      %v5608 = vsel %vm273, %v4295, %v4630
      %v5609 = vsel %vm273, %v4296, %v4632
      %v5610 = vsel %vm273, %v4297, %v4634
      %v5611 = vsel %vm273, %v4298, %v4636
      %v5612 = vsel %vm273, %v4299, %v4638
      %v5613 = vsel %vm273, %v4300, %v4640
      %v5614 = vsel %vm273, %v4301, %v4642
      %v5615 = vsel %vm273, %v4302, %v4644
      %v5616 = vsel %vm273, %v4303, %v4646
      %v5617 = vsel %vm273, %v4304, %v4648
      %v5618 = vsel %vm273, %v4305, %v4650
      %v5619 = vsel %vm273, %v4306, %v4652
      %v5620 = vsel %vm273, %v4307, %v4654
      %v5621 = vsel %vm273, %v4308, %v4656
      %v5622 = vsel %vm273, %v4309, %v4658
      %v5623 = vsel %vm273, %v4310, %v4660
      %v5624 = vsel %vm273, %v4311, %v4662
      %v5625 = vsel %vm273, %v4312, %v4664
      %v5626 = vsel %vm273, %v4313, %v4666
      %v5627 = vsel %vm3097, %v5595, %v4732
      %v5628 = vsel %vm3097, %v5596, %v4734
      %v5629 = vsel %vm3097, %v5597, %v4736
      %v5630 = vsel %vm3097, %v5598, %v4738
      %v5631 = vsel %vm3097, %v5599, %v4740
      %v5632 = vsel %vm3097, %v5600, %v4742
      %v5633 = vsel %vm3097, %v5601, %v4744
      %v5634 = vsel %vm3097, %v5602, %v4746
      %v5635 = vsel %vm3097, %v5603, %v4748
      %v5636 = vsel %vm3097, %v5604, %v4750
      %v5637 = vsel %vm3097, %v5605, %v4752
      %v5638 = vsel %vm3097, %v5606, %v4754
      %v5639 = vsel %vm3097, %v5607, %v4756
      %v5640 = vsel %vm3097, %v5608, %v4758
      %v5641 = vsel %vm3097, %v5609, %v4760
      %v5642 = vsel %vm3097, %v5610, %v4762
      %v5643 = vsel %vm3097, %v5611, %v4764
      %v5644 = vsel %vm3097, %v5612, %v4766
      %v5645 = vsel %vm3097, %v5613, %v4768
      %v5646 = vsel %vm3097, %v5614, %v4770
      %v5647 = vsel %vm3097, %v5615, %v4772
      %v5648 = vsel %vm3097, %v5616, %v4774
      %v5649 = vsel %vm3097, %v5617, %v4776
      %v5650 = vsel %vm3097, %v5618, %v4778
      %v5651 = vsel %vm3097, %v5619, %v4780
      %v5652 = vsel %vm3097, %v5620, %v4782
      %v5653 = vsel %vm3097, %v5621, %v4784
      %v5654 = vsel %vm3097, %v5622, %v4786
      %v5655 = vsel %vm3097, %v5623, %v4788
      %v5656 = vsel %vm3097, %v5624, %v4790
      %v5657 = vsel %vm3097, %v5625, %v4792
      %v5658 = vsel %vm3097, %v5626, %v4794
      %v5659 = vsel %vm3130, %v5627, %v4860
      %v5660 = vsel %vm3130, %v5628, %v4862
      %v5661 = vsel %vm3130, %v5629, %v4864
      %v5662 = vsel %vm3130, %v5630, %v4866
      %v5663 = vsel %vm3130, %v5631, %v4868
      %v5664 = vsel %vm3130, %v5632, %v4870
      %v5665 = vsel %vm3130, %v5633, %v4872
      %v5666 = vsel %vm3130, %v5634, %v4874
      %v5667 = vsel %vm3130, %v5635, %v4876
      %v5668 = vsel %vm3130, %v5636, %v4878
      %v5669 = vsel %vm3130, %v5637, %v4880
      %v5670 = vsel %vm3130, %v5638, %v4882
      %v5671 = vsel %vm3130, %v5639, %v4884
      %v5672 = vsel %vm3130, %v5640, %v4886
      %v5673 = vsel %vm3130, %v5641, %v4888
      %v5674 = vsel %vm3130, %v5642, %v4890
      %v5675 = vsel %vm3130, %v5643, %v4892
      %v5676 = vsel %vm3130, %v5644, %v4894
      %v5677 = vsel %vm3130, %v5645, %v4896
      %v5678 = vsel %vm3130, %v5646, %v4898
      %v5679 = vsel %vm3130, %v5647, %v4900
      %v5680 = vsel %vm3130, %v5648, %v4902
      %v5681 = vsel %vm3130, %v5649, %v4904
      %v5682 = vsel %vm3130, %v5650, %v4906
      %v5683 = vsel %vm3130, %v5651, %v4908
      %v5684 = vsel %vm3130, %v5652, %v4910
      %v5685 = vsel %vm3130, %v5653, %v4912
      %v5686 = vsel %vm3130, %v5654, %v4914
      %v5687 = vsel %vm3130, %v5655, %v4916
      %v5688 = vsel %vm3130, %v5656, %v4918
      %v5689 = vsel %vm3130, %v5657, %v4920
      %v5690 = vsel %vm3130, %v5658, %v4922
      %v5691 = vsel %vm3163, %v5659, %v4988
      %v5692 = vsel %vm3163, %v5660, %v4990
      %v5693 = vsel %vm3163, %v5661, %v4992
      %v5694 = vsel %vm3163, %v5662, %v4994
      %v5695 = vsel %vm3163, %v5663, %v4996
      %v5696 = vsel %vm3163, %v5664, %v4998
      %v5697 = vsel %vm3163, %v5665, %v5000
      %v5698 = vsel %vm3163, %v5666, %v5002
      %v5699 = vsel %vm3163, %v5667, %v5004
      %v5700 = vsel %vm3163, %v5668, %v5006
      %v5701 = vsel %vm3163, %v5669, %v5008
      %v5702 = vsel %vm3163, %v5670, %v5010
      %v5703 = vsel %vm3163, %v5671, %v5012
      %v5704 = vsel %vm3163, %v5672, %v5014
      %v5705 = vsel %vm3163, %v5673, %v5016
      %v5706 = vsel %vm3163, %v5674, %v5018
      %v5707 = vsel %vm3163, %v5675, %v5020
      %v5708 = vsel %vm3163, %v5676, %v5022
      %v5709 = vsel %vm3163, %v5677, %v5024
      %v5710 = vsel %vm3163, %v5678, %v5026
      %v5711 = vsel %vm3163, %v5679, %v5028
      %v5712 = vsel %vm3163, %v5680, %v5030
      %v5713 = vsel %vm3163, %v5681, %v5032
      %v5714 = vsel %vm3163, %v5682, %v5034
      %v5715 = vsel %vm3163, %v5683, %v5036
      %v5716 = vsel %vm3163, %v5684, %v5038
      %v5717 = vsel %vm3163, %v5685, %v5040
      %v5718 = vsel %vm3163, %v5686, %v5042
      %v5719 = vsel %vm3163, %v5687, %v5044
      %v5720 = vsel %vm3163, %v5688, %v5046
      %v5721 = vsel %vm3163, %v5689, %v5048
      %v5722 = vsel %vm3163, %v5690, %v5050
      %v5723 = vsel %vm3196, %v5691, %v5116
      %v5724 = vsel %vm3196, %v5692, %v5118
      %v5725 = vsel %vm3196, %v5693, %v5120
      %v5726 = vsel %vm3196, %v5694, %v5122
      %v5727 = vsel %vm3196, %v5695, %v5124
      %v5728 = vsel %vm3196, %v5696, %v5126
      %v5729 = vsel %vm3196, %v5697, %v5128
      %v5730 = vsel %vm3196, %v5698, %v5130
      %v5731 = vsel %vm3196, %v5699, %v5132
      %v5732 = vsel %vm3196, %v5700, %v5134
      %v5733 = vsel %vm3196, %v5701, %v5136
      %v5734 = vsel %vm3196, %v5702, %v5138
      %v5735 = vsel %vm3196, %v5703, %v5140
      %v5736 = vsel %vm3196, %v5704, %v5142
      %v5737 = vsel %vm3196, %v5705, %v5144
      %v5738 = vsel %vm3196, %v5706, %v5146
      %v5739 = vsel %vm3196, %v5707, %v5148
      %v5740 = vsel %vm3196, %v5708, %v5150
      %v5741 = vsel %vm3196, %v5709, %v5152
      %v5742 = vsel %vm3196, %v5710, %v5154
      %v5743 = vsel %vm3196, %v5711, %v5156
      %v5744 = vsel %vm3196, %v5712, %v5158
      %v5745 = vsel %vm3196, %v5713, %v5160
      %v5746 = vsel %vm3196, %v5714, %v5162
      %v5747 = vsel %vm3196, %v5715, %v5164
      %v5748 = vsel %vm3196, %v5716, %v5166
      %v5749 = vsel %vm3196, %v5717, %v5168
      %v5750 = vsel %vm3196, %v5718, %v5170
      %v5751 = vsel %vm3196, %v5719, %v5172
      %v5752 = vsel %vm3196, %v5720, %v5174
      %v5753 = vsel %vm3196, %v5721, %v5176
      %v5754 = vsel %vm3196, %v5722, %v5178
      %v5755 = vsel %vm3229, %v5723, %v5244
      %v5756 = vsel %vm3229, %v5724, %v5246
      %v5757 = vsel %vm3229, %v5725, %v5248
      %v5758 = vsel %vm3229, %v5726, %v5250
      %v5759 = vsel %vm3229, %v5727, %v5252
      %v5760 = vsel %vm3229, %v5728, %v5254
      %v5761 = vsel %vm3229, %v5729, %v5256
      %v5762 = vsel %vm3229, %v5730, %v5258
      %v5763 = vsel %vm3229, %v5731, %v5260
      %v5764 = vsel %vm3229, %v5732, %v5262
      %v5765 = vsel %vm3229, %v5733, %v5264
      %v5766 = vsel %vm3229, %v5734, %v5266
      %v5767 = vsel %vm3229, %v5735, %v5268
      %v5768 = vsel %vm3229, %v5736, %v5270
      %v5769 = vsel %vm3229, %v5737, %v5272
      %v5770 = vsel %vm3229, %v5738, %v5274
      %v5771 = vsel %vm3229, %v5739, %v5276
      %v5772 = vsel %vm3229, %v5740, %v5278
      %v5773 = vsel %vm3229, %v5741, %v5280
      %v5774 = vsel %vm3229, %v5742, %v5282
      %v5775 = vsel %vm3229, %v5743, %v5284
      %v5776 = vsel %vm3229, %v5744, %v5286
      %v5777 = vsel %vm3229, %v5745, %v5288
      %v5778 = vsel %vm3229, %v5746, %v5290
      %v5779 = vsel %vm3229, %v5747, %v5292
      %v5780 = vsel %vm3229, %v5748, %v5294
      %v5781 = vsel %vm3229, %v5749, %v5296
      %v5782 = vsel %vm3229, %v5750, %v5298
      %v5783 = vsel %vm3229, %v5751, %v5300
      %v5784 = vsel %vm3229, %v5752, %v5302
      %v5785 = vsel %vm3229, %v5753, %v5304
      %v5786 = vsel %vm3229, %v5754, %v5306
      %v5787 = vsel %vm3262, %v5755, %v5372
      %v5788 = vsel %vm3262, %v5756, %v5374
      %v5789 = vsel %vm3262, %v5757, %v5376
      %v5790 = vsel %vm3262, %v5758, %v5378
      %v5791 = vsel %vm3262, %v5759, %v5380
      %v5792 = vsel %vm3262, %v5760, %v5382
      %v5793 = vsel %vm3262, %v5761, %v5384
      %v5794 = vsel %vm3262, %v5762, %v5386
      %v5795 = vsel %vm3262, %v5763, %v5388
      %v5796 = vsel %vm3262, %v5764, %v5390
      %v5797 = vsel %vm3262, %v5765, %v5392
      %v5798 = vsel %vm3262, %v5766, %v5394
      %v5799 = vsel %vm3262, %v5767, %v5396
      %v5800 = vsel %vm3262, %v5768, %v5398
      %v5801 = vsel %vm3262, %v5769, %v5400
      %v5802 = vsel %vm3262, %v5770, %v5402
      %v5803 = vsel %vm3262, %v5771, %v5404
      %v5804 = vsel %vm3262, %v5772, %v5406
      %v5805 = vsel %vm3262, %v5773, %v5408
      %v5806 = vsel %vm3262, %v5774, %v5410
      %v5807 = vsel %vm3262, %v5775, %v5412
      %v5808 = vsel %vm3262, %v5776, %v5414
      %v5809 = vsel %vm3262, %v5777, %v5416
      %v5810 = vsel %vm3262, %v5778, %v5418
      %v5811 = vsel %vm3262, %v5779, %v5420
      %v5812 = vsel %vm3262, %v5780, %v5422
      %v5813 = vsel %vm3262, %v5781, %v5424
      %v5814 = vsel %vm3262, %v5782, %v5426
      %v5815 = vsel %vm3262, %v5783, %v5428
      %v5816 = vsel %vm3262, %v5784, %v5430
      %v5817 = vsel %vm3262, %v5785, %v5432
      %v5818 = vsel %vm3262, %v5786, %v5434
      %v5819 = vsel %vm3295, %v5787, %v5500
      %v5820 = vsel %vm3295, %v5788, %v5502
      %v5821 = vsel %vm3295, %v5789, %v5504
      %v5822 = vsel %vm3295, %v5790, %v5506
      %v5823 = vsel %vm3295, %v5791, %v5508
      %v5824 = vsel %vm3295, %v5792, %v5510
      %v5825 = vsel %vm3295, %v5793, %v5512
      %v5826 = vsel %vm3295, %v5794, %v5514
      %v5827 = vsel %vm3295, %v5795, %v5516
      %v5828 = vsel %vm3295, %v5796, %v5518
      %v5829 = vsel %vm3295, %v5797, %v5520
      %v5830 = vsel %vm3295, %v5798, %v5522
      %v5831 = vsel %vm3295, %v5799, %v5524
      %v5832 = vsel %vm3295, %v5800, %v5526
      %v5833 = vsel %vm3295, %v5801, %v5528
      %v5834 = vsel %vm3295, %v5802, %v5530
      %v5835 = vsel %vm3295, %v5803, %v5532
      %v5836 = vsel %vm3295, %v5804, %v5534
      %v5837 = vsel %vm3295, %v5805, %v5536
      %v5838 = vsel %vm3295, %v5806, %v5538
      %v5839 = vsel %vm3295, %v5807, %v5540
      %v5840 = vsel %vm3295, %v5808, %v5542
      %v5841 = vsel %vm3295, %v5809, %v5544
      %v5842 = vsel %vm3295, %v5810, %v5546
      %v5843 = vsel %vm3295, %v5811, %v5548
      %v5844 = vsel %vm3295, %v5812, %v5550
      %v5845 = vsel %vm3295, %v5813, %v5552
      %v5846 = vsel %vm3295, %v5814, %v5554
      %v5847 = vsel %vm3295, %v5815, %v5556
      %v5848 = vsel %vm3295, %v5816, %v5558
      %v5849 = vsel %vm3295, %v5817, %v5560
      %v5850 = vsel %vm3295, %v5818, %v5562
      %v5851 = vld [vmem:[%s5] sm:$0xf]
      %5853 = vset.pattern.permute.xlu0 0
      %5854 = vperm.xlu0 %5853, %v5851
      %v5855 = vpop.permute.xlu0 %5854
      %v5857 = vld [vmem:[%s4] sm:$0x3]
      %v5858 = vpack.c.bf16 %v5820, %v5819
      %v5859 = vpack.c.bf16 %v5822, %v5821
      %v5860 = vpack.c.bf16 %v5824, %v5823
      %v5861 = vpack.c.bf16 %v5826, %v5825
      %v5862 = vpack.c.bf16 %v5828, %v5827
      %v5863 = vpack.c.bf16 %v5830, %v5829
      %v5864 = vpack.c.bf16 %v5832, %v5831
      %v5865 = vpack.c.bf16 %v5834, %v5833
      %v5866 = vpack.c.bf16 %v5836, %v5835
      %v5867 = vpack.c.bf16 %v5838, %v5837
      %v5868 = vpack.c.bf16 %v5840, %v5839
      %v5869 = vpack.c.bf16 %v5842, %v5841
      %v5870 = vpack.c.bf16 %v5844, %v5843
      %v5871 = vpack.c.bf16 %v5846, %v5845
      %v5872 = vpack.c.bf16 %v5848, %v5847
      %v5873 = vpack.c.bf16 %v5850, %v5849
      %v5875 = vsel %vm3328, %v5857, 0
      %v5878 = vsel %vm3328, %v5858, 0
      %v5881 = vsel %vm3328, %v5859, 0
      %v5884 = vsel %vm3328, %v5860, 0
      %v5887 = vsel %vm3328, %v5861, 0
      %v5890 = vsel %vm3328, %v5862, 0
      %v5893 = vsel %vm3328, %v5863, 0
      %v5896 = vsel %vm3328, %v5864, 0
      %v5899 = vsel %vm3328, %v5865, 0
      %v5902 = vsel %vm3328, %v5866, 0
      %v5905 = vsel %vm3328, %v5867, 0
      %v5908 = vsel %vm3328, %v5868, 0
      %v5911 = vsel %vm3328, %v5869, 0
      %v5914 = vsel %vm3328, %v5870, 0
      %v5917 = vsel %vm3328, %v5871, 0
      %v5920 = vsel %vm3328, %v5872, 0
      %v5923 = vsel %vm3328, %v5873, 0
      %5925 = vmatprep.subr.bf16.mxu0 0
      %5926 = vmatpush1.bf16.xpose.msra.mxu0 %v5878
      %5927 = vmatprep.subr.bf16.mxu0 0
      %5928 = vmatpush1.bf16.xpose.msra.mxu0 %v5881
      %5929 = vmatprep.subr.bf16.mxu0 0
      %5930 = vmatpush1.bf16.xpose.msra.mxu0 %v5884
      %5931 = vmatprep.subr.bf16.mxu0 0
      %5932 = vmatpush1.bf16.xpose.msra.mxu0 %v5887
      %5933 = vmatprep.subr.bf16.mxu0 0
      %5934 = vmatpush1.bf16.xpose.msra.mxu0 %v5890
      %5935 = vmatprep.subr.bf16.mxu0 0
      %5936 = vmatpush1.bf16.xpose.msra.mxu0 %v5893
      %5937 = vmatprep.subr.bf16.mxu0 0
      %5938 = vmatpush1.bf16.xpose.msra.mxu0 %v5896
      %5939 = vmatprep.subr.bf16.mxu0 0
      %5940 = vmatpush1.bf16.xpose.msra.mxu0 %v5899
      %5941 = vmatprep.subr.bf16.mxu0 0
      %5942 = vmatpush1.bf16.xpose.msra.mxu0 %v5902
      %5943 = vmatprep.subr.bf16.mxu0 0
      %5944 = vmatpush1.bf16.xpose.msra.mxu0 %v5905
      %5945 = vmatprep.subr.bf16.mxu0 0
      %5946 = vmatpush1.bf16.xpose.msra.mxu0 %v5908
      %5947 = vmatprep.subr.bf16.mxu0 0
      %5948 = vmatpush1.bf16.xpose.msra.mxu0 %v5911
      %5949 = vmatprep.subr.bf16.mxu0 0
      %5950 = vmatpush1.bf16.xpose.msra.mxu0 %v5914
      %5951 = vmatprep.subr.bf16.mxu0 0
      %5952 = vmatpush1.bf16.xpose.msra.mxu0 %v5917
      %5953 = vmatprep.subr.bf16.mxu0 0
      %5954 = vmatpush1.bf16.xpose.msra.mxu0 %v5920
      %5955 = vmatprep.subr.bf16.mxu0 0
      %5956 = vmatpush1.bf16.xpose.msra.mxu0 %v5923
      %5957 = vmatprep.mubr.bf16.mxu0 0
      %5958 = vmatmul.mubr.bf16.gmra.mrb[0].mxu0 %v5875
      %v5959 = vpop.f32.mrb[0].mxu0
      %v5960 = vadd.f32 0.0, %v5959
      %v5961 = vpop.f32.mrb[0].mxu0
      %v5962 = vadd.f32 0.0, %v5961
      %v5963 = vpop.f32.mrb[0].mxu0
      %v5964 = vpop.f32.mrb[0].mxu0
      %5965 = vdwg.mxu0
      %v5966 = vadd.f32 %v5855, %v5960
      %v5967 = vadd.f32 %v5855, %v5962
      %v5968 = vmax.f32 %v5966, 0.0
      %v5969 = vmax.f32 %v5967, 0.0
      %v5970 = vmin.f32 %v5968, 6.0
      %v5971 = vmin.f32 %v5969, 6.0
      %v5974 = vcombine.low %v5970, %v5971
      %5976 = vst [vmem:[%s271] sm:$0xff] %v5974
      %p5977 = scmp.lt.s32.totalorder %s17, 1
      %s5978 = scalar_select %p5977, %s17, 1
      %s5979 = smul.addr %s5978, 2
      %s5980 = smul.addr %s5979, 4
      %s5981 = scalar_lea.vmem %s6, %s5980
      // Predicated region
      $region45: #{up_forward.1} parent=43 // pred_check
        %p5982 = pneg %p171
      $region46: #{up_forward.1} parent=43 // pred_check_branch
        %5984 = sbr.rel (%p5982) target = $region48
      $region47: #{up_forward.1} parent=43 // pred_region
        _
      $region48: #{up_forward.1} parent=43 // pred_fallthru
        _
    $region44: #{up_forward.1} parent=5 // pred_fallthru
      _
    %p5985 = scmp.le.s32.totalorder 2, %s12
    // Predicated region
    $region49: #{up_forward.1} parent=5 // pred_check
      %p5986 = pneg %p5985
    $region50: #{up_forward.1} parent=5 // pred_check_branch
      %5988 = sbr.rel (%p5986) target = $region52
    $region51: #{up_forward.1} parent=5 // pred_region
      %s5989 = ssub.s32 %s12, 2
      // Predicated region
      $region53: #{up_forward.1} parent=51 // pred_check
        %p5990 = pneg %p177
      $region54: #{up_forward.1} parent=51 // pred_check_branch
        %5992 = sbr.rel (%p5990) target = $region56
      $region55: #{up_forward.1} parent=51 // pred_region
        %p5993 = scmp.lt.s32.totalorder %s18, 1
        %s5994 = scalar_select %p5993, %s18, 1
        %s5995 = smul.addr %s5994, 2
        %s5996 = smul.addr %s5995, 4
        %s5997 = scalar_lea.vmem %s6, %s5996
      $region56: #{up_forward.1} parent=51 // pred_fallthru
        _
    $region52: #{up_forward.1} parent=5 // pred_fallthru
      _
  $region6: #{up_forward.1} parent=0 // loop_footer
    %s16 = sadd.s32 1, %s12
  $region7: #{up_forward.1} parent=0 // loop_footer_branch
    %11 = sbr.rel target = $region3
  $region8: #{up_forward.1} parent=0 // loop_exit
    _

</llo_original>
